<compile_context>
chip_gen: v7x
topology: tpu7x:2x2x1
jax: 0.10.0
libtpu: 0.0.40
codegen_flags: <defaults>
</compile_context>

<pallas_src>
import functools

import jax
import jax.numpy as jnp
from jax.experimental import pallas as pl
from jax.experimental.pallas import tpu as pltpu


def _round_up(v, m):
    return ((v + m - 1) // m) * m


# -----------------------------------------------------------------------------
# Pallas kernel
# -----------------------------------------------------------------------------
def _transition_kernel(x_ref, wih_ref, whh_ref, b_ref, wfc_ref, bfc_ref,
                       out_ref, gx_scr, hs_scr, *, hidden_pad, seq_len, batch_pad):
    Hp, T, Bp = hidden_pad, seq_len, batch_pad

    # ---- Phase 1: input projection + fused bias for ALL timesteps (one matmul). ----
    gx_scr[...] = (
        jnp.dot(x_ref[...], wih_ref[...], preferred_element_type=jnp.float32)
        + b_ref[...])                                              # (T*Bp, 4*Hp)

    # ---- Phase 2: recurrence.  h/c stay in vregs; statically unrolled over T. ----
    h = jnp.zeros((Bp, Hp), jnp.float32)
    c = jnp.zeros((Bp, Hp), jnp.float32)
    for t in range(T):                       # T is small & static -> full unroll
        r = t * Bp                           # 8-sublane aligned row offset
        gates = gx_scr[r:r + Bp, :] + jnp.dot(
            h, whh_ref[...], preferred_element_type=jnp.float32)   # (Bp, 4*Hp)
        # PyTorch gate order [i, f, g, o]; slices are 128-lane aligned (Hp = k*128).
        i_g = jax.nn.sigmoid(gates[:, 0 * Hp:1 * Hp])
        f_g = jax.nn.sigmoid(gates[:, 1 * Hp:2 * Hp])
        g_g = jnp.tanh(gates[:, 2 * Hp:3 * Hp])
        o_g = jax.nn.sigmoid(gates[:, 3 * Hp:4 * Hp])
        c = f_g * c + i_g * g_g
        h = o_g * jnp.tanh(c)
        hs_scr[r:r + Bp, :] = h              # aligned, lane-dense store

    # ---- Phase 3: hoisted FC over all timesteps (one matmul, lane-dense output). ----
    out_ref[...] = (
        jnp.dot(hs_scr[...], wfc_ref[...], preferred_element_type=jnp.float32)
        + bfc_ref[...]).astype(out_ref.dtype)


# -----------------------------------------------------------------------------
# Wrapper (layout / padding glue)
# -----------------------------------------------------------------------------
def transition_model_forward(x, params):
    """x: (B, T, input_dim) float32 (batch_first, as in PyTorch).  Returns (B, T, output_dim)."""
    B, T, D = x.shape
    w_ih, w_hh, b_ih, b_hh, w_fc, b_fc = (
        params["w_ih"], params["w_hh"], params["b_ih"],
        params["b_hh"], params["w_fc"], params["b_fc"])
    H = w_hh.shape[1]
    O = w_fc.shape[0]

    Hp = _round_up(H, 128)      # lane-aligned gate block width
    Op = _round_up(O, 128)      # lane-dense kernel output width (sliced back below)
    Bp = _round_up(B, 8)        # sublane-aligned batch

    # Time-major, batch-padded, flattened input: row = t*Bp + b.
    x_tm = jnp.transpose(x, (1, 0, 2)).astype(jnp.float32)          # (T, B, D)
    x_tm = jnp.pad(x_tm, ((0, 0), (0, Bp - B), (0, 0)))             # (T, Bp, D)
    x_flat = x_tm.reshape(T * Bp, D)                                # (T*Bp, D)

    def pad_gate_cols(w):       # (rows, 4H) -> (rows, 4Hp), each gate block zero-padded
        r = w.shape[0]
        return jnp.pad(w.reshape(r, 4, H),
                       ((0, 0), (0, 0), (0, Hp - H))).reshape(r, 4 * Hp)

    wih_p = pad_gate_cols(jnp.transpose(w_ih))                          # (D, 4Hp)
    whh_p = jnp.pad(pad_gate_cols(jnp.transpose(w_hh)),
                    ((0, Hp - H), (0, 0)))                              # (Hp, 4Hp)
    b_p = pad_gate_cols((b_ih + b_hh).reshape(1, 4 * H))                # (1, 4Hp)
    wfc_p = jnp.pad(jnp.transpose(w_fc), ((0, Hp - H), (0, Op - O)))    # (Hp, Op)
    bfc_p = jnp.pad(b_fc.reshape(1, O), ((0, 0), (0, Op - O)))          # (1, Op)

    kernel = functools.partial(_transition_kernel, hidden_pad=Hp,
                               seq_len=T, batch_pad=Bp)

    full = lambda shape: pl.BlockSpec(shape, lambda *_: (0,) * len(shape))

    out_flat = pl.pallas_call(
        kernel,
        out_shape=jax.ShapeDtypeStruct((T * Bp, Op), jnp.float32),
        in_specs=[
            full((T * Bp, D)),
            full((D, 4 * Hp)),
            full((Hp, 4 * Hp)),
            full((1, 4 * Hp)),
            full((Hp, Op)),
            full((1, Op)),
        ],
        out_specs=full((T * Bp, Op)),
        scratch_shapes=[
            pltpu.VMEM((T * Bp, 4 * Hp), jnp.float32),   # precomputed gates_x
            pltpu.VMEM((T * Bp, Hp), jnp.float32),       # h_t history for FC epilogue
        ],
    )(x_flat, wih_p, whh_p, b_p, wfc_p, bfc_p)

    # Strip padding: rows -> (T, Bp, Op), keep real batch rows and real output cols.
    out = out_flat.reshape(T, Bp, Op)[:, :B, :O]
    return jnp.transpose(out, (1, 0, 2))                 # (B, T, O)


# -----------------------------------------------------------------------------
# Pure-JAX reference (mirrors torch.nn.LSTM + nn.Linear)
# -----------------------------------------------------------------------------
def transition_model_reference(x, params):
    w_ih, w_hh, b_ih, b_hh, w_fc, b_fc = (
        params["w_ih"], params["w_hh"], params["b_ih"],
        params["b_hh"], params["w_fc"], params["b_fc"])
    B, T, D = x.shape
    H = w_hh.shape[1]

    def cell(carry, x_t):
        h, c = carry
        gates = x_t @ w_ih.T + b_ih + h @ w_hh.T + b_hh
        i = jax.nn.sigmoid(gates[:, 0 * H:1 * H])
        f = jax.nn.sigmoid(gates[:, 1 * H:2 * H])
        g = jnp.tanh(gates[:, 2 * H:3 * H])
        o = jax.nn.sigmoid(gates[:, 3 * H:4 * H])
        c = f * c + i * g
        h = o * jnp.tanh(c)
        return (h, c), h

    h0 = jnp.zeros((B, H), jnp.float32)
    c0 = jnp.zeros((B, H), jnp.float32)
    _, hs = jax.lax.scan(cell, (h0, c0), jnp.transpose(x, (1, 0, 2)))
    hs = jnp.transpose(hs, (1, 0, 2))                 # (B, T, H)
    return hs @ w_fc.T + b_fc


# -----------------------------------------------------------------------------
# Deterministic parameter init (PyTorch-style uniform(-1/sqrt(H), 1/sqrt(H)))
# -----------------------------------------------------------------------------
def init_params(key, input_dim, hidden_dim, output_dim):
    ks = jax.random.split(key, 6)
    s = 1.0 / jnp.sqrt(hidden_dim)
    u = lambda k, shape: jax.random.uniform(k, shape, jnp.float32, -s, s)
    return {
        "w_ih": u(ks[0], (4 * hidden_dim, input_dim)),
        "w_hh": u(ks[1], (4 * hidden_dim, hidden_dim)),
        "b_ih": u(ks[2], (4 * hidden_dim,)),
        "b_hh": u(ks[3], (4 * hidden_dim,)),
        "w_fc": u(ks[4], (output_dim, hidden_dim)),
        "b_fc": u(ks[5], (output_dim,)),
    }


if __name__ == "__main__":
    B, T = 2, 8
    input_dim, hidden_dim, output_dim = 4, 32, 4

    key = jax.random.PRNGKey(0)
    k_x, k_p = jax.random.split(key)
    x = jax.random.normal(k_x, (B, T, input_dim), jnp.float32)
    params = init_params(k_p, input_dim, hidden_dim, output_dim)

    out = jax.block_until_ready(transition_model_forward(x, params))
    ref = jax.block_until_ready(transition_model_reference(x, params))

    assert out.shape == (B, T, output_dim), out.shape
    err = float(jnp.max(jnp.abs(out - ref)))
    assert jnp.allclose(out, ref, atol=1e-4, rtol=1e-4), err
    print("KERNEL_OK")
</pallas_src>

<mosaic_0001>
module attributes {stable_mosaic.version = 11 : i64} {
  func.func @_transition_kernel(%arg0: memref<64x4xf32, #tpu.memory_space<vmem>>, %arg1: memref<4x512xf32, #tpu.memory_space<vmem>>, %arg2: memref<128x512xf32, #tpu.memory_space<vmem>>, %arg3: memref<1x512xf32, #tpu.memory_space<vmem>>, %arg4: memref<128x128xf32, #tpu.memory_space<vmem>>, %arg5: memref<1x128xf32, #tpu.memory_space<vmem>>, %arg6: memref<64x128xf32, #tpu.memory_space<vmem>>, %arg7: memref<64x512xf32, #tpu.memory_space<vmem>>, %arg8: memref<64x128xf32, #tpu.memory_space<vmem>>) attributes {dimension_semantics = [], scalar_prefetch = 0 : i64, scratch_operands = 2 : i64, tpu.core_type = #tpu.core_type<tc>} {
    %c0 = arith.constant 0 : index
    %c0_0 = arith.constant 0 : index
    %0 = vector.load %arg0[%c0, %c0_0] : memref<64x4xf32, #tpu.memory_space<vmem>>, vector<64x4xf32>
    %c0_1 = arith.constant 0 : index
    %c0_2 = arith.constant 0 : index
    %1 = vector.load %arg1[%c0_1, %c0_2] : memref<4x512xf32, #tpu.memory_space<vmem>>, vector<4x512xf32>
    %cst = arith.constant dense<0.000000e+00> : vector<64x512xf32>
    %2 = tpu.matmul %0, %1, %cst {dimension_numbers = #tpu.dot_dimension_numbers<[1], [0], [0], [1], [0, 0, 1, 1], [], []>} : vector<64x4xf32>, vector<4x512xf32>, vector<64x512xf32> -> vector<64x512xf32>
    %c0_3 = arith.constant 0 : index
    %c0_4 = arith.constant 0 : index
    %3 = vector.load %arg3[%c0_3, %c0_4] : memref<1x512xf32, #tpu.memory_space<vmem>>, vector<1x512xf32>
    %4 = vector.broadcast %3 : vector<1x512xf32> to vector<64x512xf32>
    %5 = arith.addf %2, %4 : vector<64x512xf32>
    %c0_5 = arith.constant 0 : index
    %c0_6 = arith.constant 0 : index
    %6 = vector.load %arg7[%c0_5, %c0_6] : memref<64x512xf32, #tpu.memory_space<vmem>>, vector<64x512xf32>
    tpu.vector_store %arg7[%c0_5, %c0_6], %5 {strides = array<i32>} : memref<64x512xf32, #tpu.memory_space<vmem>>, vector<64x512xf32>,
    %cst_7 = arith.constant 0.000000e+00 : f32
    %7 = vector.broadcast %cst_7 : f32 to vector<8x128xf32>
    %cst_8 = arith.constant 0.000000e+00 : f32
    %8 = vector.broadcast %cst_8 : f32 to vector<8x128xf32>
    %c0_9 = arith.constant 0 : index
    %c0_10 = arith.constant 0 : index
    %9 = vector.load %arg7[%c0_9, %c0_10] : memref<64x512xf32, #tpu.memory_space<vmem>>, vector<8x512xf32>
    %c0_11 = arith.constant 0 : index
    %c0_12 = arith.constant 0 : index
    %10 = vector.load %arg2[%c0_11, %c0_12] : memref<128x512xf32, #tpu.memory_space<vmem>>, vector<128x512xf32>
    %cst_13 = arith.constant dense<0.000000e+00> : vector<8x512xf32>
    %11 = tpu.matmul %7, %10, %cst_13 {dimension_numbers = #tpu.dot_dimension_numbers<[1], [0], [0], [1], [0, 0, 1, 1], [], []>} : vector<8x128xf32>, vector<128x512xf32>, vector<8x512xf32> -> vector<8x512xf32>
    %12 = arith.addf %9, %11 : vector<8x512xf32>
    %13 = vector.extract_strided_slice %12 {offsets = [0, 0], sizes = [8, 128], strides = [1, 1]} : vector<8x512xf32> to vector<8x128xf32>
    %14 = arith.negf %13 : vector<8x128xf32>
    %15 = math.exp %14 : vector<8x128xf32>
    %cst_14 = arith.constant 1.000000e+00 : f32
    %16 = vector.broadcast %cst_14 : f32 to vector<8x128xf32>
    %17 = arith.addf %16, %15 : vector<8x128xf32>
    %18 = arith.divf %16, %17 : vector<8x128xf32>
    %19 = vector.extract_strided_slice %12 {offsets = [0, 128], sizes = [8, 128], strides = [1, 1]} : vector<8x512xf32> to vector<8x128xf32>
    %20 = arith.negf %19 : vector<8x128xf32>
    %21 = math.exp %20 : vector<8x128xf32>
    %cst_15 = arith.constant 1.000000e+00 : f32
    %22 = vector.broadcast %cst_15 : f32 to vector<8x128xf32>
    %23 = arith.addf %22, %21 : vector<8x128xf32>
    %24 = arith.divf %22, %23 : vector<8x128xf32>
    %25 = vector.extract_strided_slice %12 {offsets = [0, 256], sizes = [8, 128], strides = [1, 1]} : vector<8x512xf32> to vector<8x128xf32>
    %26 = math.tanh %25 : vector<8x128xf32>
    %27 = vector.extract_strided_slice %12 {offsets = [0, 384], sizes = [8, 128], strides = [1, 1]} : vector<8x512xf32> to vector<8x128xf32>
    %28 = arith.negf %27 : vector<8x128xf32>
    %29 = math.exp %28 : vector<8x128xf32>
    %cst_16 = arith.constant 1.000000e+00 : f32
    %30 = vector.broadcast %cst_16 : f32 to vector<8x128xf32>
    %31 = arith.addf %30, %29 : vector<8x128xf32>
    %32 = arith.divf %30, %31 : vector<8x128xf32>
    %33 = arith.mulf %24, %8 : vector<8x128xf32>
    %34 = arith.mulf %18, %26 : vector<8x128xf32>
    %35 = arith.addf %33, %34 : vector<8x128xf32>
    %36 = math.tanh %35 : vector<8x128xf32>
    %37 = arith.mulf %32, %36 : vector<8x128xf32>
    %c0_17 = arith.constant 0 : index
    %c0_18 = arith.constant 0 : index
    %38 = vector.load %arg8[%c0_17, %c0_18] : memref<64x128xf32, #tpu.memory_space<vmem>>, vector<8x128xf32>
    tpu.vector_store %arg8[%c0_17, %c0_18], %37 {strides = array<i32>} : memref<64x128xf32, #tpu.memory_space<vmem>>, vector<8x128xf32>,
    %c8 = arith.constant 8 : index
    %c0_19 = arith.constant 0 : index
    %39 = vector.load %arg7[%c8, %c0_19] : memref<64x512xf32, #tpu.memory_space<vmem>>, vector<8x512xf32>
    %c0_20 = arith.constant 0 : index
    %c0_21 = arith.constant 0 : index
    %40 = vector.load %arg2[%c0_20, %c0_21] : memref<128x512xf32, #tpu.memory_space<vmem>>, vector<128x512xf32>
    %cst_22 = arith.constant dense<0.000000e+00> : vector<8x512xf32>
    %41 = tpu.matmul %37, %40, %cst_22 {dimension_numbers = #tpu.dot_dimension_numbers<[1], [0], [0], [1], [0, 0, 1, 1], [], []>} : vector<8x128xf32>, vector<128x512xf32>, vector<8x512xf32> -> vector<8x512xf32>
    %42 = arith.addf %39, %41 : vector<8x512xf32>
    %43 = vector.extract_strided_slice %42 {offsets = [0, 0], sizes = [8, 128], strides = [1, 1]} : vector<8x512xf32> to vector<8x128xf32>
    %44 = arith.negf %43 : vector<8x128xf32>
    %45 = math.exp %44 : vector<8x128xf32>
    %cst_23 = arith.constant 1.000000e+00 : f32
    %46 = vector.broadcast %cst_23 : f32 to vector<8x128xf32>
    %47 = arith.addf %46, %45 : vector<8x128xf32>
    %48 = arith.divf %46, %47 : vector<8x128xf32>
    %49 = vector.extract_strided_slice %42 {offsets = [0, 128], sizes = [8, 128], strides = [1, 1]} : vector<8x512xf32> to vector<8x128xf32>
    %50 = arith.negf %49 : vector<8x128xf32>
    %51 = math.exp %50 : vector<8x128xf32>
    %cst_24 = arith.constant 1.000000e+00 : f32
    %52 = vector.broadcast %cst_24 : f32 to vector<8x128xf32>
    %53 = arith.addf %52, %51 : vector<8x128xf32>
    %54 = arith.divf %52, %53 : vector<8x128xf32>
    %55 = vector.extract_strided_slice %42 {offsets = [0, 256], sizes = [8, 128], strides = [1, 1]} : vector<8x512xf32> to vector<8x128xf32>
    %56 = math.tanh %55 : vector<8x128xf32>
    %57 = vector.extract_strided_slice %42 {offsets = [0, 384], sizes = [8, 128], strides = [1, 1]} : vector<8x512xf32> to vector<8x128xf32>
    %58 = arith.negf %57 : vector<8x128xf32>
    %59 = math.exp %58 : vector<8x128xf32>
    %cst_25 = arith.constant 1.000000e+00 : f32
    %60 = vector.broadcast %cst_25 : f32 to vector<8x128xf32>
    %61 = arith.addf %60, %59 : vector<8x128xf32>
    %62 = arith.divf %60, %61 : vector<8x128xf32>
    %63 = arith.mulf %54, %35 : vector<8x128xf32>
    %64 = arith.mulf %48, %56 : vector<8x128xf32>
    %65 = arith.addf %63, %64 : vector<8x128xf32>
    %66 = math.tanh %65 : vector<8x128xf32>
    %67 = arith.mulf %62, %66 : vector<8x128xf32>
    %c8_26 = arith.constant 8 : index
    %c0_27 = arith.constant 0 : index
    %68 = vector.load %arg8[%c8_26, %c0_27] : memref<64x128xf32, #tpu.memory_space<vmem>>, vector<8x128xf32>
    tpu.vector_store %arg8[%c8_26, %c0_27], %67 {strides = array<i32>} : memref<64x128xf32, #tpu.memory_space<vmem>>, vector<8x128xf32>,
    %c16 = arith.constant 16 : index
    %c0_28 = arith.constant 0 : index
    %69 = vector.load %arg7[%c16, %c0_28] : memref<64x512xf32, #tpu.memory_space<vmem>>, vector<8x512xf32>
    %c0_29 = arith.constant 0 : index
    %c0_30 = arith.constant 0 : index
    %70 = vector.load %arg2[%c0_29, %c0_30] : memref<128x512xf32, #tpu.memory_space<vmem>>, vector<128x512xf32>
    %cst_31 = arith.constant dense<0.000000e+00> : vector<8x512xf32>
    %71 = tpu.matmul %67, %70, %cst_31 {dimension_numbers = #tpu.dot_dimension_numbers<[1], [0], [0], [1], [0, 0, 1, 1], [], []>} : vector<8x128xf32>, vector<128x512xf32>, vector<8x512xf32> -> vector<8x512xf32>
    %72 = arith.addf %69, %71 : vector<8x512xf32>
    %73 = vector.extract_strided_slice %72 {offsets = [0, 0], sizes = [8, 128], strides = [1, 1]} : vector<8x512xf32> to vector<8x128xf32>
    %74 = arith.negf %73 : vector<8x128xf32>
    %75 = math.exp %74 : vector<8x128xf32>
    %cst_32 = arith.constant 1.000000e+00 : f32
    %76 = vector.broadcast %cst_32 : f32 to vector<8x128xf32>
    %77 = arith.addf %76, %75 : vector<8x128xf32>
    %78 = arith.divf %76, %77 : vector<8x128xf32>
    %79 = vector.extract_strided_slice %72 {offsets = [0, 128], sizes = [8, 128], strides = [1, 1]} : vector<8x512xf32> to vector<8x128xf32>
    %80 = arith.negf %79 : vector<8x128xf32>
    %81 = math.exp %80 : vector<8x128xf32>
    %cst_33 = arith.constant 1.000000e+00 : f32
    %82 = vector.broadcast %cst_33 : f32 to vector<8x128xf32>
    %83 = arith.addf %82, %81 : vector<8x128xf32>
    %84 = arith.divf %82, %83 : vector<8x128xf32>
    %85 = vector.extract_strided_slice %72 {offsets = [0, 256], sizes = [8, 128], strides = [1, 1]} : vector<8x512xf32> to vector<8x128xf32>
    %86 = math.tanh %85 : vector<8x128xf32>
    %87 = vector.extract_strided_slice %72 {offsets = [0, 384], sizes = [8, 128], strides = [1, 1]} : vector<8x512xf32> to vector<8x128xf32>
    %88 = arith.negf %87 : vector<8x128xf32>
    %89 = math.exp %88 : vector<8x128xf32>
    %cst_34 = arith.constant 1.000000e+00 : f32
    %90 = vector.broadcast %cst_34 : f32 to vector<8x128xf32>
    %91 = arith.addf %90, %89 : vector<8x128xf32>
    %92 = arith.divf %90, %91 : vector<8x128xf32>
    %93 = arith.mulf %84, %65 : vector<8x128xf32>
    %94 = arith.mulf %78, %86 : vector<8x128xf32>
    %95 = arith.addf %93, %94 : vector<8x128xf32>
    %96 = math.tanh %95 : vector<8x128xf32>
    %97 = arith.mulf %92, %96 : vector<8x128xf32>
    %c16_35 = arith.constant 16 : index
    %c0_36 = arith.constant 0 : index
    %98 = vector.load %arg8[%c16_35, %c0_36] : memref<64x128xf32, #tpu.memory_space<vmem>>, vector<8x128xf32>
    tpu.vector_store %arg8[%c16_35, %c0_36], %97 {strides = array<i32>} : memref<64x128xf32, #tpu.memory_space<vmem>>, vector<8x128xf32>,
    %c24 = arith.constant 24 : index
    %c0_37 = arith.constant 0 : index
    %99 = vector.load %arg7[%c24, %c0_37] : memref<64x512xf32, #tpu.memory_space<vmem>>, vector<8x512xf32>
    %c0_38 = arith.constant 0 : index
    %c0_39 = arith.constant 0 : index
    %100 = vector.load %arg2[%c0_38, %c0_39] : memref<128x512xf32, #tpu.memory_space<vmem>>, vector<128x512xf32>
    %cst_40 = arith.constant dense<0.000000e+00> : vector<8x512xf32>
    %101 = tpu.matmul %97, %100, %cst_40 {dimension_numbers = #tpu.dot_dimension_numbers<[1], [0], [0], [1], [0, 0, 1, 1], [], []>} : vector<8x128xf32>, vector<128x512xf32>, vector<8x512xf32> -> vector<8x512xf32>
    %102 = arith.addf %99, %101 : vector<8x512xf32>
    %103 = vector.extract_strided_slice %102 {offsets = [0, 0], sizes = [8, 128], strides = [1, 1]} : vector<8x512xf32> to vector<8x128xf32>
    %104 = arith.negf %103 : vector<8x128xf32>
    %105 = math.exp %104 : vector<8x128xf32>
    %cst_41 = arith.constant 1.000000e+00 : f32
    %106 = vector.broadcast %cst_41 : f32 to vector<8x128xf32>
    %107 = arith.addf %106, %105 : vector<8x128xf32>
    %108 = arith.divf %106, %107 : vector<8x128xf32>
    %109 = vector.extract_strided_slice %102 {offsets = [0, 128], sizes = [8, 128], strides = [1, 1]} : vector<8x512xf32> to vector<8x128xf32>
    %110 = arith.negf %109 : vector<8x128xf32>
    %111 = math.exp %110 : vector<8x128xf32>
    %cst_42 = arith.constant 1.000000e+00 : f32
    %112 = vector.broadcast %cst_42 : f32 to vector<8x128xf32>
    %113 = arith.addf %112, %111 : vector<8x128xf32>
    %114 = arith.divf %112, %113 : vector<8x128xf32>
    %115 = vector.extract_strided_slice %102 {offsets = [0, 256], sizes = [8, 128], strides = [1, 1]} : vector<8x512xf32> to vector<8x128xf32>
    %116 = math.tanh %115 : vector<8x128xf32>
    %117 = vector.extract_strided_slice %102 {offsets = [0, 384], sizes = [8, 128], strides = [1, 1]} : vector<8x512xf32> to vector<8x128xf32>
    %118 = arith.negf %117 : vector<8x128xf32>
    %119 = math.exp %118 : vector<8x128xf32>
    %cst_43 = arith.constant 1.000000e+00 : f32
    %120 = vector.broadcast %cst_43 : f32 to vector<8x128xf32>
    %121 = arith.addf %120, %119 : vector<8x128xf32>
    %122 = arith.divf %120, %121 : vector<8x128xf32>
    %123 = arith.mulf %114, %95 : vector<8x128xf32>
    %124 = arith.mulf %108, %116 : vector<8x128xf32>
    %125 = arith.addf %123, %124 : vector<8x128xf32>
    %126 = math.tanh %125 : vector<8x128xf32>
    %127 = arith.mulf %122, %126 : vector<8x128xf32>
    %c24_44 = arith.constant 24 : index
    %c0_45 = arith.constant 0 : index
    %128 = vector.load %arg8[%c24_44, %c0_45] : memref<64x128xf32, #tpu.memory_space<vmem>>, vector<8x128xf32>
    tpu.vector_store %arg8[%c24_44, %c0_45], %127 {strides = array<i32>} : memref<64x128xf32, #tpu.memory_space<vmem>>, vector<8x128xf32>,
    %c32 = arith.constant 32 : index
    %c0_46 = arith.constant 0 : index
    %129 = vector.load %arg7[%c32, %c0_46] : memref<64x512xf32, #tpu.memory_space<vmem>>, vector<8x512xf32>
    %c0_47 = arith.constant 0 : index
    %c0_48 = arith.constant 0 : index
    %130 = vector.load %arg2[%c0_47, %c0_48] : memref<128x512xf32, #tpu.memory_space<vmem>>, vector<128x512xf32>
    %cst_49 = arith.constant dense<0.000000e+00> : vector<8x512xf32>
    %131 = tpu.matmul %127, %130, %cst_49 {dimension_numbers = #tpu.dot_dimension_numbers<[1], [0], [0], [1], [0, 0, 1, 1], [], []>} : vector<8x128xf32>, vector<128x512xf32>, vector<8x512xf32> -> vector<8x512xf32>
    %132 = arith.addf %129, %131 : vector<8x512xf32>
    %133 = vector.extract_strided_slice %132 {offsets = [0, 0], sizes = [8, 128], strides = [1, 1]} : vector<8x512xf32> to vector<8x128xf32>
    %134 = arith.negf %133 : vector<8x128xf32>
    %135 = math.exp %134 : vector<8x128xf32>
    %cst_50 = arith.constant 1.000000e+00 : f32
    %136 = vector.broadcast %cst_50 : f32 to vector<8x128xf32>
    %137 = arith.addf %136, %135 : vector<8x128xf32>
    %138 = arith.divf %136, %137 : vector<8x128xf32>
    %139 = vector.extract_strided_slice %132 {offsets = [0, 128], sizes = [8, 128], strides = [1, 1]} : vector<8x512xf32> to vector<8x128xf32>
    %140 = arith.negf %139 : vector<8x128xf32>
    %141 = math.exp %140 : vector<8x128xf32>
    %cst_51 = arith.constant 1.000000e+00 : f32
    %142 = vector.broadcast %cst_51 : f32 to vector<8x128xf32>
    %143 = arith.addf %142, %141 : vector<8x128xf32>
    %144 = arith.divf %142, %143 : vector<8x128xf32>
    %145 = vector.extract_strided_slice %132 {offsets = [0, 256], sizes = [8, 128], strides = [1, 1]} : vector<8x512xf32> to vector<8x128xf32>
    %146 = math.tanh %145 : vector<8x128xf32>
    %147 = vector.extract_strided_slice %132 {offsets = [0, 384], sizes = [8, 128], strides = [1, 1]} : vector<8x512xf32> to vector<8x128xf32>
    %148 = arith.negf %147 : vector<8x128xf32>
    %149 = math.exp %148 : vector<8x128xf32>
    %cst_52 = arith.constant 1.000000e+00 : f32
    %150 = vector.broadcast %cst_52 : f32 to vector<8x128xf32>
    %151 = arith.addf %150, %149 : vector<8x128xf32>
    %152 = arith.divf %150, %151 : vector<8x128xf32>
    %153 = arith.mulf %144, %125 : vector<8x128xf32>
    %154 = arith.mulf %138, %146 : vector<8x128xf32>
    %155 = arith.addf %153, %154 : vector<8x128xf32>
    %156 = math.tanh %155 : vector<8x128xf32>
    %157 = arith.mulf %152, %156 : vector<8x128xf32>
    %c32_53 = arith.constant 32 : index
    %c0_54 = arith.constant 0 : index
    %158 = vector.load %arg8[%c32_53, %c0_54] : memref<64x128xf32, #tpu.memory_space<vmem>>, vector<8x128xf32>
    tpu.vector_store %arg8[%c32_53, %c0_54], %157 {strides = array<i32>} : memref<64x128xf32, #tpu.memory_space<vmem>>, vector<8x128xf32>,
    %c40 = arith.constant 40 : index
    %c0_55 = arith.constant 0 : index
    %159 = vector.load %arg7[%c40, %c0_55] : memref<64x512xf32, #tpu.memory_space<vmem>>, vector<8x512xf32>
    %c0_56 = arith.constant 0 : index
    %c0_57 = arith.constant 0 : index
    %160 = vector.load %arg2[%c0_56, %c0_57] : memref<128x512xf32, #tpu.memory_space<vmem>>, vector<128x512xf32>
    %cst_58 = arith.constant dense<0.000000e+00> : vector<8x512xf32>
    %161 = tpu.matmul %157, %160, %cst_58 {dimension_numbers = #tpu.dot_dimension_numbers<[1], [0], [0], [1], [0, 0, 1, 1], [], []>} : vector<8x128xf32>, vector<128x512xf32>, vector<8x512xf32> -> vector<8x512xf32>
    %162 = arith.addf %159, %161 : vector<8x512xf32>
    %163 = vector.extract_strided_slice %162 {offsets = [0, 0], sizes = [8, 128], strides = [1, 1]} : vector<8x512xf32> to vector<8x128xf32>
    %164 = arith.negf %163 : vector<8x128xf32>
    %165 = math.exp %164 : vector<8x128xf32>
    %cst_59 = arith.constant 1.000000e+00 : f32
    %166 = vector.broadcast %cst_59 : f32 to vector<8x128xf32>
    %167 = arith.addf %166, %165 : vector<8x128xf32>
    %168 = arith.divf %166, %167 : vector<8x128xf32>
    %169 = vector.extract_strided_slice %162 {offsets = [0, 128], sizes = [8, 128], strides = [1, 1]} : vector<8x512xf32> to vector<8x128xf32>
    %170 = arith.negf %169 : vector<8x128xf32>
    %171 = math.exp %170 : vector<8x128xf32>
    %cst_60 = arith.constant 1.000000e+00 : f32
    %172 = vector.broadcast %cst_60 : f32 to vector<8x128xf32>
    %173 = arith.addf %172, %171 : vector<8x128xf32>
    %174 = arith.divf %172, %173 : vector<8x128xf32>
    %175 = vector.extract_strided_slice %162 {offsets = [0, 256], sizes = [8, 128], strides = [1, 1]} : vector<8x512xf32> to vector<8x128xf32>
    %176 = math.tanh %175 : vector<8x128xf32>
    %177 = vector.extract_strided_slice %162 {offsets = [0, 384], sizes = [8, 128], strides = [1, 1]} : vector<8x512xf32> to vector<8x128xf32>
    %178 = arith.negf %177 : vector<8x128xf32>
    %179 = math.exp %178 : vector<8x128xf32>
    %cst_61 = arith.constant 1.000000e+00 : f32
    %180 = vector.broadcast %cst_61 : f32 to vector<8x128xf32>
    %181 = arith.addf %180, %179 : vector<8x128xf32>
    %182 = arith.divf %180, %181 : vector<8x128xf32>
    %183 = arith.mulf %174, %155 : vector<8x128xf32>
    %184 = arith.mulf %168, %176 : vector<8x128xf32>
    %185 = arith.addf %183, %184 : vector<8x128xf32>
    %186 = math.tanh %185 : vector<8x128xf32>
    %187 = arith.mulf %182, %186 : vector<8x128xf32>
    %c40_62 = arith.constant 40 : index
    %c0_63 = arith.constant 0 : index
    %188 = vector.load %arg8[%c40_62, %c0_63] : memref<64x128xf32, #tpu.memory_space<vmem>>, vector<8x128xf32>
    tpu.vector_store %arg8[%c40_62, %c0_63], %187 {strides = array<i32>} : memref<64x128xf32, #tpu.memory_space<vmem>>, vector<8x128xf32>,
    %c48 = arith.constant 48 : index
    %c0_64 = arith.constant 0 : index
    %189 = vector.load %arg7[%c48, %c0_64] : memref<64x512xf32, #tpu.memory_space<vmem>>, vector<8x512xf32>
    %c0_65 = arith.constant 0 : index
    %c0_66 = arith.constant 0 : index
    %190 = vector.load %arg2[%c0_65, %c0_66] : memref<128x512xf32, #tpu.memory_space<vmem>>, vector<128x512xf32>
    %cst_67 = arith.constant dense<0.000000e+00> : vector<8x512xf32>
    %191 = tpu.matmul %187, %190, %cst_67 {dimension_numbers = #tpu.dot_dimension_numbers<[1], [0], [0], [1], [0, 0, 1, 1], [], []>} : vector<8x128xf32>, vector<128x512xf32>, vector<8x512xf32> -> vector<8x512xf32>
    %192 = arith.addf %189, %191 : vector<8x512xf32>
    %193 = vector.extract_strided_slice %192 {offsets = [0, 0], sizes = [8, 128], strides = [1, 1]} : vector<8x512xf32> to vector<8x128xf32>
    %194 = arith.negf %193 : vector<8x128xf32>
    %195 = math.exp %194 : vector<8x128xf32>
    %cst_68 = arith.constant 1.000000e+00 : f32
    %196 = vector.broadcast %cst_68 : f32 to vector<8x128xf32>
    %197 = arith.addf %196, %195 : vector<8x128xf32>
    %198 = arith.divf %196, %197 : vector<8x128xf32>
    %199 = vector.extract_strided_slice %192 {offsets = [0, 128], sizes = [8, 128], strides = [1, 1]} : vector<8x512xf32> to vector<8x128xf32>
    %200 = arith.negf %199 : vector<8x128xf32>
    %201 = math.exp %200 : vector<8x128xf32>
    %cst_69 = arith.constant 1.000000e+00 : f32
    %202 = vector.broadcast %cst_69 : f32 to vector<8x128xf32>
    %203 = arith.addf %202, %201 : vector<8x128xf32>
    %204 = arith.divf %202, %203 : vector<8x128xf32>
    %205 = vector.extract_strided_slice %192 {offsets = [0, 256], sizes = [8, 128], strides = [1, 1]} : vector<8x512xf32> to vector<8x128xf32>
    %206 = math.tanh %205 : vector<8x128xf32>
    %207 = vector.extract_strided_slice %192 {offsets = [0, 384], sizes = [8, 128], strides = [1, 1]} : vector<8x512xf32> to vector<8x128xf32>
    %208 = arith.negf %207 : vector<8x128xf32>
    %209 = math.exp %208 : vector<8x128xf32>
    %cst_70 = arith.constant 1.000000e+00 : f32
    %210 = vector.broadcast %cst_70 : f32 to vector<8x128xf32>
    %211 = arith.addf %210, %209 : vector<8x128xf32>
    %212 = arith.divf %210, %211 : vector<8x128xf32>
    %213 = arith.mulf %204, %185 : vector<8x128xf32>
    %214 = arith.mulf %198, %206 : vector<8x128xf32>
    %215 = arith.addf %213, %214 : vector<8x128xf32>
    %216 = math.tanh %215 : vector<8x128xf32>
    %217 = arith.mulf %212, %216 : vector<8x128xf32>
    %c48_71 = arith.constant 48 : index
    %c0_72 = arith.constant 0 : index
    %218 = vector.load %arg8[%c48_71, %c0_72] : memref<64x128xf32, #tpu.memory_space<vmem>>, vector<8x128xf32>
    tpu.vector_store %arg8[%c48_71, %c0_72], %217 {strides = array<i32>} : memref<64x128xf32, #tpu.memory_space<vmem>>, vector<8x128xf32>,
    %c56 = arith.constant 56 : index
    %c0_73 = arith.constant 0 : index
    %219 = vector.load %arg7[%c56, %c0_73] : memref<64x512xf32, #tpu.memory_space<vmem>>, vector<8x512xf32>
    %c0_74 = arith.constant 0 : index
    %c0_75 = arith.constant 0 : index
    %220 = vector.load %arg2[%c0_74, %c0_75] : memref<128x512xf32, #tpu.memory_space<vmem>>, vector<128x512xf32>
    %cst_76 = arith.constant dense<0.000000e+00> : vector<8x512xf32>
    %221 = tpu.matmul %217, %220, %cst_76 {dimension_numbers = #tpu.dot_dimension_numbers<[1], [0], [0], [1], [0, 0, 1, 1], [], []>} : vector<8x128xf32>, vector<128x512xf32>, vector<8x512xf32> -> vector<8x512xf32>
    %222 = arith.addf %219, %221 : vector<8x512xf32>
    %223 = vector.extract_strided_slice %222 {offsets = [0, 0], sizes = [8, 128], strides = [1, 1]} : vector<8x512xf32> to vector<8x128xf32>
    %224 = arith.negf %223 : vector<8x128xf32>
    %225 = math.exp %224 : vector<8x128xf32>
    %cst_77 = arith.constant 1.000000e+00 : f32
    %226 = vector.broadcast %cst_77 : f32 to vector<8x128xf32>
    %227 = arith.addf %226, %225 : vector<8x128xf32>
    %228 = arith.divf %226, %227 : vector<8x128xf32>
    %229 = vector.extract_strided_slice %222 {offsets = [0, 128], sizes = [8, 128], strides = [1, 1]} : vector<8x512xf32> to vector<8x128xf32>
    %230 = arith.negf %229 : vector<8x128xf32>
    %231 = math.exp %230 : vector<8x128xf32>
    %cst_78 = arith.constant 1.000000e+00 : f32
    %232 = vector.broadcast %cst_78 : f32 to vector<8x128xf32>
    %233 = arith.addf %232, %231 : vector<8x128xf32>
    %234 = arith.divf %232, %233 : vector<8x128xf32>
    %235 = vector.extract_strided_slice %222 {offsets = [0, 256], sizes = [8, 128], strides = [1, 1]} : vector<8x512xf32> to vector<8x128xf32>
    %236 = math.tanh %235 : vector<8x128xf32>
    %237 = vector.extract_strided_slice %222 {offsets = [0, 384], sizes = [8, 128], strides = [1, 1]} : vector<8x512xf32> to vector<8x128xf32>
    %238 = arith.negf %237 : vector<8x128xf32>
    %239 = math.exp %238 : vector<8x128xf32>
    %cst_79 = arith.constant 1.000000e+00 : f32
    %240 = vector.broadcast %cst_79 : f32 to vector<8x128xf32>
    %241 = arith.addf %240, %239 : vector<8x128xf32>
    %242 = arith.divf %240, %241 : vector<8x128xf32>
    %243 = arith.mulf %234, %215 : vector<8x128xf32>
    %244 = arith.mulf %228, %236 : vector<8x128xf32>
    %245 = arith.addf %243, %244 : vector<8x128xf32>
    %246 = math.tanh %245 : vector<8x128xf32>
    %247 = arith.mulf %242, %246 : vector<8x128xf32>
    %c56_80 = arith.constant 56 : index
    %c0_81 = arith.constant 0 : index
    %248 = vector.load %arg8[%c56_80, %c0_81] : memref<64x128xf32, #tpu.memory_space<vmem>>, vector<8x128xf32>
    tpu.vector_store %arg8[%c56_80, %c0_81], %247 {strides = array<i32>} : memref<64x128xf32, #tpu.memory_space<vmem>>, vector<8x128xf32>,
    %c0_82 = arith.constant 0 : index
    %c0_83 = arith.constant 0 : index
    %249 = vector.load %arg8[%c0_82, %c0_83] : memref<64x128xf32, #tpu.memory_space<vmem>>, vector<64x128xf32>
    %c0_84 = arith.constant 0 : index
    %c0_85 = arith.constant 0 : index
    %250 = vector.load %arg4[%c0_84, %c0_85] : memref<128x128xf32, #tpu.memory_space<vmem>>, vector<128x128xf32>
    %cst_86 = arith.constant dense<0.000000e+00> : vector<64x128xf32>
    %251 = tpu.matmul %249, %250, %cst_86 {dimension_numbers = #tpu.dot_dimension_numbers<[1], [0], [0], [1], [0, 0, 1, 1], [], []>} : vector<64x128xf32>, vector<128x128xf32>, vector<64x128xf32> -> vector<64x128xf32>
    %c0_87 = arith.constant 0 : index
    %c0_88 = arith.constant 0 : index
    %252 = vector.load %arg5[%c0_87, %c0_88] : memref<1x128xf32, #tpu.memory_space<vmem>>, vector<1x128xf32>
    %253 = vector.broadcast %252 : vector<1x128xf32> to vector<64x128xf32>
    %254 = arith.addf %251, %253 : vector<64x128xf32>
    %c0_89 = arith.constant 0 : index
    %c0_90 = arith.constant 0 : index
    %255 = vector.load %arg6[%c0_89, %c0_90] : memref<64x128xf32, #tpu.memory_space<vmem>>, vector<64x128xf32>
    tpu.vector_store %arg6[%c0_89, %c0_90], %254 {strides = array<i32>} : memref<64x128xf32, #tpu.memory_space<vmem>>, vector<64x128xf32>,
    return
  }
}

</mosaic_0001>

<llo_original>
// kernel: tpu_custom_call.1
$region0: #{tpu_custom_call.1}
  #allocation0 [shape = 'u32[]', space=smem, size = 0x4, offset = 0x4, fixed_abs, tag = 'smem constant byte address 0x4 - core index']
  #allocation1 [shape = 'u32[144,128]{1,0:T(1,128)}', space=vmem, size = 0x12000, scoped, tag = 'internal scratch']
  #allocation2 [shape = 'f32[64,512]{1,0:T(8,128)}', space=vmem, size = 0x20000, scoped, tag = 'scratch operand']
  #allocation3 [shape = 'f32[64,128]{1,0:T(8,128)}', space=vmem, size = 0x8000, scoped, tag = 'scratch operand']
  %s0 = inlined_call_operand.vmem [shape: f32[64,4], index: 0, kind: input, shape index: {}]
  %s1 = inlined_call_operand.vmem [shape: f32[4,512], index: 1, kind: input, shape index: {}]
  %s2 = inlined_call_operand.hbm [shape: f32[128,512], index: 2, kind: input, shape index: {}]
  %s3 = inlined_call_operand.vmem [shape: f32[1,512], index: 3, kind: input, shape index: {}]
  %s4 = inlined_call_operand.hbm [shape: f32[128,128], index: 4, kind: input, shape index: {}]
  %s5 = inlined_call_operand.vmem [shape: f32[1,128], index: 5, kind: input, shape index: {}]
  %s6 = inlined_call_operand.hbm [shape: f32[64,128], index: 6, kind: output, shape index: {}]
  %s7 = sld [smem:[#allocation0]]
  $region42: #{tpu_custom_call.1} parent=0
    _
  %s9 = ssub.s32 1, %s7
  %s10 = scalar_select 0, %s9, %s7
  $region1: #{tpu_custom_call.1} parent=0
    #allocation4 [shape = 'u8[262144]{0}', space=vmem, size = 0x40000, scoped, tag = 'input window, operand 2, single buffered']
    #allocation5 [shape = 's32[1]{0}', space=sflag, size = 0x4, scoped, tag = 'scoped memory for tpu_custom_call.1']
    #allocation6 [shape = 's32[1]{0}', space=sflag, size = 0x4, scoped, tag = 'scoped memory for tpu_custom_call.1']
    #allocation7 [shape = 'u8[65536]{0}', space=vmem, size = 0x10000, scoped, tag = 'input window, operand 4, single buffered']
    #allocation8 [shape = 's32[1]{0}', space=sflag, size = 0x4, scoped, tag = 'scoped memory for tpu_custom_call.1']
    #allocation9 [shape = 'u8[32768]{0}', space=vmem, size = 0x8000, scoped, tag = 'output window, operand 0, single buffered']
    %11 = vsyncpa [#allocation5], 0
    %12 = vsyncpa [#allocation8], 0
    %13 = vsyncpa [#allocation6], 0
    // Predicated region
    $region2: #{tpu_custom_call.1} parent=1 // pred_check
      _
    $region3: #{tpu_custom_call.1} parent=1 // pred_check_branch
      %15 = sbr.rel (0) target = $region5
    $region4: #{tpu_custom_call.1} parent=1 // pred_region
      _
    $region5: #{tpu_custom_call.1} parent=1 // pred_fallthru
      _
    // Predicated region
    $region6: #{tpu_custom_call.1} parent=1 // pred_check
      _
    $region7: #{tpu_custom_call.1} parent=1 // pred_check_branch
      %17 = sbr.rel (0) target = $region9
    $region8: #{tpu_custom_call.1} parent=1 // pred_region
      _
    $region9: #{tpu_custom_call.1} parent=1 // pred_fallthru
      _
    // Predicated region
    $region10: #{tpu_custom_call.1} parent=1 // pred_check
      _
    $region11: #{tpu_custom_call.1} parent=1 // pred_check_branch
      %19 = sbr.rel (0) target = $region13
    $region12: #{tpu_custom_call.1} parent=1 // pred_region
      %s21 = ssub.s32 8192, 8192
      %22 = vsyncadd [#allocation5], %s21
      %s23 = sshll.u32 [#allocation4], 4
      %s24 = int_to_ptr.vmem [resolvable:$true] %s23
      %29 = dma.hbm_to_vmem [thread:$0]  %s2, 8192, %s24, [#allocation5], 512, 512, 32
    $region13: #{tpu_custom_call.1} parent=1 // pred_fallthru
      _
    // Predicated region
    $region14: #{tpu_custom_call.1} parent=1 // pred_check
      _
    $region15: #{tpu_custom_call.1} parent=1 // pred_check_branch
      %31 = sbr.rel (0) target = $region17
    $region16: #{tpu_custom_call.1} parent=1 // pred_region
      _
    $region17: #{tpu_custom_call.1} parent=1 // pred_fallthru
      _
    // Predicated region
    $region18: #{tpu_custom_call.1} parent=1 // pred_check
      _
    $region19: #{tpu_custom_call.1} parent=1 // pred_check_branch
      %33 = sbr.rel (0) target = $region21
    $region20: #{tpu_custom_call.1} parent=1 // pred_region
      %s35 = ssub.s32 2048, 2048
      %36 = vsyncadd [#allocation8], %s35
      %s37 = sshll.u32 [#allocation7], 4
      %s38 = int_to_ptr.vmem [resolvable:$true] %s37
      %43 = dma.hbm_to_vmem [thread:$0]  %s4, 2048, %s38, [#allocation8], 128, 128, 8
    $region21: #{tpu_custom_call.1} parent=1 // pred_fallthru
      _
    // Predicated region
    $region22: #{tpu_custom_call.1} parent=1 // pred_check
      _
    $region23: #{tpu_custom_call.1} parent=1 // pred_check_branch
      %45 = sbr.rel (0) target = $region25
    $region24: #{tpu_custom_call.1} parent=1 // pred_region
      _
    $region25: #{tpu_custom_call.1} parent=1 // pred_fallthru
      _
    // Predicated region
    $region26: #{tpu_custom_call.1} parent=1 // pred_check
      _
    $region27: #{tpu_custom_call.1} parent=1 // pred_check_branch
      %47 = sbr.rel (0) target = $region29
    $region28: #{tpu_custom_call.1} parent=1 // pred_region
      %48 = dma.done [#allocation5], 8192
    $region29: #{tpu_custom_call.1} parent=1 // pred_fallthru
      _
    // Predicated region
    $region30: #{tpu_custom_call.1} parent=1 // pred_check
      _
    $region31: #{tpu_custom_call.1} parent=1 // pred_check_branch
      %50 = sbr.rel (0) target = $region33
    $region32: #{tpu_custom_call.1} parent=1 // pred_region
      %51 = dma.done [#allocation8], 2048
    $region33: #{tpu_custom_call.1} parent=1 // pred_fallthru
      _
    %v52 = vld [vmem:[%s0] sm:$0xff]
    %v53 = vld [vmem:[%s0 + $0x8] sm:$0xff]
    %v54 = vld [vmem:[%s0 + $0x10] sm:$0xff]
    %v55 = vld [vmem:[%s0 + $0x18] sm:$0xff]
    %v56 = vld [vmem:[%s0 + $0x20] sm:$0xff]
    %v57 = vld [vmem:[%s0 + $0x28] sm:$0xff]
    %v58 = vld [vmem:[%s0 + $0x30] sm:$0xff]
    %v59 = vld [vmem:[%s0 + $0x38] sm:$0xff]
    %v60 = vld [vmem:[%s1] sm:$0xff]
    %v61 = vld [vmem:[%s1 + $0x8] sm:$0xff]
    %v62 = vld [vmem:[%s3] sm:$0xf]
    %v64 = vlaneseq
    %v65 = vshrl.u32 %v64, 7
    %v66 = vsub.s32 0, %v65
    %v67 = vrot.slane %v62, %v66
    %v68 = vlaneseq
    %v69 = vshrl.u32 %v68, 7
    %v70 = vsub.s32 1, %v69
    %v71 = vrot.slane %v62, %v70
    %v72 = vlaneseq
    %v73 = vshrl.u32 %v72, 7
    %v74 = vsub.s32 2, %v73
    %v75 = vrot.slane %v62, %v74
    %v76 = vlaneseq
    %v77 = vshrl.u32 %v76, 7
    %v78 = vsub.s32 3, %v77
    %v79 = vrot.slane %v62, %v78
    %v86 = vcombine.high %v60, %v60
    %v87 = vcombine.high %v61, %v61
    %vm88 = vcmask 31744
    %v90 = vsel %vm88, %v52, 0
    %v93 = vsel %vm88, %v53, 0
    %v96 = vsel %vm88, %v54, 0
    %v99 = vsel %vm88, %v55, 0
    %v102 = vsel %vm88, %v56, 0
    %v105 = vsel %vm88, %v57, 0
    %v108 = vsel %vm88, %v58, 0
    %v111 = vsel %vm88, %v59, 0
    %vm113 = vcmask 1043456
    %v114 = vsel %vm113, %v60, 0
    %v116 = vsel %vm113, %v86, 0
    %v118 = vsel %vm113, %v61, 0
    %v120 = vsel %vm113, %v87, 0
    %122 = vmatprep.subr.mxu0 %v116
    %123 = vmatpush1.msra.mxu0 %v114
    %124 = vmatprep.subr.mxu0 0.0
    %125 = vmatpush1.msra.mxu0 0.0
    %126 = vmatprep.subr.mxu0 0.0
    %127 = vmatpush1.msra.mxu0 0.0
    %128 = vmatprep.subr.mxu0 0.0
    %129 = vmatpush1.msra.mxu0 0.0
    %130 = vmatprep.subr.mxu0 0.0
    %131 = vmatpush1.msra.mxu0 0.0
    %132 = vmatprep.subr.mxu0 0.0
    %133 = vmatpush1.msra.mxu0 0.0
    %134 = vmatprep.subr.mxu0 0.0
    %135 = vmatpush1.msra.mxu0 0.0
    %136 = vmatprep.subr.mxu0 0.0
    %137 = vmatpush1.msra.mxu0 0.0
    %138 = vmatprep.subr.mxu0 0.0
    %139 = vmatpush1.msra.mxu0 0.0
    %140 = vmatprep.subr.mxu0 0.0
    %141 = vmatpush1.msra.mxu0 0.0
    %142 = vmatprep.subr.mxu0 0.0
    %143 = vmatpush1.msra.mxu0 0.0
    %144 = vmatprep.subr.mxu0 0.0
    %145 = vmatpush1.msra.mxu0 0.0
    %146 = vmatprep.subr.mxu0 0.0
    %147 = vmatpush1.msra.mxu0 0.0
    %148 = vmatprep.subr.mxu0 0.0
    %149 = vmatpush1.msra.mxu0 0.0
    %150 = vmatprep.subr.mxu0 0.0
    %151 = vmatpush1.msra.mxu0 0.0
    %152 = vmatprep.subr.mxu0 0.0
    %153 = vmatpush1.msra.mxu0 0.0
    %154 = vmatprep.subr.mxu0 0.0
    %155 = vmatpush1.msra.mxu0 0.0
    %156 = vmatprep.subr.mxu0 0.0
    %157 = vmatpush1.msra.mxu0 0.0
    %158 = vmatprep.subr.mxu0 0.0
    %159 = vmatpush1.msra.mxu0 0.0
    %160 = vmatprep.subr.mxu0 0.0
    %161 = vmatpush1.msra.mxu0 0.0
    %162 = vmatprep.subr.mxu0 0.0
    %163 = vmatpush1.msra.mxu0 0.0
    %164 = vmatprep.subr.mxu0 0.0
    %165 = vmatpush1.msra.mxu0 0.0
    %166 = vmatprep.subr.mxu0 0.0
    %167 = vmatpush1.msra.mxu0 0.0
    %168 = vmatprep.subr.mxu0 0.0
    %169 = vmatpush1.msra.mxu0 0.0
    %170 = vmatprep.subr.mxu0 0.0
    %171 = vmatpush1.msra.mxu0 0.0
    %172 = vmatprep.subr.mxu0 0.0
    %173 = vmatpush1.msra.mxu0 0.0
    %174 = vmatprep.subr.mxu0 0.0
    %175 = vmatpush1.msra.mxu0 0.0
    %176 = vmatprep.subr.mxu0 0.0
    %177 = vmatpush1.msra.mxu0 0.0
    %178 = vmatprep.subr.mxu0 0.0
    %179 = vmatpush1.msra.mxu0 0.0
    %180 = vmatprep.subr.mxu0 0.0
    %181 = vmatpush1.msra.mxu0 0.0
    %182 = vmatprep.subr.mxu0 0.0
    %183 = vmatpush1.msra.mxu0 0.0
    %184 = vmatprep.subr.mxu0 0.0
    %185 = vmatpush1.msra.mxu0 0.0
    %186 = vmatprep.mubr.f32.mxu0 0.0
    %187 = vmatmul.mubr.f32.gmra.mrb[0].mxu0 %v90
    %v188 = vpop.f32.mrb[0].mxu0
    %v189 = vadd.f32 %v67, %v188
    %v190 = vpop.f32.mrb[0].mxu0
    %v191 = vadd.f32 %v71, %v190
    %192 = vmatprep.mubr.f32.mxu0 0.0
    %193 = vmatmul.mubr.f32.gmra.mrb[0].mxu0 %v93
    %v194 = vpop.f32.mrb[0].mxu0
    %v195 = vadd.f32 %v67, %v194
    %v196 = vpop.f32.mrb[0].mxu0
    %v197 = vadd.f32 %v71, %v196
    %198 = vmatprep.mubr.f32.mxu0 0.0
    %199 = vmatmul.mubr.f32.gmra.mrb[0].mxu0 %v96
    %v200 = vpop.f32.mrb[0].mxu0
    %v201 = vadd.f32 %v67, %v200
    %v202 = vpop.f32.mrb[0].mxu0
    %v203 = vadd.f32 %v71, %v202
    %204 = vmatprep.mubr.f32.mxu0 0.0
    %205 = vmatmul.mubr.f32.gmra.mrb[0].mxu0 %v99
    %v206 = vpop.f32.mrb[0].mxu0
    %v207 = vadd.f32 %v67, %v206
    %v208 = vpop.f32.mrb[0].mxu0
    %v209 = vadd.f32 %v71, %v208
    %210 = vmatprep.mubr.f32.mxu0 0.0
    %211 = vmatmul.mubr.f32.gmra.mrb[0].mxu0 %v102
    %v212 = vpop.f32.mrb[0].mxu0
    %v213 = vadd.f32 %v67, %v212
    %v214 = vpop.f32.mrb[0].mxu0
    %v215 = vadd.f32 %v71, %v214
    %216 = vmatprep.mubr.f32.mxu0 0.0
    %217 = vmatmul.mubr.f32.gmra.mrb[0].mxu0 %v105
    %v218 = vpop.f32.mrb[0].mxu0
    %v219 = vadd.f32 %v67, %v218
    %v220 = vpop.f32.mrb[0].mxu0
    %v221 = vadd.f32 %v71, %v220
    %222 = vmatprep.mubr.f32.mxu0 0.0
    %223 = vmatmul.mubr.f32.gmra.mrb[0].mxu0 %v108
    %v224 = vpop.f32.mrb[0].mxu0
    %v225 = vadd.f32 %v67, %v224
    %v226 = vpop.f32.mrb[0].mxu0
    %v227 = vadd.f32 %v71, %v226
    %228 = vmatprep.mubr.f32.mxu0 0.0
    %229 = vmatmul.mubr.f32.gmra.mrb[0].mxu0 %v111
    %v230 = vpop.f32.mrb[0].mxu0
    %v231 = vadd.f32 %v67, %v230
    %v232 = vpop.f32.mrb[0].mxu0
    %v233 = vadd.f32 %v71, %v232
    %234 = vdwg.mxu0
    %235 = vmatprep.subr.mxu0 %v120
    %236 = vmatpush1.msra.mxu0 %v118
    %237 = vmatprep.subr.mxu0 0.0
    %238 = vmatpush1.msra.mxu0 0.0
    %239 = vmatprep.subr.mxu0 0.0
    %240 = vmatpush1.msra.mxu0 0.0
    %241 = vmatprep.subr.mxu0 0.0
    %242 = vmatpush1.msra.mxu0 0.0
    %243 = vmatprep.subr.mxu0 0.0
    %244 = vmatpush1.msra.mxu0 0.0
    %245 = vmatprep.subr.mxu0 0.0
    %246 = vmatpush1.msra.mxu0 0.0
    %247 = vmatprep.subr.mxu0 0.0
    %248 = vmatpush1.msra.mxu0 0.0
    %249 = vmatprep.subr.mxu0 0.0
    %250 = vmatpush1.msra.mxu0 0.0
    %251 = vmatprep.subr.mxu0 0.0
    %252 = vmatpush1.msra.mxu0 0.0
    %253 = vmatprep.subr.mxu0 0.0
    %254 = vmatpush1.msra.mxu0 0.0
    %255 = vmatprep.subr.mxu0 0.0
    %256 = vmatpush1.msra.mxu0 0.0
    %257 = vmatprep.subr.mxu0 0.0
    %258 = vmatpush1.msra.mxu0 0.0
    %259 = vmatprep.subr.mxu0 0.0
    %260 = vmatpush1.msra.mxu0 0.0
    %261 = vmatprep.subr.mxu0 0.0
    %262 = vmatpush1.msra.mxu0 0.0
    %263 = vmatprep.subr.mxu0 0.0
    %264 = vmatpush1.msra.mxu0 0.0
    %265 = vmatprep.subr.mxu0 0.0
    %266 = vmatpush1.msra.mxu0 0.0
    %267 = vmatprep.subr.mxu0 0.0
    %268 = vmatpush1.msra.mxu0 0.0
    %269 = vmatprep.subr.mxu0 0.0
    %270 = vmatpush1.msra.mxu0 0.0
    %271 = vmatprep.subr.mxu0 0.0
    %272 = vmatpush1.msra.mxu0 0.0
    %273 = vmatprep.subr.mxu0 0.0
    %274 = vmatpush1.msra.mxu0 0.0
    %275 = vmatprep.subr.mxu0 0.0
    %276 = vmatpush1.msra.mxu0 0.0
    %277 = vmatprep.subr.mxu0 0.0
    %278 = vmatpush1.msra.mxu0 0.0
    %279 = vmatprep.subr.mxu0 0.0
    %280 = vmatpush1.msra.mxu0 0.0
    %281 = vmatprep.subr.mxu0 0.0
    %282 = vmatpush1.msra.mxu0 0.0
    %283 = vmatprep.subr.mxu0 0.0
    %284 = vmatpush1.msra.mxu0 0.0
    %285 = vmatprep.subr.mxu0 0.0
    %286 = vmatpush1.msra.mxu0 0.0
    %287 = vmatprep.subr.mxu0 0.0
    %288 = vmatpush1.msra.mxu0 0.0
    %289 = vmatprep.subr.mxu0 0.0
    %290 = vmatpush1.msra.mxu0 0.0
    %291 = vmatprep.subr.mxu0 0.0
    %292 = vmatpush1.msra.mxu0 0.0
    %293 = vmatprep.subr.mxu0 0.0
    %294 = vmatpush1.msra.mxu0 0.0
    %295 = vmatprep.subr.mxu0 0.0
    %296 = vmatpush1.msra.mxu0 0.0
    %297 = vmatprep.subr.mxu0 0.0
    %298 = vmatpush1.msra.mxu0 0.0
    %299 = vmatprep.mubr.f32.mxu0 0.0
    %300 = vmatmul.mubr.f32.gmra.mrb[0].mxu0 %v90
    %v301 = vpop.f32.mrb[0].mxu0
    %v302 = vadd.f32 %v75, %v301
    %v303 = vpop.f32.mrb[0].mxu0
    %v304 = vadd.f32 %v79, %v303
    %305 = vmatprep.mubr.f32.mxu0 0.0
    %306 = vmatmul.mubr.f32.gmra.mrb[0].mxu0 %v93
    %v307 = vpop.f32.mrb[0].mxu0
    %v308 = vadd.f32 %v75, %v307
    %v309 = vpop.f32.mrb[0].mxu0
    %v310 = vadd.f32 %v79, %v309
    %311 = vmatprep.mubr.f32.mxu0 0.0
    %312 = vmatmul.mubr.f32.gmra.mrb[0].mxu0 %v96
    %v313 = vpop.f32.mrb[0].mxu0
    %v314 = vadd.f32 %v75, %v313
    %v315 = vpop.f32.mrb[0].mxu0
    %v316 = vadd.f32 %v79, %v315
    %317 = vmatprep.mubr.f32.mxu0 0.0
    %318 = vmatmul.mubr.f32.gmra.mrb[0].mxu0 %v99
    %v319 = vpop.f32.mrb[0].mxu0
    %v320 = vadd.f32 %v75, %v319
    %v321 = vpop.f32.mrb[0].mxu0
    %v322 = vadd.f32 %v79, %v321
    %323 = vmatprep.mubr.f32.mxu0 0.0
    %324 = vmatmul.mubr.f32.gmra.mrb[0].mxu0 %v102
    %v325 = vpop.f32.mrb[0].mxu0
    %v326 = vadd.f32 %v75, %v325
    %v327 = vpop.f32.mrb[0].mxu0
    %v328 = vadd.f32 %v79, %v327
    %329 = vmatprep.mubr.f32.mxu0 0.0
    %330 = vmatmul.mubr.f32.gmra.mrb[0].mxu0 %v105
    %v331 = vpop.f32.mrb[0].mxu0
    %v332 = vadd.f32 %v75, %v331
    %v333 = vpop.f32.mrb[0].mxu0
    %v334 = vadd.f32 %v79, %v333
    %335 = vmatprep.mubr.f32.mxu0 0.0
    %336 = vmatmul.mubr.f32.gmra.mrb[0].mxu0 %v108
    %v337 = vpop.f32.mrb[0].mxu0
    %v338 = vadd.f32 %v75, %v337
    %v339 = vpop.f32.mrb[0].mxu0
    %v340 = vadd.f32 %v79, %v339
    %341 = vmatprep.mubr.f32.mxu0 0.0
    %342 = vmatmul.mubr.f32.gmra.mrb[0].mxu0 %v111
    %v343 = vpop.f32.mrb[0].mxu0
    %v344 = vadd.f32 %v75, %v343
    %v345 = vpop.f32.mrb[0].mxu0
    %v346 = vadd.f32 %v79, %v345
    %347 = vdwg.mxu0
    %348 = vst [vmem:[#allocation2] sm:$0xff] %v189
    %349 = vst [vmem:[#allocation2 + $0x8] sm:$0xff] %v191
    %350 = vst [vmem:[#allocation2 + $0x10] sm:$0xff] %v302
    %351 = vst [vmem:[#allocation2 + $0x18] sm:$0xff] %v304
    %352 = vst [vmem:[#allocation2 + $0x20] sm:$0xff] %v195
    %353 = vst [vmem:[#allocation2 + $0x28] sm:$0xff] %v197
    %354 = vst [vmem:[#allocation2 + $0x30] sm:$0xff] %v308
    %355 = vst [vmem:[#allocation2 + $0x38] sm:$0xff] %v310
    %356 = vst [vmem:[#allocation2 + $0x40] sm:$0xff] %v201
    %357 = vst [vmem:[#allocation2 + $0x48] sm:$0xff] %v203
    %358 = vst [vmem:[#allocation2 + $0x50] sm:$0xff] %v314
    %359 = vst [vmem:[#allocation2 + $0x58] sm:$0xff] %v316
    %360 = vst [vmem:[#allocation2 + $0x60] sm:$0xff] %v207
    %361 = vst [vmem:[#allocation2 + $0x68] sm:$0xff] %v209
    %362 = vst [vmem:[#allocation2 + $0x70] sm:$0xff] %v320
    %363 = vst [vmem:[#allocation2 + $0x78] sm:$0xff] %v322
    %364 = vst [vmem:[#allocation2 + $0x80] sm:$0xff] %v213
    %365 = vst [vmem:[#allocation2 + $0x88] sm:$0xff] %v215
    %366 = vst [vmem:[#allocation2 + $0x90] sm:$0xff] %v326
    %367 = vst [vmem:[#allocation2 + $0x98] sm:$0xff] %v328
    %368 = vst [vmem:[#allocation2 + $0xa0] sm:$0xff] %v219
    %369 = vst [vmem:[#allocation2 + $0xa8] sm:$0xff] %v221
    %370 = vst [vmem:[#allocation2 + $0xb0] sm:$0xff] %v332
    %371 = vst [vmem:[#allocation2 + $0xb8] sm:$0xff] %v334
    %372 = vst [vmem:[#allocation2 + $0xc0] sm:$0xff] %v225
    %373 = vst [vmem:[#allocation2 + $0xc8] sm:$0xff] %v227
    %374 = vst [vmem:[#allocation2 + $0xd0] sm:$0xff] %v338
    %375 = vst [vmem:[#allocation2 + $0xd8] sm:$0xff] %v340
    %376 = vst [vmem:[#allocation2 + $0xe0] sm:$0xff] %v231
    %377 = vst [vmem:[#allocation2 + $0xe8] sm:$0xff] %v233
    %378 = vst [vmem:[#allocation2 + $0xf0] sm:$0xff] %v344
    %379 = vst [vmem:[#allocation2 + $0xf8] sm:$0xff] %v346
    %v380 = vld [vmem:[#allocation2] sm:$0xff]
    %v381 = vld [vmem:[#allocation2 + $0x8] sm:$0xff]
    %v382 = vld [vmem:[#allocation2 + $0x10] sm:$0xff]
    %v383 = vld [vmem:[#allocation2 + $0x18] sm:$0xff]
    %v384 = vld [vmem:[#allocation4] sm:$0xff]
    %v385 = vld [vmem:[#allocation4 + $0x8] sm:$0xff]
    %v386 = vld [vmem:[#allocation4 + $0x10] sm:$0xff]
    %v387 = vld [vmem:[#allocation4 + $0x18] sm:$0xff]
    %v388 = vld [vmem:[#allocation4 + $0x20] sm:$0xff]
    %v389 = vld [vmem:[#allocation4 + $0x28] sm:$0xff]
    %v390 = vld [vmem:[#allocation4 + $0x30] sm:$0xff]
    %v391 = vld [vmem:[#allocation4 + $0x38] sm:$0xff]
    %v392 = vld [vmem:[#allocation4 + $0x40] sm:$0xff]
    %v393 = vld [vmem:[#allocation4 + $0x48] sm:$0xff]
    %v394 = vld [vmem:[#allocation4 + $0x50] sm:$0xff]
    %v395 = vld [vmem:[#allocation4 + $0x58] sm:$0xff]
    %v396 = vld [vmem:[#allocation4 + $0x60] sm:$0xff]
    %v397 = vld [vmem:[#allocation4 + $0x68] sm:$0xff]
    %v398 = vld [vmem:[#allocation4 + $0x70] sm:$0xff]
    %v399 = vld [vmem:[#allocation4 + $0x78] sm:$0xff]
    %v400 = vld [vmem:[#allocation4 + $0x80] sm:$0xff]
    %v401 = vld [vmem:[#allocation4 + $0x88] sm:$0xff]
    %v402 = vld [vmem:[#allocation4 + $0x90] sm:$0xff]
    %v403 = vld [vmem:[#allocation4 + $0x98] sm:$0xff]
    %v404 = vld [vmem:[#allocation4 + $0xa0] sm:$0xff]
    %v405 = vld [vmem:[#allocation4 + $0xa8] sm:$0xff]
    %v406 = vld [vmem:[#allocation4 + $0xb0] sm:$0xff]
    %v407 = vld [vmem:[#allocation4 + $0xb8] sm:$0xff]
    %v408 = vld [vmem:[#allocation4 + $0xc0] sm:$0xff]
    %v409 = vld [vmem:[#allocation4 + $0xc8] sm:$0xff]
    %v410 = vld [vmem:[#allocation4 + $0xd0] sm:$0xff]
    %v411 = vld [vmem:[#allocation4 + $0xd8] sm:$0xff]
    %v412 = vld [vmem:[#allocation4 + $0xe0] sm:$0xff]
    %v413 = vld [vmem:[#allocation4 + $0xe8] sm:$0xff]
    %v414 = vld [vmem:[#allocation4 + $0xf0] sm:$0xff]
    %v415 = vld [vmem:[#allocation4 + $0xf8] sm:$0xff]
    %v416 = vld [vmem:[#allocation4 + $0x100] sm:$0xff]
    %v417 = vld [vmem:[#allocation4 + $0x108] sm:$0xff]
    %v418 = vld [vmem:[#allocation4 + $0x110] sm:$0xff]
    %v419 = vld [vmem:[#allocation4 + $0x118] sm:$0xff]
    %v420 = vld [vmem:[#allocation4 + $0x120] sm:$0xff]
    %v421 = vld [vmem:[#allocation4 + $0x128] sm:$0xff]
    %v422 = vld [vmem:[#allocation4 + $0x130] sm:$0xff]
    %v423 = vld [vmem:[#allocation4 + $0x138] sm:$0xff]
    %v424 = vld [vmem:[#allocation4 + $0x140] sm:$0xff]
    %v425 = vld [vmem:[#allocation4 + $0x148] sm:$0xff]
    %v426 = vld [vmem:[#allocation4 + $0x150] sm:$0xff]
    %v427 = vld [vmem:[#allocation4 + $0x158] sm:$0xff]
    %v428 = vld [vmem:[#allocation4 + $0x160] sm:$0xff]
    %v429 = vld [vmem:[#allocation4 + $0x168] sm:$0xff]
    %v430 = vld [vmem:[#allocation4 + $0x170] sm:$0xff]
    %v431 = vld [vmem:[#allocation4 + $0x178] sm:$0xff]
    %v432 = vld [vmem:[#allocation4 + $0x180] sm:$0xff]
    %v433 = vld [vmem:[#allocation4 + $0x188] sm:$0xff]
    %v434 = vld [vmem:[#allocation4 + $0x190] sm:$0xff]
    %v435 = vld [vmem:[#allocation4 + $0x198] sm:$0xff]
    %v436 = vld [vmem:[#allocation4 + $0x1a0] sm:$0xff]
    %v437 = vld [vmem:[#allocation4 + $0x1a8] sm:$0xff]
    %v438 = vld [vmem:[#allocation4 + $0x1b0] sm:$0xff]
    %v439 = vld [vmem:[#allocation4 + $0x1b8] sm:$0xff]
    %v440 = vld [vmem:[#allocation4 + $0x1c0] sm:$0xff]
    %v441 = vld [vmem:[#allocation4 + $0x1c8] sm:$0xff]
    %v442 = vld [vmem:[#allocation4 + $0x1d0] sm:$0xff]
    %v443 = vld [vmem:[#allocation4 + $0x1d8] sm:$0xff]
    %v444 = vld [vmem:[#allocation4 + $0x1e0] sm:$0xff]
    %v445 = vld [vmem:[#allocation4 + $0x1e8] sm:$0xff]
    %v446 = vld [vmem:[#allocation4 + $0x1f0] sm:$0xff]
    %v447 = vld [vmem:[#allocation4 + $0x1f8] sm:$0xff]
    %448 = vmatprep.subr.mxu0 %v385
    %449 = vmatpush1.msra.mxu0 %v384
    %450 = vmatprep.subr.mxu0 %v389
    %451 = vmatpush1.msra.mxu0 %v388
    %452 = vmatprep.subr.mxu0 %v393
    %453 = vmatpush1.msra.mxu0 %v392
    %454 = vmatprep.subr.mxu0 %v397
    %455 = vmatpush1.msra.mxu0 %v396
    %456 = vmatprep.subr.mxu0 %v401
    %457 = vmatpush1.msra.mxu0 %v400
    %458 = vmatprep.subr.mxu0 %v405
    %459 = vmatpush1.msra.mxu0 %v404
    %460 = vmatprep.subr.mxu0 %v409
    %461 = vmatpush1.msra.mxu0 %v408
    %462 = vmatprep.subr.mxu0 %v413
    %463 = vmatpush1.msra.mxu0 %v412
    %464 = vmatprep.subr.mxu0 %v417
    %465 = vmatpush1.msra.mxu0 %v416
    %466 = vmatprep.subr.mxu0 %v421
    %467 = vmatpush1.msra.mxu0 %v420
    %468 = vmatprep.subr.mxu0 %v425
    %469 = vmatpush1.msra.mxu0 %v424
    %470 = vmatprep.subr.mxu0 %v429
    %471 = vmatpush1.msra.mxu0 %v428
    %472 = vmatprep.subr.mxu0 %v433
    %473 = vmatpush1.msra.mxu0 %v432
    %474 = vmatprep.subr.mxu0 %v437
    %475 = vmatpush1.msra.mxu0 %v436
    %476 = vmatprep.subr.mxu0 %v441
    %477 = vmatpush1.msra.mxu0 %v440
    %478 = vmatprep.subr.mxu0 %v445
    %479 = vmatpush1.msra.mxu0 %v444
    %480 = vmatprep.subr.mxu0 0.0
    %481 = vmatpush1.msra.mxu0 0.0
    %482 = vmatprep.subr.mxu0 0.0
    %483 = vmatpush1.msra.mxu0 0.0
    %484 = vmatprep.subr.mxu0 0.0
    %485 = vmatpush1.msra.mxu0 0.0
    %486 = vmatprep.subr.mxu0 0.0
    %487 = vmatpush1.msra.mxu0 0.0
    %488 = vmatprep.subr.mxu0 0.0
    %489 = vmatpush1.msra.mxu0 0.0
    %490 = vmatprep.subr.mxu0 0.0
    %491 = vmatpush1.msra.mxu0 0.0
    %492 = vmatprep.subr.mxu0 0.0
    %493 = vmatpush1.msra.mxu0 0.0
    %494 = vmatprep.subr.mxu0 0.0
    %495 = vmatpush1.msra.mxu0 0.0
    %496 = vmatprep.subr.mxu0 0.0
    %497 = vmatpush1.msra.mxu0 0.0
    %498 = vmatprep.subr.mxu0 0.0
    %499 = vmatpush1.msra.mxu0 0.0
    %500 = vmatprep.subr.mxu0 0.0
    %501 = vmatpush1.msra.mxu0 0.0
    %502 = vmatprep.subr.mxu0 0.0
    %503 = vmatpush1.msra.mxu0 0.0
    %504 = vmatprep.subr.mxu0 0.0
    %505 = vmatpush1.msra.mxu0 0.0
    %506 = vmatprep.subr.mxu0 0.0
    %507 = vmatpush1.msra.mxu0 0.0
    %508 = vmatprep.subr.mxu0 0.0
    %509 = vmatpush1.msra.mxu0 0.0
    %510 = vmatprep.subr.mxu0 0.0
    %511 = vmatpush1.msra.mxu0 0.0
    %512 = vmatprep.mubr.f32.mxu0 0.0
    %513 = vmatmul.mubr.f32.gmra.mrb[0].mxu0 0.0
    %v514 = vpop.f32.mrb[0].mxu0
    %v515 = vadd.f32 0.0, %v514
    %v516 = vpop.f32.mrb[0].mxu0
    %v517 = vadd.f32 0.0, %v516
    %518 = vdwg.mxu0
    %519 = vmatprep.subr.mxu0 %v387
    %520 = vmatpush1.msra.mxu0 %v386
    %521 = vmatprep.subr.mxu0 %v391
    %522 = vmatpush1.msra.mxu0 %v390
    %523 = vmatprep.subr.mxu0 %v395
    %524 = vmatpush1.msra.mxu0 %v394
    %525 = vmatprep.subr.mxu0 %v399
    %526 = vmatpush1.msra.mxu0 %v398
    %527 = vmatprep.subr.mxu0 %v403
    %528 = vmatpush1.msra.mxu0 %v402
    %529 = vmatprep.subr.mxu0 %v407
    %530 = vmatpush1.msra.mxu0 %v406
    %531 = vmatprep.subr.mxu0 %v411
    %532 = vmatpush1.msra.mxu0 %v410
    %533 = vmatprep.subr.mxu0 %v415
    %534 = vmatpush1.msra.mxu0 %v414
    %535 = vmatprep.subr.mxu0 %v419
    %536 = vmatpush1.msra.mxu0 %v418
    %537 = vmatprep.subr.mxu0 %v423
    %538 = vmatpush1.msra.mxu0 %v422
    %539 = vmatprep.subr.mxu0 %v427
    %540 = vmatpush1.msra.mxu0 %v426
    %541 = vmatprep.subr.mxu0 %v431
    %542 = vmatpush1.msra.mxu0 %v430
    %543 = vmatprep.subr.mxu0 %v435
    %544 = vmatpush1.msra.mxu0 %v434
    %545 = vmatprep.subr.mxu0 %v439
    %546 = vmatpush1.msra.mxu0 %v438
    %547 = vmatprep.subr.mxu0 %v443
    %548 = vmatpush1.msra.mxu0 %v442
    %549 = vmatprep.subr.mxu0 %v447
    %550 = vmatpush1.msra.mxu0 %v446
    %551 = vmatprep.subr.mxu0 0.0
    %552 = vmatpush1.msra.mxu0 0.0
    %553 = vmatprep.subr.mxu0 0.0
    %554 = vmatpush1.msra.mxu0 0.0
    %555 = vmatprep.subr.mxu0 0.0
    %556 = vmatpush1.msra.mxu0 0.0
    %557 = vmatprep.subr.mxu0 0.0
    %558 = vmatpush1.msra.mxu0 0.0
    %559 = vmatprep.subr.mxu0 0.0
    %560 = vmatpush1.msra.mxu0 0.0
    %561 = vmatprep.subr.mxu0 0.0
    %562 = vmatpush1.msra.mxu0 0.0
    %563 = vmatprep.subr.mxu0 0.0
    %564 = vmatpush1.msra.mxu0 0.0
    %565 = vmatprep.subr.mxu0 0.0
    %566 = vmatpush1.msra.mxu0 0.0
    %567 = vmatprep.subr.mxu0 0.0
    %568 = vmatpush1.msra.mxu0 0.0
    %569 = vmatprep.subr.mxu0 0.0
    %570 = vmatpush1.msra.mxu0 0.0
    %571 = vmatprep.subr.mxu0 0.0
    %572 = vmatpush1.msra.mxu0 0.0
    %573 = vmatprep.subr.mxu0 0.0
    %574 = vmatpush1.msra.mxu0 0.0
    %575 = vmatprep.subr.mxu0 0.0
    %576 = vmatpush1.msra.mxu0 0.0
    %577 = vmatprep.subr.mxu0 0.0
    %578 = vmatpush1.msra.mxu0 0.0
    %579 = vmatprep.subr.mxu0 0.0
    %580 = vmatpush1.msra.mxu0 0.0
    %581 = vmatprep.subr.mxu0 0.0
    %582 = vmatpush1.msra.mxu0 0.0
    %583 = vmatprep.mubr.f32.mxu0 0.0
    %584 = vmatmul.mubr.f32.gmra.mrb[0].mxu0 0.0
    %v585 = vpop.f32.mrb[0].mxu0
    %v586 = vadd.f32 0.0, %v585
    %v587 = vpop.f32.mrb[0].mxu0
    %v588 = vadd.f32 0.0, %v587
    %589 = vdwg.mxu0
    %v590 = vadd.f32 %v380, %v515
    %v591 = vadd.f32 %v381, %v517
    %v592 = vadd.f32 %v382, %v586
    %v593 = vadd.f32 %v383, %v588
    %v594 = vxor.u32 %v590, 2147483648
    %v595 = vmul.f32 %v594, 1.442695
    %v596 = vpow.pop %v595
    %v597 = vadd.f32 %v596, 1.0
    %v598 = vrcp.pop %v597
    %v599 = vmul.f32 1.0, %v598
    %v600 = vxor.u32 %v591, 2147483648
    %v601 = vmul.f32 %v600, 1.442695
    %v602 = vpow.pop %v601
    %v603 = vadd.f32 %v602, 1.0
    %v604 = vrcp.pop %v603
    %v605 = vmul.f32 1.0, %v604
    %v606 = vtanh.pop %v592
    %v607 = vxor.u32 %v593, 2147483648
    %v608 = vmul.f32 %v607, 1.442695
    %v609 = vpow.pop %v608
    %v610 = vadd.f32 %v609, 1.0
    %v611 = vrcp.pop %v610
    %v612 = vmul.f32 1.0, %v611
    %v613 = vmul.f32 %v605, 0.0
    %v614 = vmul.f32 %v599, %v606
    %v615 = vadd.f32 %v613, %v614
    %v616 = vtanh.pop %v615
    %v617 = vmul.f32 %v612, %v616
    %618 = vst [vmem:[#allocation3] sm:$0xff] %v617
    %v619 = vld [vmem:[#allocation2 + $0x20] sm:$0xff]
    %v620 = vld [vmem:[#allocation2 + $0x28] sm:$0xff]
    %v621 = vld [vmem:[#allocation2 + $0x30] sm:$0xff]
    %v622 = vld [vmem:[#allocation2 + $0x38] sm:$0xff]
    %v623 = vld [vmem:[#allocation4] sm:$0xff]
    %v624 = vld [vmem:[#allocation4 + $0x8] sm:$0xff]
    %v625 = vld [vmem:[#allocation4 + $0x10] sm:$0xff]
    %v626 = vld [vmem:[#allocation4 + $0x18] sm:$0xff]
    %v627 = vld [vmem:[#allocation4 + $0x20] sm:$0xff]
    %v628 = vld [vmem:[#allocation4 + $0x28] sm:$0xff]
    %v629 = vld [vmem:[#allocation4 + $0x30] sm:$0xff]
    %v630 = vld [vmem:[#allocation4 + $0x38] sm:$0xff]
    %v631 = vld [vmem:[#allocation4 + $0x40] sm:$0xff]
    %v632 = vld [vmem:[#allocation4 + $0x48] sm:$0xff]
    %v633 = vld [vmem:[#allocation4 + $0x50] sm:$0xff]
    %v634 = vld [vmem:[#allocation4 + $0x58] sm:$0xff]
    %v635 = vld [vmem:[#allocation4 + $0x60] sm:$0xff]
    %v636 = vld [vmem:[#allocation4 + $0x68] sm:$0xff]
    %v637 = vld [vmem:[#allocation4 + $0x70] sm:$0xff]
    %v638 = vld [vmem:[#allocation4 + $0x78] sm:$0xff]
    %v639 = vld [vmem:[#allocation4 + $0x80] sm:$0xff]
    %v640 = vld [vmem:[#allocation4 + $0x88] sm:$0xff]
    %v641 = vld [vmem:[#allocation4 + $0x90] sm:$0xff]
    %v642 = vld [vmem:[#allocation4 + $0x98] sm:$0xff]
    %v643 = vld [vmem:[#allocation4 + $0xa0] sm:$0xff]
    %v644 = vld [vmem:[#allocation4 + $0xa8] sm:$0xff]
    %v645 = vld [vmem:[#allocation4 + $0xb0] sm:$0xff]
    %v646 = vld [vmem:[#allocation4 + $0xb8] sm:$0xff]
    %v647 = vld [vmem:[#allocation4 + $0xc0] sm:$0xff]
    %v648 = vld [vmem:[#allocation4 + $0xc8] sm:$0xff]
    %v649 = vld [vmem:[#allocation4 + $0xd0] sm:$0xff]
    %v650 = vld [vmem:[#allocation4 + $0xd8] sm:$0xff]
    %v651 = vld [vmem:[#allocation4 + $0xe0] sm:$0xff]
    %v652 = vld [vmem:[#allocation4 + $0xe8] sm:$0xff]
    %v653 = vld [vmem:[#allocation4 + $0xf0] sm:$0xff]
    %v654 = vld [vmem:[#allocation4 + $0xf8] sm:$0xff]
    %v655 = vld [vmem:[#allocation4 + $0x100] sm:$0xff]
    %v656 = vld [vmem:[#allocation4 + $0x108] sm:$0xff]
    %v657 = vld [vmem:[#allocation4 + $0x110] sm:$0xff]
    %v658 = vld [vmem:[#allocation4 + $0x118] sm:$0xff]
    %v659 = vld [vmem:[#allocation4 + $0x120] sm:$0xff]
    %v660 = vld [vmem:[#allocation4 + $0x128] sm:$0xff]
    %v661 = vld [vmem:[#allocation4 + $0x130] sm:$0xff]
    %v662 = vld [vmem:[#allocation4 + $0x138] sm:$0xff]
    %v663 = vld [vmem:[#allocation4 + $0x140] sm:$0xff]
    %v664 = vld [vmem:[#allocation4 + $0x148] sm:$0xff]
    %v665 = vld [vmem:[#allocation4 + $0x150] sm:$0xff]
    %v666 = vld [vmem:[#allocation4 + $0x158] sm:$0xff]
    %v667 = vld [vmem:[#allocation4 + $0x160] sm:$0xff]
    %v668 = vld [vmem:[#allocation4 + $0x168] sm:$0xff]
    %v669 = vld [vmem:[#allocation4 + $0x170] sm:$0xff]
    %v670 = vld [vmem:[#allocation4 + $0x178] sm:$0xff]
    %v671 = vld [vmem:[#allocation4 + $0x180] sm:$0xff]
    %v672 = vld [vmem:[#allocation4 + $0x188] sm:$0xff]
    %v673 = vld [vmem:[#allocation4 + $0x190] sm:$0xff]
    %v674 = vld [vmem:[#allocation4 + $0x198] sm:$0xff]
    %v675 = vld [vmem:[#allocation4 + $0x1a0] sm:$0xff]
    %v676 = vld [vmem:[#allocation4 + $0x1a8] sm:$0xff]
    %v677 = vld [vmem:[#allocation4 + $0x1b0] sm:$0xff]
    %v678 = vld [vmem:[#allocation4 + $0x1b8] sm:$0xff]
    %v679 = vld [vmem:[#allocation4 + $0x1c0] sm:$0xff]
    %v680 = vld [vmem:[#allocation4 + $0x1c8] sm:$0xff]
    %v681 = vld [vmem:[#allocation4 + $0x1d0] sm:$0xff]
    %v682 = vld [vmem:[#allocation4 + $0x1d8] sm:$0xff]
    %v683 = vld [vmem:[#allocation4 + $0x1e0] sm:$0xff]
    %v684 = vld [vmem:[#allocation4 + $0x1e8] sm:$0xff]
    %v685 = vld [vmem:[#allocation4 + $0x1f0] sm:$0xff]
    %v686 = vld [vmem:[#allocation4 + $0x1f8] sm:$0xff]
    %687 = vmatprep.subr.mxu0 %v624
    %688 = vmatpush1.msra.mxu0 %v623
    %689 = vmatprep.subr.mxu0 %v628
    %690 = vmatpush1.msra.mxu0 %v627
    %691 = vmatprep.subr.mxu0 %v632
    %692 = vmatpush1.msra.mxu0 %v631
    %693 = vmatprep.subr.mxu0 %v636
    %694 = vmatpush1.msra.mxu0 %v635
    %695 = vmatprep.subr.mxu0 %v640
    %696 = vmatpush1.msra.mxu0 %v639
    %697 = vmatprep.subr.mxu0 %v644
    %698 = vmatpush1.msra.mxu0 %v643
    %699 = vmatprep.subr.mxu0 %v648
    %700 = vmatpush1.msra.mxu0 %v647
    %701 = vmatprep.subr.mxu0 %v652
    %702 = vmatpush1.msra.mxu0 %v651
    %703 = vmatprep.subr.mxu0 %v656
    %704 = vmatpush1.msra.mxu0 %v655
    %705 = vmatprep.subr.mxu0 %v660
    %706 = vmatpush1.msra.mxu0 %v659
    %707 = vmatprep.subr.mxu0 %v664
    %708 = vmatpush1.msra.mxu0 %v663
    %709 = vmatprep.subr.mxu0 %v668
    %710 = vmatpush1.msra.mxu0 %v667
    %711 = vmatprep.subr.mxu0 %v672
    %712 = vmatpush1.msra.mxu0 %v671
    %713 = vmatprep.subr.mxu0 %v676
    %714 = vmatpush1.msra.mxu0 %v675
    %715 = vmatprep.subr.mxu0 %v680
    %716 = vmatpush1.msra.mxu0 %v679
    %717 = vmatprep.subr.mxu0 %v684
    %718 = vmatpush1.msra.mxu0 %v683
    %719 = vmatprep.subr.mxu0 0.0
    %720 = vmatpush1.msra.mxu0 0.0
    %721 = vmatprep.subr.mxu0 0.0
    %722 = vmatpush1.msra.mxu0 0.0
    %723 = vmatprep.subr.mxu0 0.0
    %724 = vmatpush1.msra.mxu0 0.0
    %725 = vmatprep.subr.mxu0 0.0
    %726 = vmatpush1.msra.mxu0 0.0
    %727 = vmatprep.subr.mxu0 0.0
    %728 = vmatpush1.msra.mxu0 0.0
    %729 = vmatprep.subr.mxu0 0.0
    %730 = vmatpush1.msra.mxu0 0.0
    %731 = vmatprep.subr.mxu0 0.0
    %732 = vmatpush1.msra.mxu0 0.0
    %733 = vmatprep.subr.mxu0 0.0
    %734 = vmatpush1.msra.mxu0 0.0
    %735 = vmatprep.subr.mxu0 0.0
    %736 = vmatpush1.msra.mxu0 0.0
    %737 = vmatprep.subr.mxu0 0.0
    %738 = vmatpush1.msra.mxu0 0.0
    %739 = vmatprep.subr.mxu0 0.0
    %740 = vmatpush1.msra.mxu0 0.0
    %741 = vmatprep.subr.mxu0 0.0
    %742 = vmatpush1.msra.mxu0 0.0
    %743 = vmatprep.subr.mxu0 0.0
    %744 = vmatpush1.msra.mxu0 0.0
    %745 = vmatprep.subr.mxu0 0.0
    %746 = vmatpush1.msra.mxu0 0.0
    %747 = vmatprep.subr.mxu0 0.0
    %748 = vmatpush1.msra.mxu0 0.0
    %749 = vmatprep.subr.mxu0 0.0
    %750 = vmatpush1.msra.mxu0 0.0
    %751 = vmatprep.mubr.f32.mxu0 0.0
    %752 = vmatmul.mubr.f32.gmra.mrb[0].mxu0 %v617
    %v753 = vpop.f32.mrb[0].mxu0
    %v754 = vadd.f32 0.0, %v753
    %v755 = vpop.f32.mrb[0].mxu0
    %v756 = vadd.f32 0.0, %v755
    %757 = vdwg.mxu0
    %758 = vmatprep.subr.mxu0 %v626
    %759 = vmatpush1.msra.mxu0 %v625
    %760 = vmatprep.subr.mxu0 %v630
    %761 = vmatpush1.msra.mxu0 %v629
    %762 = vmatprep.subr.mxu0 %v634
    %763 = vmatpush1.msra.mxu0 %v633
    %764 = vmatprep.subr.mxu0 %v638
    %765 = vmatpush1.msra.mxu0 %v637
    %766 = vmatprep.subr.mxu0 %v642
    %767 = vmatpush1.msra.mxu0 %v641
    %768 = vmatprep.subr.mxu0 %v646
    %769 = vmatpush1.msra.mxu0 %v645
    %770 = vmatprep.subr.mxu0 %v650
    %771 = vmatpush1.msra.mxu0 %v649
    %772 = vmatprep.subr.mxu0 %v654
    %773 = vmatpush1.msra.mxu0 %v653
    %774 = vmatprep.subr.mxu0 %v658
    %775 = vmatpush1.msra.mxu0 %v657
    %776 = vmatprep.subr.mxu0 %v662
    %777 = vmatpush1.msra.mxu0 %v661
    %778 = vmatprep.subr.mxu0 %v666
    %779 = vmatpush1.msra.mxu0 %v665
    %780 = vmatprep.subr.mxu0 %v670
    %781 = vmatpush1.msra.mxu0 %v669
    %782 = vmatprep.subr.mxu0 %v674
    %783 = vmatpush1.msra.mxu0 %v673
    %784 = vmatprep.subr.mxu0 %v678
    %785 = vmatpush1.msra.mxu0 %v677
    %786 = vmatprep.subr.mxu0 %v682
    %787 = vmatpush1.msra.mxu0 %v681
    %788 = vmatprep.subr.mxu0 %v686
    %789 = vmatpush1.msra.mxu0 %v685
    %790 = vmatprep.subr.mxu0 0.0
    %791 = vmatpush1.msra.mxu0 0.0
    %792 = vmatprep.subr.mxu0 0.0
    %793 = vmatpush1.msra.mxu0 0.0
    %794 = vmatprep.subr.mxu0 0.0
    %795 = vmatpush1.msra.mxu0 0.0
    %796 = vmatprep.subr.mxu0 0.0
    %797 = vmatpush1.msra.mxu0 0.0
    %798 = vmatprep.subr.mxu0 0.0
    %799 = vmatpush1.msra.mxu0 0.0
    %800 = vmatprep.subr.mxu0 0.0
    %801 = vmatpush1.msra.mxu0 0.0
    %802 = vmatprep.subr.mxu0 0.0
    %803 = vmatpush1.msra.mxu0 0.0
    %804 = vmatprep.subr.mxu0 0.0
    %805 = vmatpush1.msra.mxu0 0.0
    %806 = vmatprep.subr.mxu0 0.0
    %807 = vmatpush1.msra.mxu0 0.0
    %808 = vmatprep.subr.mxu0 0.0
    %809 = vmatpush1.msra.mxu0 0.0
    %810 = vmatprep.subr.mxu0 0.0
    %811 = vmatpush1.msra.mxu0 0.0
    %812 = vmatprep.subr.mxu0 0.0
    %813 = vmatpush1.msra.mxu0 0.0
    %814 = vmatprep.subr.mxu0 0.0
    %815 = vmatpush1.msra.mxu0 0.0
    %816 = vmatprep.subr.mxu0 0.0
    %817 = vmatpush1.msra.mxu0 0.0
    %818 = vmatprep.subr.mxu0 0.0
    %819 = vmatpush1.msra.mxu0 0.0
    %820 = vmatprep.subr.mxu0 0.0
    %821 = vmatpush1.msra.mxu0 0.0
    %822 = vmatprep.mubr.f32.mxu0 0.0
    %823 = vmatmul.mubr.f32.gmra.mrb[0].mxu0 %v617
    %v824 = vpop.f32.mrb[0].mxu0
    %v825 = vadd.f32 0.0, %v824
    %v826 = vpop.f32.mrb[0].mxu0
    %v827 = vadd.f32 0.0, %v826
    %828 = vdwg.mxu0
    %v829 = vadd.f32 %v619, %v754
    %v830 = vadd.f32 %v620, %v756
    %v831 = vadd.f32 %v621, %v825
    %v832 = vadd.f32 %v622, %v827
    %v833 = vxor.u32 %v829, 2147483648
    %v834 = vmul.f32 %v833, 1.442695
    %v835 = vpow.pop %v834
    %v836 = vadd.f32 %v835, 1.0
    %v837 = vrcp.pop %v836
    %v838 = vmul.f32 1.0, %v837
    %v839 = vxor.u32 %v830, 2147483648
    %v840 = vmul.f32 %v839, 1.442695
    %v841 = vpow.pop %v840
    %v842 = vadd.f32 %v841, 1.0
    %v843 = vrcp.pop %v842
    %v844 = vmul.f32 1.0, %v843
    %v845 = vtanh.pop %v831
    %v846 = vxor.u32 %v832, 2147483648
    %v847 = vmul.f32 %v846, 1.442695
    %v848 = vpow.pop %v847
    %v849 = vadd.f32 %v848, 1.0
    %v850 = vrcp.pop %v849
    %v851 = vmul.f32 1.0, %v850
    %v852 = vmul.f32 %v844, %v615
    %v853 = vmul.f32 %v838, %v845
    %v854 = vadd.f32 %v852, %v853
    %v855 = vtanh.pop %v854
    %v856 = vmul.f32 %v851, %v855
    %857 = vst [vmem:[#allocation3 + $0x8] sm:$0xff] %v856
    %v858 = vld [vmem:[#allocation2 + $0x40] sm:$0xff]
    %v859 = vld [vmem:[#allocation2 + $0x48] sm:$0xff]
    %v860 = vld [vmem:[#allocation2 + $0x50] sm:$0xff]
    %v861 = vld [vmem:[#allocation2 + $0x58] sm:$0xff]
    %v862 = vld [vmem:[#allocation4] sm:$0xff]
    %v863 = vld [vmem:[#allocation4 + $0x8] sm:$0xff]
    %v864 = vld [vmem:[#allocation4 + $0x10] sm:$0xff]
    %v865 = vld [vmem:[#allocation4 + $0x18] sm:$0xff]
    %v866 = vld [vmem:[#allocation4 + $0x20] sm:$0xff]
    %v867 = vld [vmem:[#allocation4 + $0x28] sm:$0xff]
    %v868 = vld [vmem:[#allocation4 + $0x30] sm:$0xff]
    %v869 = vld [vmem:[#allocation4 + $0x38] sm:$0xff]
    %v870 = vld [vmem:[#allocation4 + $0x40] sm:$0xff]
    %v871 = vld [vmem:[#allocation4 + $0x48] sm:$0xff]
    %v872 = vld [vmem:[#allocation4 + $0x50] sm:$0xff]
    %v873 = vld [vmem:[#allocation4 + $0x58] sm:$0xff]
    %v874 = vld [vmem:[#allocation4 + $0x60] sm:$0xff]
    %v875 = vld [vmem:[#allocation4 + $0x68] sm:$0xff]
    %v876 = vld [vmem:[#allocation4 + $0x70] sm:$0xff]
    %v877 = vld [vmem:[#allocation4 + $0x78] sm:$0xff]
    %v878 = vld [vmem:[#allocation4 + $0x80] sm:$0xff]
    %v879 = vld [vmem:[#allocation4 + $0x88] sm:$0xff]
    %v880 = vld [vmem:[#allocation4 + $0x90] sm:$0xff]
    %v881 = vld [vmem:[#allocation4 + $0x98] sm:$0xff]
    %v882 = vld [vmem:[#allocation4 + $0xa0] sm:$0xff]
    %v883 = vld [vmem:[#allocation4 + $0xa8] sm:$0xff]
    %v884 = vld [vmem:[#allocation4 + $0xb0] sm:$0xff]
    %v885 = vld [vmem:[#allocation4 + $0xb8] sm:$0xff]
    %v886 = vld [vmem:[#allocation4 + $0xc0] sm:$0xff]
    %v887 = vld [vmem:[#allocation4 + $0xc8] sm:$0xff]
    %v888 = vld [vmem:[#allocation4 + $0xd0] sm:$0xff]
    %v889 = vld [vmem:[#allocation4 + $0xd8] sm:$0xff]
    %v890 = vld [vmem:[#allocation4 + $0xe0] sm:$0xff]
    %v891 = vld [vmem:[#allocation4 + $0xe8] sm:$0xff]
    %v892 = vld [vmem:[#allocation4 + $0xf0] sm:$0xff]
    %v893 = vld [vmem:[#allocation4 + $0xf8] sm:$0xff]
    %v894 = vld [vmem:[#allocation4 + $0x100] sm:$0xff]
    %v895 = vld [vmem:[#allocation4 + $0x108] sm:$0xff]
    %v896 = vld [vmem:[#allocation4 + $0x110] sm:$0xff]
    %v897 = vld [vmem:[#allocation4 + $0x118] sm:$0xff]
    %v898 = vld [vmem:[#allocation4 + $0x120] sm:$0xff]
    %v899 = vld [vmem:[#allocation4 + $0x128] sm:$0xff]
    %v900 = vld [vmem:[#allocation4 + $0x130] sm:$0xff]
    %v901 = vld [vmem:[#allocation4 + $0x138] sm:$0xff]
    %v902 = vld [vmem:[#allocation4 + $0x140] sm:$0xff]
    %v903 = vld [vmem:[#allocation4 + $0x148] sm:$0xff]
    %v904 = vld [vmem:[#allocation4 + $0x150] sm:$0xff]
    %v905 = vld [vmem:[#allocation4 + $0x158] sm:$0xff]
    %v906 = vld [vmem:[#allocation4 + $0x160] sm:$0xff]
    %v907 = vld [vmem:[#allocation4 + $0x168] sm:$0xff]
    %v908 = vld [vmem:[#allocation4 + $0x170] sm:$0xff]
    %v909 = vld [vmem:[#allocation4 + $0x178] sm:$0xff]
    %v910 = vld [vmem:[#allocation4 + $0x180] sm:$0xff]
    %v911 = vld [vmem:[#allocation4 + $0x188] sm:$0xff]
    %v912 = vld [vmem:[#allocation4 + $0x190] sm:$0xff]
    %v913 = vld [vmem:[#allocation4 + $0x198] sm:$0xff]
    %v914 = vld [vmem:[#allocation4 + $0x1a0] sm:$0xff]
    %v915 = vld [vmem:[#allocation4 + $0x1a8] sm:$0xff]
    %v916 = vld [vmem:[#allocation4 + $0x1b0] sm:$0xff]
    %v917 = vld [vmem:[#allocation4 + $0x1b8] sm:$0xff]
    %v918 = vld [vmem:[#allocation4 + $0x1c0] sm:$0xff]
    %v919 = vld [vmem:[#allocation4 + $0x1c8] sm:$0xff]
    %v920 = vld [vmem:[#allocation4 + $0x1d0] sm:$0xff]
    %v921 = vld [vmem:[#allocation4 + $0x1d8] sm:$0xff]
    %v922 = vld [vmem:[#allocation4 + $0x1e0] sm:$0xff]
    %v923 = vld [vmem:[#allocation4 + $0x1e8] sm:$0xff]
    %v924 = vld [vmem:[#allocation4 + $0x1f0] sm:$0xff]
    %v925 = vld [vmem:[#allocation4 + $0x1f8] sm:$0xff]
    %926 = vmatprep.subr.mxu0 %v863
    %927 = vmatpush1.msra.mxu0 %v862
    %928 = vmatprep.subr.mxu0 %v867
    %929 = vmatpush1.msra.mxu0 %v866
    %930 = vmatprep.subr.mxu0 %v871
    %931 = vmatpush1.msra.mxu0 %v870
    %932 = vmatprep.subr.mxu0 %v875
    %933 = vmatpush1.msra.mxu0 %v874
    %934 = vmatprep.subr.mxu0 %v879
    %935 = vmatpush1.msra.mxu0 %v878
    %936 = vmatprep.subr.mxu0 %v883
    %937 = vmatpush1.msra.mxu0 %v882
    %938 = vmatprep.subr.mxu0 %v887
    %939 = vmatpush1.msra.mxu0 %v886
    %940 = vmatprep.subr.mxu0 %v891
    %941 = vmatpush1.msra.mxu0 %v890
    %942 = vmatprep.subr.mxu0 %v895
    %943 = vmatpush1.msra.mxu0 %v894
    %944 = vmatprep.subr.mxu0 %v899
    %945 = vmatpush1.msra.mxu0 %v898
    %946 = vmatprep.subr.mxu0 %v903
    %947 = vmatpush1.msra.mxu0 %v902
    %948 = vmatprep.subr.mxu0 %v907
    %949 = vmatpush1.msra.mxu0 %v906
    %950 = vmatprep.subr.mxu0 %v911
    %951 = vmatpush1.msra.mxu0 %v910
    %952 = vmatprep.subr.mxu0 %v915
    %953 = vmatpush1.msra.mxu0 %v914
    %954 = vmatprep.subr.mxu0 %v919
    %955 = vmatpush1.msra.mxu0 %v918
    %956 = vmatprep.subr.mxu0 %v923
    %957 = vmatpush1.msra.mxu0 %v922
    %958 = vmatprep.subr.mxu0 0.0
    %959 = vmatpush1.msra.mxu0 0.0
    %960 = vmatprep.subr.mxu0 0.0
    %961 = vmatpush1.msra.mxu0 0.0
    %962 = vmatprep.subr.mxu0 0.0
    %963 = vmatpush1.msra.mxu0 0.0
    %964 = vmatprep.subr.mxu0 0.0
    %965 = vmatpush1.msra.mxu0 0.0
    %966 = vmatprep.subr.mxu0 0.0
    %967 = vmatpush1.msra.mxu0 0.0
    %968 = vmatprep.subr.mxu0 0.0
    %969 = vmatpush1.msra.mxu0 0.0
    %970 = vmatprep.subr.mxu0 0.0
    %971 = vmatpush1.msra.mxu0 0.0
    %972 = vmatprep.subr.mxu0 0.0
    %973 = vmatpush1.msra.mxu0 0.0
    %974 = vmatprep.subr.mxu0 0.0
    %975 = vmatpush1.msra.mxu0 0.0
    %976 = vmatprep.subr.mxu0 0.0
    %977 = vmatpush1.msra.mxu0 0.0
    %978 = vmatprep.subr.mxu0 0.0
    %979 = vmatpush1.msra.mxu0 0.0
    %980 = vmatprep.subr.mxu0 0.0
    %981 = vmatpush1.msra.mxu0 0.0
    %982 = vmatprep.subr.mxu0 0.0
    %983 = vmatpush1.msra.mxu0 0.0
    %984 = vmatprep.subr.mxu0 0.0
    %985 = vmatpush1.msra.mxu0 0.0
    %986 = vmatprep.subr.mxu0 0.0
    %987 = vmatpush1.msra.mxu0 0.0
    %988 = vmatprep.subr.mxu0 0.0
    %989 = vmatpush1.msra.mxu0 0.0
    %990 = vmatprep.mubr.f32.mxu0 0.0
    %991 = vmatmul.mubr.f32.gmra.mrb[0].mxu0 %v856
    %v992 = vpop.f32.mrb[0].mxu0
    %v993 = vadd.f32 0.0, %v992
    %v994 = vpop.f32.mrb[0].mxu0
    %v995 = vadd.f32 0.0, %v994
    %996 = vdwg.mxu0
    %997 = vmatprep.subr.mxu0 %v865
    %998 = vmatpush1.msra.mxu0 %v864
    %999 = vmatprep.subr.mxu0 %v869
    %1000 = vmatpush1.msra.mxu0 %v868
    %1001 = vmatprep.subr.mxu0 %v873
    %1002 = vmatpush1.msra.mxu0 %v872
    %1003 = vmatprep.subr.mxu0 %v877
    %1004 = vmatpush1.msra.mxu0 %v876
    %1005 = vmatprep.subr.mxu0 %v881
    %1006 = vmatpush1.msra.mxu0 %v880
    %1007 = vmatprep.subr.mxu0 %v885
    %1008 = vmatpush1.msra.mxu0 %v884
    %1009 = vmatprep.subr.mxu0 %v889
    %1010 = vmatpush1.msra.mxu0 %v888
    %1011 = vmatprep.subr.mxu0 %v893
    %1012 = vmatpush1.msra.mxu0 %v892
    %1013 = vmatprep.subr.mxu0 %v897
    %1014 = vmatpush1.msra.mxu0 %v896
    %1015 = vmatprep.subr.mxu0 %v901
    %1016 = vmatpush1.msra.mxu0 %v900
    %1017 = vmatprep.subr.mxu0 %v905
    %1018 = vmatpush1.msra.mxu0 %v904
    %1019 = vmatprep.subr.mxu0 %v909
    %1020 = vmatpush1.msra.mxu0 %v908
    %1021 = vmatprep.subr.mxu0 %v913
    %1022 = vmatpush1.msra.mxu0 %v912
    %1023 = vmatprep.subr.mxu0 %v917
    %1024 = vmatpush1.msra.mxu0 %v916
    %1025 = vmatprep.subr.mxu0 %v921
    %1026 = vmatpush1.msra.mxu0 %v920
    %1027 = vmatprep.subr.mxu0 %v925
    %1028 = vmatpush1.msra.mxu0 %v924
    %1029 = vmatprep.subr.mxu0 0.0
    %1030 = vmatpush1.msra.mxu0 0.0
    %1031 = vmatprep.subr.mxu0 0.0
    %1032 = vmatpush1.msra.mxu0 0.0
    %1033 = vmatprep.subr.mxu0 0.0
    %1034 = vmatpush1.msra.mxu0 0.0
    %1035 = vmatprep.subr.mxu0 0.0
    %1036 = vmatpush1.msra.mxu0 0.0
    %1037 = vmatprep.subr.mxu0 0.0
    %1038 = vmatpush1.msra.mxu0 0.0
    %1039 = vmatprep.subr.mxu0 0.0
    %1040 = vmatpush1.msra.mxu0 0.0
    %1041 = vmatprep.subr.mxu0 0.0
    %1042 = vmatpush1.msra.mxu0 0.0
    %1043 = vmatprep.subr.mxu0 0.0
    %1044 = vmatpush1.msra.mxu0 0.0
    %1045 = vmatprep.subr.mxu0 0.0
    %1046 = vmatpush1.msra.mxu0 0.0
    %1047 = vmatprep.subr.mxu0 0.0
    %1048 = vmatpush1.msra.mxu0 0.0
    %1049 = vmatprep.subr.mxu0 0.0
    %1050 = vmatpush1.msra.mxu0 0.0
    %1051 = vmatprep.subr.mxu0 0.0
    %1052 = vmatpush1.msra.mxu0 0.0
    %1053 = vmatprep.subr.mxu0 0.0
    %1054 = vmatpush1.msra.mxu0 0.0
    %1055 = vmatprep.subr.mxu0 0.0
    %1056 = vmatpush1.msra.mxu0 0.0
    %1057 = vmatprep.subr.mxu0 0.0
    %1058 = vmatpush1.msra.mxu0 0.0
    %1059 = vmatprep.subr.mxu0 0.0
    %1060 = vmatpush1.msra.mxu0 0.0
    %1061 = vmatprep.mubr.f32.mxu0 0.0
    %1062 = vmatmul.mubr.f32.gmra.mrb[0].mxu0 %v856
    %v1063 = vpop.f32.mrb[0].mxu0
    %v1064 = vadd.f32 0.0, %v1063
    %v1065 = vpop.f32.mrb[0].mxu0
    %v1066 = vadd.f32 0.0, %v1065
    %1067 = vdwg.mxu0
    %v1068 = vadd.f32 %v858, %v993
    %v1069 = vadd.f32 %v859, %v995
    %v1070 = vadd.f32 %v860, %v1064
    %v1071 = vadd.f32 %v861, %v1066
    %v1072 = vxor.u32 %v1068, 2147483648
    %v1073 = vmul.f32 %v1072, 1.442695
    %v1074 = vpow.pop %v1073
    %v1075 = vadd.f32 %v1074, 1.0
    %v1076 = vrcp.pop %v1075
    %v1077 = vmul.f32 1.0, %v1076
    %v1078 = vxor.u32 %v1069, 2147483648
    %v1079 = vmul.f32 %v1078, 1.442695
    %v1080 = vpow.pop %v1079
    %v1081 = vadd.f32 %v1080, 1.0
    %v1082 = vrcp.pop %v1081
    %v1083 = vmul.f32 1.0, %v1082
    %v1084 = vtanh.pop %v1070
    %v1085 = vxor.u32 %v1071, 2147483648
    %v1086 = vmul.f32 %v1085, 1.442695
    %v1087 = vpow.pop %v1086
    %v1088 = vadd.f32 %v1087, 1.0
    %v1089 = vrcp.pop %v1088
    %v1090 = vmul.f32 1.0, %v1089
    %v1091 = vmul.f32 %v1083, %v854
    %v1092 = vmul.f32 %v1077, %v1084
    %v1093 = vadd.f32 %v1091, %v1092
    %v1094 = vtanh.pop %v1093
    %v1095 = vmul.f32 %v1090, %v1094
    %1096 = vst [vmem:[#allocation3 + $0x10] sm:$0xff] %v1095
    %v1097 = vld [vmem:[#allocation2 + $0x60] sm:$0xff]
    %v1098 = vld [vmem:[#allocation2 + $0x68] sm:$0xff]
    %v1099 = vld [vmem:[#allocation2 + $0x70] sm:$0xff]
    %v1100 = vld [vmem:[#allocation2 + $0x78] sm:$0xff]
    %v1101 = vld [vmem:[#allocation4] sm:$0xff]
    %v1102 = vld [vmem:[#allocation4 + $0x8] sm:$0xff]
    %v1103 = vld [vmem:[#allocation4 + $0x10] sm:$0xff]
    %v1104 = vld [vmem:[#allocation4 + $0x18] sm:$0xff]
    %v1105 = vld [vmem:[#allocation4 + $0x20] sm:$0xff]
    %v1106 = vld [vmem:[#allocation4 + $0x28] sm:$0xff]
    %v1107 = vld [vmem:[#allocation4 + $0x30] sm:$0xff]
    %v1108 = vld [vmem:[#allocation4 + $0x38] sm:$0xff]
    %v1109 = vld [vmem:[#allocation4 + $0x40] sm:$0xff]
    %v1110 = vld [vmem:[#allocation4 + $0x48] sm:$0xff]
    %v1111 = vld [vmem:[#allocation4 + $0x50] sm:$0xff]
    %v1112 = vld [vmem:[#allocation4 + $0x58] sm:$0xff]
    %v1113 = vld [vmem:[#allocation4 + $0x60] sm:$0xff]
    %v1114 = vld [vmem:[#allocation4 + $0x68] sm:$0xff]
    %v1115 = vld [vmem:[#allocation4 + $0x70] sm:$0xff]
    %v1116 = vld [vmem:[#allocation4 + $0x78] sm:$0xff]
    %v1117 = vld [vmem:[#allocation4 + $0x80] sm:$0xff]
    %v1118 = vld [vmem:[#allocation4 + $0x88] sm:$0xff]
    %v1119 = vld [vmem:[#allocation4 + $0x90] sm:$0xff]
    %v1120 = vld [vmem:[#allocation4 + $0x98] sm:$0xff]
    %v1121 = vld [vmem:[#allocation4 + $0xa0] sm:$0xff]
    %v1122 = vld [vmem:[#allocation4 + $0xa8] sm:$0xff]
    %v1123 = vld [vmem:[#allocation4 + $0xb0] sm:$0xff]
    %v1124 = vld [vmem:[#allocation4 + $0xb8] sm:$0xff]
    %v1125 = vld [vmem:[#allocation4 + $0xc0] sm:$0xff]
    %v1126 = vld [vmem:[#allocation4 + $0xc8] sm:$0xff]
    %v1127 = vld [vmem:[#allocation4 + $0xd0] sm:$0xff]
    %v1128 = vld [vmem:[#allocation4 + $0xd8] sm:$0xff]
    %v1129 = vld [vmem:[#allocation4 + $0xe0] sm:$0xff]
    %v1130 = vld [vmem:[#allocation4 + $0xe8] sm:$0xff]
    %v1131 = vld [vmem:[#allocation4 + $0xf0] sm:$0xff]
    %v1132 = vld [vmem:[#allocation4 + $0xf8] sm:$0xff]
    %v1133 = vld [vmem:[#allocation4 + $0x100] sm:$0xff]
    %v1134 = vld [vmem:[#allocation4 + $0x108] sm:$0xff]
    %v1135 = vld [vmem:[#allocation4 + $0x110] sm:$0xff]
    %v1136 = vld [vmem:[#allocation4 + $0x118] sm:$0xff]
    %v1137 = vld [vmem:[#allocation4 + $0x120] sm:$0xff]
    %v1138 = vld [vmem:[#allocation4 + $0x128] sm:$0xff]
    %v1139 = vld [vmem:[#allocation4 + $0x130] sm:$0xff]
    %v1140 = vld [vmem:[#allocation4 + $0x138] sm:$0xff]
    %v1141 = vld [vmem:[#allocation4 + $0x140] sm:$0xff]
    %v1142 = vld [vmem:[#allocation4 + $0x148] sm:$0xff]
    %v1143 = vld [vmem:[#allocation4 + $0x150] sm:$0xff]
    %v1144 = vld [vmem:[#allocation4 + $0x158] sm:$0xff]
    %v1145 = vld [vmem:[#allocation4 + $0x160] sm:$0xff]
    %v1146 = vld [vmem:[#allocation4 + $0x168] sm:$0xff]
    %v1147 = vld [vmem:[#allocation4 + $0x170] sm:$0xff]
    %v1148 = vld [vmem:[#allocation4 + $0x178] sm:$0xff]
    %v1149 = vld [vmem:[#allocation4 + $0x180] sm:$0xff]
    %v1150 = vld [vmem:[#allocation4 + $0x188] sm:$0xff]
    %v1151 = vld [vmem:[#allocation4 + $0x190] sm:$0xff]
    %v1152 = vld [vmem:[#allocation4 + $0x198] sm:$0xff]
    %v1153 = vld [vmem:[#allocation4 + $0x1a0] sm:$0xff]
    %v1154 = vld [vmem:[#allocation4 + $0x1a8] sm:$0xff]
    %v1155 = vld [vmem:[#allocation4 + $0x1b0] sm:$0xff]
    %v1156 = vld [vmem:[#allocation4 + $0x1b8] sm:$0xff]
    %v1157 = vld [vmem:[#allocation4 + $0x1c0] sm:$0xff]
    %v1158 = vld [vmem:[#allocation4 + $0x1c8] sm:$0xff]
    %v1159 = vld [vmem:[#allocation4 + $0x1d0] sm:$0xff]
    %v1160 = vld [vmem:[#allocation4 + $0x1d8] sm:$0xff]
    %v1161 = vld [vmem:[#allocation4 + $0x1e0] sm:$0xff]
    %v1162 = vld [vmem:[#allocation4 + $0x1e8] sm:$0xff]
    %v1163 = vld [vmem:[#allocation4 + $0x1f0] sm:$0xff]
    %v1164 = vld [vmem:[#allocation4 + $0x1f8] sm:$0xff]
    %1165 = vmatprep.subr.mxu0 %v1102
    %1166 = vmatpush1.msra.mxu0 %v1101
    %1167 = vmatprep.subr.mxu0 %v1106
    %1168 = vmatpush1.msra.mxu0 %v1105
    %1169 = vmatprep.subr.mxu0 %v1110
    %1170 = vmatpush1.msra.mxu0 %v1109
    %1171 = vmatprep.subr.mxu0 %v1114
    %1172 = vmatpush1.msra.mxu0 %v1113
    %1173 = vmatprep.subr.mxu0 %v1118
    %1174 = vmatpush1.msra.mxu0 %v1117
    %1175 = vmatprep.subr.mxu0 %v1122
    %1176 = vmatpush1.msra.mxu0 %v1121
    %1177 = vmatprep.subr.mxu0 %v1126
    %1178 = vmatpush1.msra.mxu0 %v1125
    %1179 = vmatprep.subr.mxu0 %v1130
    %1180 = vmatpush1.msra.mxu0 %v1129
    %1181 = vmatprep.subr.mxu0 %v1134
    %1182 = vmatpush1.msra.mxu0 %v1133
    %1183 = vmatprep.subr.mxu0 %v1138
    %1184 = vmatpush1.msra.mxu0 %v1137
    %1185 = vmatprep.subr.mxu0 %v1142
    %1186 = vmatpush1.msra.mxu0 %v1141
    %1187 = vmatprep.subr.mxu0 %v1146
    %1188 = vmatpush1.msra.mxu0 %v1145
    %1189 = vmatprep.subr.mxu0 %v1150
    %1190 = vmatpush1.msra.mxu0 %v1149
    %1191 = vmatprep.subr.mxu0 %v1154
    %1192 = vmatpush1.msra.mxu0 %v1153
    %1193 = vmatprep.subr.mxu0 %v1158
    %1194 = vmatpush1.msra.mxu0 %v1157
    %1195 = vmatprep.subr.mxu0 %v1162
    %1196 = vmatpush1.msra.mxu0 %v1161
    %1197 = vmatprep.subr.mxu0 0.0
    %1198 = vmatpush1.msra.mxu0 0.0
    %1199 = vmatprep.subr.mxu0 0.0
    %1200 = vmatpush1.msra.mxu0 0.0
    %1201 = vmatprep.subr.mxu0 0.0
    %1202 = vmatpush1.msra.mxu0 0.0
    %1203 = vmatprep.subr.mxu0 0.0
    %1204 = vmatpush1.msra.mxu0 0.0
    %1205 = vmatprep.subr.mxu0 0.0
    %1206 = vmatpush1.msra.mxu0 0.0
    %1207 = vmatprep.subr.mxu0 0.0
    %1208 = vmatpush1.msra.mxu0 0.0
    %1209 = vmatprep.subr.mxu0 0.0
    %1210 = vmatpush1.msra.mxu0 0.0
    %1211 = vmatprep.subr.mxu0 0.0
    %1212 = vmatpush1.msra.mxu0 0.0
    %1213 = vmatprep.subr.mxu0 0.0
    %1214 = vmatpush1.msra.mxu0 0.0
    %1215 = vmatprep.subr.mxu0 0.0
    %1216 = vmatpush1.msra.mxu0 0.0
    %1217 = vmatprep.subr.mxu0 0.0
    %1218 = vmatpush1.msra.mxu0 0.0
    %1219 = vmatprep.subr.mxu0 0.0
    %1220 = vmatpush1.msra.mxu0 0.0
    %1221 = vmatprep.subr.mxu0 0.0
    %1222 = vmatpush1.msra.mxu0 0.0
    %1223 = vmatprep.subr.mxu0 0.0
    %1224 = vmatpush1.msra.mxu0 0.0
    %1225 = vmatprep.subr.mxu0 0.0
    %1226 = vmatpush1.msra.mxu0 0.0
    %1227 = vmatprep.subr.mxu0 0.0
    %1228 = vmatpush1.msra.mxu0 0.0
    %1229 = vmatprep.mubr.f32.mxu0 0.0
    %1230 = vmatmul.mubr.f32.gmra.mrb[0].mxu0 %v1095
    %v1231 = vpop.f32.mrb[0].mxu0
    %v1232 = vadd.f32 0.0, %v1231
    %v1233 = vpop.f32.mrb[0].mxu0
    %v1234 = vadd.f32 0.0, %v1233
    %1235 = vdwg.mxu0
    %1236 = vmatprep.subr.mxu0 %v1104
    %1237 = vmatpush1.msra.mxu0 %v1103
    %1238 = vmatprep.subr.mxu0 %v1108
    %1239 = vmatpush1.msra.mxu0 %v1107
    %1240 = vmatprep.subr.mxu0 %v1112
    %1241 = vmatpush1.msra.mxu0 %v1111
    %1242 = vmatprep.subr.mxu0 %v1116
    %1243 = vmatpush1.msra.mxu0 %v1115
    %1244 = vmatprep.subr.mxu0 %v1120
    %1245 = vmatpush1.msra.mxu0 %v1119
    %1246 = vmatprep.subr.mxu0 %v1124
    %1247 = vmatpush1.msra.mxu0 %v1123
    %1248 = vmatprep.subr.mxu0 %v1128
    %1249 = vmatpush1.msra.mxu0 %v1127
    %1250 = vmatprep.subr.mxu0 %v1132
    %1251 = vmatpush1.msra.mxu0 %v1131
    %1252 = vmatprep.subr.mxu0 %v1136
    %1253 = vmatpush1.msra.mxu0 %v1135
    %1254 = vmatprep.subr.mxu0 %v1140
    %1255 = vmatpush1.msra.mxu0 %v1139
    %1256 = vmatprep.subr.mxu0 %v1144
    %1257 = vmatpush1.msra.mxu0 %v1143
    %1258 = vmatprep.subr.mxu0 %v1148
    %1259 = vmatpush1.msra.mxu0 %v1147
    %1260 = vmatprep.subr.mxu0 %v1152
    %1261 = vmatpush1.msra.mxu0 %v1151
    %1262 = vmatprep.subr.mxu0 %v1156
    %1263 = vmatpush1.msra.mxu0 %v1155
    %1264 = vmatprep.subr.mxu0 %v1160
    %1265 = vmatpush1.msra.mxu0 %v1159
    %1266 = vmatprep.subr.mxu0 %v1164
    %1267 = vmatpush1.msra.mxu0 %v1163
    %1268 = vmatprep.subr.mxu0 0.0
    %1269 = vmatpush1.msra.mxu0 0.0
    %1270 = vmatprep.subr.mxu0 0.0
    %1271 = vmatpush1.msra.mxu0 0.0
    %1272 = vmatprep.subr.mxu0 0.0
    %1273 = vmatpush1.msra.mxu0 0.0
    %1274 = vmatprep.subr.mxu0 0.0
    %1275 = vmatpush1.msra.mxu0 0.0
    %1276 = vmatprep.subr.mxu0 0.0
    %1277 = vmatpush1.msra.mxu0 0.0
    %1278 = vmatprep.subr.mxu0 0.0
    %1279 = vmatpush1.msra.mxu0 0.0
    %1280 = vmatprep.subr.mxu0 0.0
    %1281 = vmatpush1.msra.mxu0 0.0
    %1282 = vmatprep.subr.mxu0 0.0
    %1283 = vmatpush1.msra.mxu0 0.0
    %1284 = vmatprep.subr.mxu0 0.0
    %1285 = vmatpush1.msra.mxu0 0.0
    %1286 = vmatprep.subr.mxu0 0.0
    %1287 = vmatpush1.msra.mxu0 0.0
    %1288 = vmatprep.subr.mxu0 0.0
    %1289 = vmatpush1.msra.mxu0 0.0
    %1290 = vmatprep.subr.mxu0 0.0
    %1291 = vmatpush1.msra.mxu0 0.0
    %1292 = vmatprep.subr.mxu0 0.0
    %1293 = vmatpush1.msra.mxu0 0.0
    %1294 = vmatprep.subr.mxu0 0.0
    %1295 = vmatpush1.msra.mxu0 0.0
    %1296 = vmatprep.subr.mxu0 0.0
    %1297 = vmatpush1.msra.mxu0 0.0
    %1298 = vmatprep.subr.mxu0 0.0
    %1299 = vmatpush1.msra.mxu0 0.0
    %1300 = vmatprep.mubr.f32.mxu0 0.0
    %1301 = vmatmul.mubr.f32.gmra.mrb[0].mxu0 %v1095
    %v1302 = vpop.f32.mrb[0].mxu0
    %v1303 = vadd.f32 0.0, %v1302
    %v1304 = vpop.f32.mrb[0].mxu0
    %v1305 = vadd.f32 0.0, %v1304
    %1306 = vdwg.mxu0
    %v1307 = vadd.f32 %v1097, %v1232
    %v1308 = vadd.f32 %v1098, %v1234
    %v1309 = vadd.f32 %v1099, %v1303
    %v1310 = vadd.f32 %v1100, %v1305
    %v1311 = vxor.u32 %v1307, 2147483648
    %v1312 = vmul.f32 %v1311, 1.442695
    %v1313 = vpow.pop %v1312
    %v1314 = vadd.f32 %v1313, 1.0
    %v1315 = vrcp.pop %v1314
    %v1316 = vmul.f32 1.0, %v1315
    %v1317 = vxor.u32 %v1308, 2147483648
    %v1318 = vmul.f32 %v1317, 1.442695
    %v1319 = vpow.pop %v1318
    %v1320 = vadd.f32 %v1319, 1.0
    %v1321 = vrcp.pop %v1320
    %v1322 = vmul.f32 1.0, %v1321
    %v1323 = vtanh.pop %v1309
    %v1324 = vxor.u32 %v1310, 2147483648
    %v1325 = vmul.f32 %v1324, 1.442695
    %v1326 = vpow.pop %v1325
    %v1327 = vadd.f32 %v1326, 1.0
    %v1328 = vrcp.pop %v1327
    %v1329 = vmul.f32 1.0, %v1328
    %v1330 = vmul.f32 %v1322, %v1093
    %v1331 = vmul.f32 %v1316, %v1323
    %v1332 = vadd.f32 %v1330, %v1331
    %v1333 = vtanh.pop %v1332
    %v1334 = vmul.f32 %v1329, %v1333
    %1335 = vst [vmem:[#allocation3 + $0x18] sm:$0xff] %v1334
    %v1336 = vld [vmem:[#allocation2 + $0x80] sm:$0xff]
    %v1337 = vld [vmem:[#allocation2 + $0x88] sm:$0xff]
    %v1338 = vld [vmem:[#allocation2 + $0x90] sm:$0xff]
    %v1339 = vld [vmem:[#allocation2 + $0x98] sm:$0xff]
    %v1340 = vld [vmem:[#allocation4] sm:$0xff]
    %v1341 = vld [vmem:[#allocation4 + $0x8] sm:$0xff]
    %v1342 = vld [vmem:[#allocation4 + $0x10] sm:$0xff]
    %v1343 = vld [vmem:[#allocation4 + $0x18] sm:$0xff]
    %v1344 = vld [vmem:[#allocation4 + $0x20] sm:$0xff]
    %v1345 = vld [vmem:[#allocation4 + $0x28] sm:$0xff]
    %v1346 = vld [vmem:[#allocation4 + $0x30] sm:$0xff]
    %v1347 = vld [vmem:[#allocation4 + $0x38] sm:$0xff]
    %v1348 = vld [vmem:[#allocation4 + $0x40] sm:$0xff]
    %v1349 = vld [vmem:[#allocation4 + $0x48] sm:$0xff]
    %v1350 = vld [vmem:[#allocation4 + $0x50] sm:$0xff]
    %v1351 = vld [vmem:[#allocation4 + $0x58] sm:$0xff]
    %v1352 = vld [vmem:[#allocation4 + $0x60] sm:$0xff]
    %v1353 = vld [vmem:[#allocation4 + $0x68] sm:$0xff]
    %v1354 = vld [vmem:[#allocation4 + $0x70] sm:$0xff]
    %v1355 = vld [vmem:[#allocation4 + $0x78] sm:$0xff]
    %v1356 = vld [vmem:[#allocation4 + $0x80] sm:$0xff]
    %v1357 = vld [vmem:[#allocation4 + $0x88] sm:$0xff]
    %v1358 = vld [vmem:[#allocation4 + $0x90] sm:$0xff]
    %v1359 = vld [vmem:[#allocation4 + $0x98] sm:$0xff]
    %v1360 = vld [vmem:[#allocation4 + $0xa0] sm:$0xff]
    %v1361 = vld [vmem:[#allocation4 + $0xa8] sm:$0xff]
    %v1362 = vld [vmem:[#allocation4 + $0xb0] sm:$0xff]
    %v1363 = vld [vmem:[#allocation4 + $0xb8] sm:$0xff]
    %v1364 = vld [vmem:[#allocation4 + $0xc0] sm:$0xff]
    %v1365 = vld [vmem:[#allocation4 + $0xc8] sm:$0xff]
    %v1366 = vld [vmem:[#allocation4 + $0xd0] sm:$0xff]
    %v1367 = vld [vmem:[#allocation4 + $0xd8] sm:$0xff]
    %v1368 = vld [vmem:[#allocation4 + $0xe0] sm:$0xff]
    %v1369 = vld [vmem:[#allocation4 + $0xe8] sm:$0xff]
    %v1370 = vld [vmem:[#allocation4 + $0xf0] sm:$0xff]
    %v1371 = vld [vmem:[#allocation4 + $0xf8] sm:$0xff]
    %v1372 = vld [vmem:[#allocation4 + $0x100] sm:$0xff]
    %v1373 = vld [vmem:[#allocation4 + $0x108] sm:$0xff]
    %v1374 = vld [vmem:[#allocation4 + $0x110] sm:$0xff]
    %v1375 = vld [vmem:[#allocation4 + $0x118] sm:$0xff]
    %v1376 = vld [vmem:[#allocation4 + $0x120] sm:$0xff]
    %v1377 = vld [vmem:[#allocation4 + $0x128] sm:$0xff]
    %v1378 = vld [vmem:[#allocation4 + $0x130] sm:$0xff]
    %v1379 = vld [vmem:[#allocation4 + $0x138] sm:$0xff]
    %v1380 = vld [vmem:[#allocation4 + $0x140] sm:$0xff]
    %v1381 = vld [vmem:[#allocation4 + $0x148] sm:$0xff]
    %v1382 = vld [vmem:[#allocation4 + $0x150] sm:$0xff]
    %v1383 = vld [vmem:[#allocation4 + $0x158] sm:$0xff]
    %v1384 = vld [vmem:[#allocation4 + $0x160] sm:$0xff]
    %v1385 = vld [vmem:[#allocation4 + $0x168] sm:$0xff]
    %v1386 = vld [vmem:[#allocation4 + $0x170] sm:$0xff]
    %v1387 = vld [vmem:[#allocation4 + $0x178] sm:$0xff]
    %v1388 = vld [vmem:[#allocation4 + $0x180] sm:$0xff]
    %v1389 = vld [vmem:[#allocation4 + $0x188] sm:$0xff]
    %v1390 = vld [vmem:[#allocation4 + $0x190] sm:$0xff]
    %v1391 = vld [vmem:[#allocation4 + $0x198] sm:$0xff]
    %v1392 = vld [vmem:[#allocation4 + $0x1a0] sm:$0xff]
    %v1393 = vld [vmem:[#allocation4 + $0x1a8] sm:$0xff]
    %v1394 = vld [vmem:[#allocation4 + $0x1b0] sm:$0xff]
    %v1395 = vld [vmem:[#allocation4 + $0x1b8] sm:$0xff]
    %v1396 = vld [vmem:[#allocation4 + $0x1c0] sm:$0xff]
    %v1397 = vld [vmem:[#allocation4 + $0x1c8] sm:$0xff]
    %v1398 = vld [vmem:[#allocation4 + $0x1d0] sm:$0xff]
    %v1399 = vld [vmem:[#allocation4 + $0x1d8] sm:$0xff]
    %v1400 = vld [vmem:[#allocation4 + $0x1e0] sm:$0xff]
    %v1401 = vld [vmem:[#allocation4 + $0x1e8] sm:$0xff]
    %v1402 = vld [vmem:[#allocation4 + $0x1f0] sm:$0xff]
    %v1403 = vld [vmem:[#allocation4 + $0x1f8] sm:$0xff]
    %1404 = vmatprep.subr.mxu0 %v1341
    %1405 = vmatpush1.msra.mxu0 %v1340
    %1406 = vmatprep.subr.mxu0 %v1345
    %1407 = vmatpush1.msra.mxu0 %v1344
    %1408 = vmatprep.subr.mxu0 %v1349
    %1409 = vmatpush1.msra.mxu0 %v1348
    %1410 = vmatprep.subr.mxu0 %v1353
    %1411 = vmatpush1.msra.mxu0 %v1352
    %1412 = vmatprep.subr.mxu0 %v1357
    %1413 = vmatpush1.msra.mxu0 %v1356
    %1414 = vmatprep.subr.mxu0 %v1361
    %1415 = vmatpush1.msra.mxu0 %v1360
    %1416 = vmatprep.subr.mxu0 %v1365
    %1417 = vmatpush1.msra.mxu0 %v1364
    %1418 = vmatprep.subr.mxu0 %v1369
    %1419 = vmatpush1.msra.mxu0 %v1368
    %1420 = vmatprep.subr.mxu0 %v1373
    %1421 = vmatpush1.msra.mxu0 %v1372
    %1422 = vmatprep.subr.mxu0 %v1377
    %1423 = vmatpush1.msra.mxu0 %v1376
    %1424 = vmatprep.subr.mxu0 %v1381
    %1425 = vmatpush1.msra.mxu0 %v1380
    %1426 = vmatprep.subr.mxu0 %v1385
    %1427 = vmatpush1.msra.mxu0 %v1384
    %1428 = vmatprep.subr.mxu0 %v1389
    %1429 = vmatpush1.msra.mxu0 %v1388
    %1430 = vmatprep.subr.mxu0 %v1393
    %1431 = vmatpush1.msra.mxu0 %v1392
    %1432 = vmatprep.subr.mxu0 %v1397
    %1433 = vmatpush1.msra.mxu0 %v1396
    %1434 = vmatprep.subr.mxu0 %v1401
    %1435 = vmatpush1.msra.mxu0 %v1400
    %1436 = vmatprep.subr.mxu0 0.0
    %1437 = vmatpush1.msra.mxu0 0.0
    %1438 = vmatprep.subr.mxu0 0.0
    %1439 = vmatpush1.msra.mxu0 0.0
    %1440 = vmatprep.subr.mxu0 0.0
    %1441 = vmatpush1.msra.mxu0 0.0
    %1442 = vmatprep.subr.mxu0 0.0
    %1443 = vmatpush1.msra.mxu0 0.0
    %1444 = vmatprep.subr.mxu0 0.0
    %1445 = vmatpush1.msra.mxu0 0.0
    %1446 = vmatprep.subr.mxu0 0.0
    %1447 = vmatpush1.msra.mxu0 0.0
    %1448 = vmatprep.subr.mxu0 0.0
    %1449 = vmatpush1.msra.mxu0 0.0
    %1450 = vmatprep.subr.mxu0 0.0
    %1451 = vmatpush1.msra.mxu0 0.0
    %1452 = vmatprep.subr.mxu0 0.0
    %1453 = vmatpush1.msra.mxu0 0.0
    %1454 = vmatprep.subr.mxu0 0.0
    %1455 = vmatpush1.msra.mxu0 0.0
    %1456 = vmatprep.subr.mxu0 0.0
    %1457 = vmatpush1.msra.mxu0 0.0
    %1458 = vmatprep.subr.mxu0 0.0
    %1459 = vmatpush1.msra.mxu0 0.0
    %1460 = vmatprep.subr.mxu0 0.0
    %1461 = vmatpush1.msra.mxu0 0.0
    %1462 = vmatprep.subr.mxu0 0.0
    %1463 = vmatpush1.msra.mxu0 0.0
    %1464 = vmatprep.subr.mxu0 0.0
    %1465 = vmatpush1.msra.mxu0 0.0
    %1466 = vmatprep.subr.mxu0 0.0
    %1467 = vmatpush1.msra.mxu0 0.0
    %1468 = vmatprep.mubr.f32.mxu0 0.0
    %1469 = vmatmul.mubr.f32.gmra.mrb[0].mxu0 %v1334
    %v1470 = vpop.f32.mrb[0].mxu0
    %v1471 = vadd.f32 0.0, %v1470
    %v1472 = vpop.f32.mrb[0].mxu0
    %v1473 = vadd.f32 0.0, %v1472
    %1474 = vdwg.mxu0
    %1475 = vmatprep.subr.mxu0 %v1343
    %1476 = vmatpush1.msra.mxu0 %v1342
    %1477 = vmatprep.subr.mxu0 %v1347
    %1478 = vmatpush1.msra.mxu0 %v1346
    %1479 = vmatprep.subr.mxu0 %v1351
    %1480 = vmatpush1.msra.mxu0 %v1350
    %1481 = vmatprep.subr.mxu0 %v1355
    %1482 = vmatpush1.msra.mxu0 %v1354
    %1483 = vmatprep.subr.mxu0 %v1359
    %1484 = vmatpush1.msra.mxu0 %v1358
    %1485 = vmatprep.subr.mxu0 %v1363
    %1486 = vmatpush1.msra.mxu0 %v1362
    %1487 = vmatprep.subr.mxu0 %v1367
    %1488 = vmatpush1.msra.mxu0 %v1366
    %1489 = vmatprep.subr.mxu0 %v1371
    %1490 = vmatpush1.msra.mxu0 %v1370
    %1491 = vmatprep.subr.mxu0 %v1375
    %1492 = vmatpush1.msra.mxu0 %v1374
    %1493 = vmatprep.subr.mxu0 %v1379
    %1494 = vmatpush1.msra.mxu0 %v1378
    %1495 = vmatprep.subr.mxu0 %v1383
    %1496 = vmatpush1.msra.mxu0 %v1382
    %1497 = vmatprep.subr.mxu0 %v1387
    %1498 = vmatpush1.msra.mxu0 %v1386
    %1499 = vmatprep.subr.mxu0 %v1391
    %1500 = vmatpush1.msra.mxu0 %v1390
    %1501 = vmatprep.subr.mxu0 %v1395
    %1502 = vmatpush1.msra.mxu0 %v1394
    %1503 = vmatprep.subr.mxu0 %v1399
    %1504 = vmatpush1.msra.mxu0 %v1398
    %1505 = vmatprep.subr.mxu0 %v1403
    %1506 = vmatpush1.msra.mxu0 %v1402
    %1507 = vmatprep.subr.mxu0 0.0
    %1508 = vmatpush1.msra.mxu0 0.0
    %1509 = vmatprep.subr.mxu0 0.0
    %1510 = vmatpush1.msra.mxu0 0.0
    %1511 = vmatprep.subr.mxu0 0.0
    %1512 = vmatpush1.msra.mxu0 0.0
    %1513 = vmatprep.subr.mxu0 0.0
    %1514 = vmatpush1.msra.mxu0 0.0
    %1515 = vmatprep.subr.mxu0 0.0
    %1516 = vmatpush1.msra.mxu0 0.0
    %1517 = vmatprep.subr.mxu0 0.0
    %1518 = vmatpush1.msra.mxu0 0.0
    %1519 = vmatprep.subr.mxu0 0.0
    %1520 = vmatpush1.msra.mxu0 0.0
    %1521 = vmatprep.subr.mxu0 0.0
    %1522 = vmatpush1.msra.mxu0 0.0
    %1523 = vmatprep.subr.mxu0 0.0
    %1524 = vmatpush1.msra.mxu0 0.0
    %1525 = vmatprep.subr.mxu0 0.0
    %1526 = vmatpush1.msra.mxu0 0.0
    %1527 = vmatprep.subr.mxu0 0.0
    %1528 = vmatpush1.msra.mxu0 0.0
    %1529 = vmatprep.subr.mxu0 0.0
    %1530 = vmatpush1.msra.mxu0 0.0
    %1531 = vmatprep.subr.mxu0 0.0
    %1532 = vmatpush1.msra.mxu0 0.0
    %1533 = vmatprep.subr.mxu0 0.0
    %1534 = vmatpush1.msra.mxu0 0.0
    %1535 = vmatprep.subr.mxu0 0.0
    %1536 = vmatpush1.msra.mxu0 0.0
    %1537 = vmatprep.subr.mxu0 0.0
    %1538 = vmatpush1.msra.mxu0 0.0
    %1539 = vmatprep.mubr.f32.mxu0 0.0
    %1540 = vmatmul.mubr.f32.gmra.mrb[0].mxu0 %v1334
    %v1541 = vpop.f32.mrb[0].mxu0
    %v1542 = vadd.f32 0.0, %v1541
    %v1543 = vpop.f32.mrb[0].mxu0
    %v1544 = vadd.f32 0.0, %v1543
    %1545 = vdwg.mxu0
    %v1546 = vadd.f32 %v1336, %v1471
    %v1547 = vadd.f32 %v1337, %v1473
    %v1548 = vadd.f32 %v1338, %v1542
    %v1549 = vadd.f32 %v1339, %v1544
    %v1550 = vxor.u32 %v1546, 2147483648
    %v1551 = vmul.f32 %v1550, 1.442695
    %v1552 = vpow.pop %v1551
    %v1553 = vadd.f32 %v1552, 1.0
    %v1554 = vrcp.pop %v1553
    %v1555 = vmul.f32 1.0, %v1554
    %v1556 = vxor.u32 %v1547, 2147483648
    %v1557 = vmul.f32 %v1556, 1.442695
    %v1558 = vpow.pop %v1557
    %v1559 = vadd.f32 %v1558, 1.0
    %v1560 = vrcp.pop %v1559
    %v1561 = vmul.f32 1.0, %v1560
    %v1562 = vtanh.pop %v1548
    %v1563 = vxor.u32 %v1549, 2147483648
    %v1564 = vmul.f32 %v1563, 1.442695
    %v1565 = vpow.pop %v1564
    %v1566 = vadd.f32 %v1565, 1.0
    %v1567 = vrcp.pop %v1566
    %v1568 = vmul.f32 1.0, %v1567
    %v1569 = vmul.f32 %v1561, %v1332
    %v1570 = vmul.f32 %v1555, %v1562
    %v1571 = vadd.f32 %v1569, %v1570
    %v1572 = vtanh.pop %v1571
    %v1573 = vmul.f32 %v1568, %v1572
    %1574 = vst [vmem:[#allocation3 + $0x20] sm:$0xff] %v1573
    %v1575 = vld [vmem:[#allocation2 + $0xa0] sm:$0xff]
    %v1576 = vld [vmem:[#allocation2 + $0xa8] sm:$0xff]
    %v1577 = vld [vmem:[#allocation2 + $0xb0] sm:$0xff]
    %v1578 = vld [vmem:[#allocation2 + $0xb8] sm:$0xff]
    %v1579 = vld [vmem:[#allocation4] sm:$0xff]
    %v1580 = vld [vmem:[#allocation4 + $0x8] sm:$0xff]
    %v1581 = vld [vmem:[#allocation4 + $0x10] sm:$0xff]
    %v1582 = vld [vmem:[#allocation4 + $0x18] sm:$0xff]
    %v1583 = vld [vmem:[#allocation4 + $0x20] sm:$0xff]
    %v1584 = vld [vmem:[#allocation4 + $0x28] sm:$0xff]
    %v1585 = vld [vmem:[#allocation4 + $0x30] sm:$0xff]
    %v1586 = vld [vmem:[#allocation4 + $0x38] sm:$0xff]
    %v1587 = vld [vmem:[#allocation4 + $0x40] sm:$0xff]
    %v1588 = vld [vmem:[#allocation4 + $0x48] sm:$0xff]
    %v1589 = vld [vmem:[#allocation4 + $0x50] sm:$0xff]
    %v1590 = vld [vmem:[#allocation4 + $0x58] sm:$0xff]
    %v1591 = vld [vmem:[#allocation4 + $0x60] sm:$0xff]
    %v1592 = vld [vmem:[#allocation4 + $0x68] sm:$0xff]
    %v1593 = vld [vmem:[#allocation4 + $0x70] sm:$0xff]
    %v1594 = vld [vmem:[#allocation4 + $0x78] sm:$0xff]
    %v1595 = vld [vmem:[#allocation4 + $0x80] sm:$0xff]
    %v1596 = vld [vmem:[#allocation4 + $0x88] sm:$0xff]
    %v1597 = vld [vmem:[#allocation4 + $0x90] sm:$0xff]
    %v1598 = vld [vmem:[#allocation4 + $0x98] sm:$0xff]
    %v1599 = vld [vmem:[#allocation4 + $0xa0] sm:$0xff]
    %v1600 = vld [vmem:[#allocation4 + $0xa8] sm:$0xff]
    %v1601 = vld [vmem:[#allocation4 + $0xb0] sm:$0xff]
    %v1602 = vld [vmem:[#allocation4 + $0xb8] sm:$0xff]
    %v1603 = vld [vmem:[#allocation4 + $0xc0] sm:$0xff]
    %v1604 = vld [vmem:[#allocation4 + $0xc8] sm:$0xff]
    %v1605 = vld [vmem:[#allocation4 + $0xd0] sm:$0xff]
    %v1606 = vld [vmem:[#allocation4 + $0xd8] sm:$0xff]
    %v1607 = vld [vmem:[#allocation4 + $0xe0] sm:$0xff]
    %v1608 = vld [vmem:[#allocation4 + $0xe8] sm:$0xff]
    %v1609 = vld [vmem:[#allocation4 + $0xf0] sm:$0xff]
    %v1610 = vld [vmem:[#allocation4 + $0xf8] sm:$0xff]
    %v1611 = vld [vmem:[#allocation4 + $0x100] sm:$0xff]
    %v1612 = vld [vmem:[#allocation4 + $0x108] sm:$0xff]
    %v1613 = vld [vmem:[#allocation4 + $0x110] sm:$0xff]
    %v1614 = vld [vmem:[#allocation4 + $0x118] sm:$0xff]
    %v1615 = vld [vmem:[#allocation4 + $0x120] sm:$0xff]
    %v1616 = vld [vmem:[#allocation4 + $0x128] sm:$0xff]
    %v1617 = vld [vmem:[#allocation4 + $0x130] sm:$0xff]
    %v1618 = vld [vmem:[#allocation4 + $0x138] sm:$0xff]
    %v1619 = vld [vmem:[#allocation4 + $0x140] sm:$0xff]
    %v1620 = vld [vmem:[#allocation4 + $0x148] sm:$0xff]
    %v1621 = vld [vmem:[#allocation4 + $0x150] sm:$0xff]
    %v1622 = vld [vmem:[#allocation4 + $0x158] sm:$0xff]
    %v1623 = vld [vmem:[#allocation4 + $0x160] sm:$0xff]
    %v1624 = vld [vmem:[#allocation4 + $0x168] sm:$0xff]
    %v1625 = vld [vmem:[#allocation4 + $0x170] sm:$0xff]
    %v1626 = vld [vmem:[#allocation4 + $0x178] sm:$0xff]
    %v1627 = vld [vmem:[#allocation4 + $0x180] sm:$0xff]
    %v1628 = vld [vmem:[#allocation4 + $0x188] sm:$0xff]
    %v1629 = vld [vmem:[#allocation4 + $0x190] sm:$0xff]
    %v1630 = vld [vmem:[#allocation4 + $0x198] sm:$0xff]
    %v1631 = vld [vmem:[#allocation4 + $0x1a0] sm:$0xff]
    %v1632 = vld [vmem:[#allocation4 + $0x1a8] sm:$0xff]
    %v1633 = vld [vmem:[#allocation4 + $0x1b0] sm:$0xff]
    %v1634 = vld [vmem:[#allocation4 + $0x1b8] sm:$0xff]
    %v1635 = vld [vmem:[#allocation4 + $0x1c0] sm:$0xff]
    %v1636 = vld [vmem:[#allocation4 + $0x1c8] sm:$0xff]
    %v1637 = vld [vmem:[#allocation4 + $0x1d0] sm:$0xff]
    %v1638 = vld [vmem:[#allocation4 + $0x1d8] sm:$0xff]
    %v1639 = vld [vmem:[#allocation4 + $0x1e0] sm:$0xff]
    %v1640 = vld [vmem:[#allocation4 + $0x1e8] sm:$0xff]
    %v1641 = vld [vmem:[#allocation4 + $0x1f0] sm:$0xff]
    %v1642 = vld [vmem:[#allocation4 + $0x1f8] sm:$0xff]
    %1643 = vmatprep.subr.mxu0 %v1580
    %1644 = vmatpush1.msra.mxu0 %v1579
    %1645 = vmatprep.subr.mxu0 %v1584
    %1646 = vmatpush1.msra.mxu0 %v1583
    %1647 = vmatprep.subr.mxu0 %v1588
    %1648 = vmatpush1.msra.mxu0 %v1587
    %1649 = vmatprep.subr.mxu0 %v1592
    %1650 = vmatpush1.msra.mxu0 %v1591
    %1651 = vmatprep.subr.mxu0 %v1596
    %1652 = vmatpush1.msra.mxu0 %v1595
    %1653 = vmatprep.subr.mxu0 %v1600
    %1654 = vmatpush1.msra.mxu0 %v1599
    %1655 = vmatprep.subr.mxu0 %v1604
    %1656 = vmatpush1.msra.mxu0 %v1603
    %1657 = vmatprep.subr.mxu0 %v1608
    %1658 = vmatpush1.msra.mxu0 %v1607
    %1659 = vmatprep.subr.mxu0 %v1612
    %1660 = vmatpush1.msra.mxu0 %v1611
    %1661 = vmatprep.subr.mxu0 %v1616
    %1662 = vmatpush1.msra.mxu0 %v1615
    %1663 = vmatprep.subr.mxu0 %v1620
    %1664 = vmatpush1.msra.mxu0 %v1619
    %1665 = vmatprep.subr.mxu0 %v1624
    %1666 = vmatpush1.msra.mxu0 %v1623
    %1667 = vmatprep.subr.mxu0 %v1628
    %1668 = vmatpush1.msra.mxu0 %v1627
    %1669 = vmatprep.subr.mxu0 %v1632
    %1670 = vmatpush1.msra.mxu0 %v1631
    %1671 = vmatprep.subr.mxu0 %v1636
    %1672 = vmatpush1.msra.mxu0 %v1635
    %1673 = vmatprep.subr.mxu0 %v1640
    %1674 = vmatpush1.msra.mxu0 %v1639
    %1675 = vmatprep.subr.mxu0 0.0
    %1676 = vmatpush1.msra.mxu0 0.0
    %1677 = vmatprep.subr.mxu0 0.0
    %1678 = vmatpush1.msra.mxu0 0.0
    %1679 = vmatprep.subr.mxu0 0.0
    %1680 = vmatpush1.msra.mxu0 0.0
    %1681 = vmatprep.subr.mxu0 0.0
    %1682 = vmatpush1.msra.mxu0 0.0
    %1683 = vmatprep.subr.mxu0 0.0
    %1684 = vmatpush1.msra.mxu0 0.0
    %1685 = vmatprep.subr.mxu0 0.0
    %1686 = vmatpush1.msra.mxu0 0.0
    %1687 = vmatprep.subr.mxu0 0.0
    %1688 = vmatpush1.msra.mxu0 0.0
    %1689 = vmatprep.subr.mxu0 0.0
    %1690 = vmatpush1.msra.mxu0 0.0
    %1691 = vmatprep.subr.mxu0 0.0
    %1692 = vmatpush1.msra.mxu0 0.0
    %1693 = vmatprep.subr.mxu0 0.0
    %1694 = vmatpush1.msra.mxu0 0.0
    %1695 = vmatprep.subr.mxu0 0.0
    %1696 = vmatpush1.msra.mxu0 0.0
    %1697 = vmatprep.subr.mxu0 0.0
    %1698 = vmatpush1.msra.mxu0 0.0
    %1699 = vmatprep.subr.mxu0 0.0
    %1700 = vmatpush1.msra.mxu0 0.0
    %1701 = vmatprep.subr.mxu0 0.0
    %1702 = vmatpush1.msra.mxu0 0.0
    %1703 = vmatprep.subr.mxu0 0.0
    %1704 = vmatpush1.msra.mxu0 0.0
    %1705 = vmatprep.subr.mxu0 0.0
    %1706 = vmatpush1.msra.mxu0 0.0
    %1707 = vmatprep.mubr.f32.mxu0 0.0
    %1708 = vmatmul.mubr.f32.gmra.mrb[0].mxu0 %v1573
    %v1709 = vpop.f32.mrb[0].mxu0
    %v1710 = vadd.f32 0.0, %v1709
    %v1711 = vpop.f32.mrb[0].mxu0
    %v1712 = vadd.f32 0.0, %v1711
    %1713 = vdwg.mxu0
    %1714 = vmatprep.subr.mxu0 %v1582
    %1715 = vmatpush1.msra.mxu0 %v1581
    %1716 = vmatprep.subr.mxu0 %v1586
    %1717 = vmatpush1.msra.mxu0 %v1585
    %1718 = vmatprep.subr.mxu0 %v1590
    %1719 = vmatpush1.msra.mxu0 %v1589
    %1720 = vmatprep.subr.mxu0 %v1594
    %1721 = vmatpush1.msra.mxu0 %v1593
    %1722 = vmatprep.subr.mxu0 %v1598
    %1723 = vmatpush1.msra.mxu0 %v1597
    %1724 = vmatprep.subr.mxu0 %v1602
    %1725 = vmatpush1.msra.mxu0 %v1601
    %1726 = vmatprep.subr.mxu0 %v1606
    %1727 = vmatpush1.msra.mxu0 %v1605
    %1728 = vmatprep.subr.mxu0 %v1610
    %1729 = vmatpush1.msra.mxu0 %v1609
    %1730 = vmatprep.subr.mxu0 %v1614
    %1731 = vmatpush1.msra.mxu0 %v1613
    %1732 = vmatprep.subr.mxu0 %v1618
    %1733 = vmatpush1.msra.mxu0 %v1617
    %1734 = vmatprep.subr.mxu0 %v1622
    %1735 = vmatpush1.msra.mxu0 %v1621
    %1736 = vmatprep.subr.mxu0 %v1626
    %1737 = vmatpush1.msra.mxu0 %v1625
    %1738 = vmatprep.subr.mxu0 %v1630
    %1739 = vmatpush1.msra.mxu0 %v1629
    %1740 = vmatprep.subr.mxu0 %v1634
    %1741 = vmatpush1.msra.mxu0 %v1633
    %1742 = vmatprep.subr.mxu0 %v1638
    %1743 = vmatpush1.msra.mxu0 %v1637
    %1744 = vmatprep.subr.mxu0 %v1642
    %1745 = vmatpush1.msra.mxu0 %v1641
    %1746 = vmatprep.subr.mxu0 0.0
    %1747 = vmatpush1.msra.mxu0 0.0
    %1748 = vmatprep.subr.mxu0 0.0
    %1749 = vmatpush1.msra.mxu0 0.0
    %1750 = vmatprep.subr.mxu0 0.0
    %1751 = vmatpush1.msra.mxu0 0.0
    %1752 = vmatprep.subr.mxu0 0.0
    %1753 = vmatpush1.msra.mxu0 0.0
    %1754 = vmatprep.subr.mxu0 0.0
    %1755 = vmatpush1.msra.mxu0 0.0
    %1756 = vmatprep.subr.mxu0 0.0
    %1757 = vmatpush1.msra.mxu0 0.0
    %1758 = vmatprep.subr.mxu0 0.0
    %1759 = vmatpush1.msra.mxu0 0.0
    %1760 = vmatprep.subr.mxu0 0.0
    %1761 = vmatpush1.msra.mxu0 0.0
    %1762 = vmatprep.subr.mxu0 0.0
    %1763 = vmatpush1.msra.mxu0 0.0
    %1764 = vmatprep.subr.mxu0 0.0
    %1765 = vmatpush1.msra.mxu0 0.0
    %1766 = vmatprep.subr.mxu0 0.0
    %1767 = vmatpush1.msra.mxu0 0.0
    %1768 = vmatprep.subr.mxu0 0.0
    %1769 = vmatpush1.msra.mxu0 0.0
    %1770 = vmatprep.subr.mxu0 0.0
    %1771 = vmatpush1.msra.mxu0 0.0
    %1772 = vmatprep.subr.mxu0 0.0
    %1773 = vmatpush1.msra.mxu0 0.0
    %1774 = vmatprep.subr.mxu0 0.0
    %1775 = vmatpush1.msra.mxu0 0.0
    %1776 = vmatprep.subr.mxu0 0.0
    %1777 = vmatpush1.msra.mxu0 0.0
    %1778 = vmatprep.mubr.f32.mxu0 0.0
    %1779 = vmatmul.mubr.f32.gmra.mrb[0].mxu0 %v1573
    %v1780 = vpop.f32.mrb[0].mxu0
    %v1781 = vadd.f32 0.0, %v1780
    %v1782 = vpop.f32.mrb[0].mxu0
    %v1783 = vadd.f32 0.0, %v1782
    %1784 = vdwg.mxu0
    %v1785 = vadd.f32 %v1575, %v1710
    %v1786 = vadd.f32 %v1576, %v1712
    %v1787 = vadd.f32 %v1577, %v1781
    %v1788 = vadd.f32 %v1578, %v1783
    %v1789 = vxor.u32 %v1785, 2147483648
    %v1790 = vmul.f32 %v1789, 1.442695
    %v1791 = vpow.pop %v1790
    %v1792 = vadd.f32 %v1791, 1.0
    %v1793 = vrcp.pop %v1792
    %v1794 = vmul.f32 1.0, %v1793
    %v1795 = vxor.u32 %v1786, 2147483648
    %v1796 = vmul.f32 %v1795, 1.442695
    %v1797 = vpow.pop %v1796
    %v1798 = vadd.f32 %v1797, 1.0
    %v1799 = vrcp.pop %v1798
    %v1800 = vmul.f32 1.0, %v1799
    %v1801 = vtanh.pop %v1787
    %v1802 = vxor.u32 %v1788, 2147483648
    %v1803 = vmul.f32 %v1802, 1.442695
    %v1804 = vpow.pop %v1803
    %v1805 = vadd.f32 %v1804, 1.0
    %v1806 = vrcp.pop %v1805
    %v1807 = vmul.f32 1.0, %v1806
    %v1808 = vmul.f32 %v1800, %v1571
    %v1809 = vmul.f32 %v1794, %v1801
    %v1810 = vadd.f32 %v1808, %v1809
    %v1811 = vtanh.pop %v1810
    %v1812 = vmul.f32 %v1807, %v1811
    %1813 = vst [vmem:[#allocation3 + $0x28] sm:$0xff] %v1812
    %v1814 = vld [vmem:[#allocation2 + $0xc0] sm:$0xff]
    %v1815 = vld [vmem:[#allocation2 + $0xc8] sm:$0xff]
    %v1816 = vld [vmem:[#allocation2 + $0xd0] sm:$0xff]
    %v1817 = vld [vmem:[#allocation2 + $0xd8] sm:$0xff]
    %v1818 = vld [vmem:[#allocation4] sm:$0xff]
    %v1819 = vld [vmem:[#allocation4 + $0x8] sm:$0xff]
    %v1820 = vld [vmem:[#allocation4 + $0x10] sm:$0xff]
    %v1821 = vld [vmem:[#allocation4 + $0x18] sm:$0xff]
    %v1822 = vld [vmem:[#allocation4 + $0x20] sm:$0xff]
    %v1823 = vld [vmem:[#allocation4 + $0x28] sm:$0xff]
    %v1824 = vld [vmem:[#allocation4 + $0x30] sm:$0xff]
    %v1825 = vld [vmem:[#allocation4 + $0x38] sm:$0xff]
    %v1826 = vld [vmem:[#allocation4 + $0x40] sm:$0xff]
    %v1827 = vld [vmem:[#allocation4 + $0x48] sm:$0xff]
    %v1828 = vld [vmem:[#allocation4 + $0x50] sm:$0xff]
    %v1829 = vld [vmem:[#allocation4 + $0x58] sm:$0xff]
    %v1830 = vld [vmem:[#allocation4 + $0x60] sm:$0xff]
    %v1831 = vld [vmem:[#allocation4 + $0x68] sm:$0xff]
    %v1832 = vld [vmem:[#allocation4 + $0x70] sm:$0xff]
    %v1833 = vld [vmem:[#allocation4 + $0x78] sm:$0xff]
    %v1834 = vld [vmem:[#allocation4 + $0x80] sm:$0xff]
    %v1835 = vld [vmem:[#allocation4 + $0x88] sm:$0xff]
    %v1836 = vld [vmem:[#allocation4 + $0x90] sm:$0xff]
    %v1837 = vld [vmem:[#allocation4 + $0x98] sm:$0xff]
    %v1838 = vld [vmem:[#allocation4 + $0xa0] sm:$0xff]
    %v1839 = vld [vmem:[#allocation4 + $0xa8] sm:$0xff]
    %v1840 = vld [vmem:[#allocation4 + $0xb0] sm:$0xff]
    %v1841 = vld [vmem:[#allocation4 + $0xb8] sm:$0xff]
    %v1842 = vld [vmem:[#allocation4 + $0xc0] sm:$0xff]
    %v1843 = vld [vmem:[#allocation4 + $0xc8] sm:$0xff]
    %v1844 = vld [vmem:[#allocation4 + $0xd0] sm:$0xff]
    %v1845 = vld [vmem:[#allocation4 + $0xd8] sm:$0xff]
    %v1846 = vld [vmem:[#allocation4 + $0xe0] sm:$0xff]
    %v1847 = vld [vmem:[#allocation4 + $0xe8] sm:$0xff]
    %v1848 = vld [vmem:[#allocation4 + $0xf0] sm:$0xff]
    %v1849 = vld [vmem:[#allocation4 + $0xf8] sm:$0xff]
    %v1850 = vld [vmem:[#allocation4 + $0x100] sm:$0xff]
    %v1851 = vld [vmem:[#allocation4 + $0x108] sm:$0xff]
    %v1852 = vld [vmem:[#allocation4 + $0x110] sm:$0xff]
    %v1853 = vld [vmem:[#allocation4 + $0x118] sm:$0xff]
    %v1854 = vld [vmem:[#allocation4 + $0x120] sm:$0xff]
    %v1855 = vld [vmem:[#allocation4 + $0x128] sm:$0xff]
    %v1856 = vld [vmem:[#allocation4 + $0x130] sm:$0xff]
    %v1857 = vld [vmem:[#allocation4 + $0x138] sm:$0xff]
    %v1858 = vld [vmem:[#allocation4 + $0x140] sm:$0xff]
    %v1859 = vld [vmem:[#allocation4 + $0x148] sm:$0xff]
    %v1860 = vld [vmem:[#allocation4 + $0x150] sm:$0xff]
    %v1861 = vld [vmem:[#allocation4 + $0x158] sm:$0xff]
    %v1862 = vld [vmem:[#allocation4 + $0x160] sm:$0xff]
    %v1863 = vld [vmem:[#allocation4 + $0x168] sm:$0xff]
    %v1864 = vld [vmem:[#allocation4 + $0x170] sm:$0xff]
    %v1865 = vld [vmem:[#allocation4 + $0x178] sm:$0xff]
    %v1866 = vld [vmem:[#allocation4 + $0x180] sm:$0xff]
    %v1867 = vld [vmem:[#allocation4 + $0x188] sm:$0xff]
    %v1868 = vld [vmem:[#allocation4 + $0x190] sm:$0xff]
    %v1869 = vld [vmem:[#allocation4 + $0x198] sm:$0xff]
    %v1870 = vld [vmem:[#allocation4 + $0x1a0] sm:$0xff]
    %v1871 = vld [vmem:[#allocation4 + $0x1a8] sm:$0xff]
    %v1872 = vld [vmem:[#allocation4 + $0x1b0] sm:$0xff]
    %v1873 = vld [vmem:[#allocation4 + $0x1b8] sm:$0xff]
    %v1874 = vld [vmem:[#allocation4 + $0x1c0] sm:$0xff]
    %v1875 = vld [vmem:[#allocation4 + $0x1c8] sm:$0xff]
    %v1876 = vld [vmem:[#allocation4 + $0x1d0] sm:$0xff]
    %v1877 = vld [vmem:[#allocation4 + $0x1d8] sm:$0xff]
    %v1878 = vld [vmem:[#allocation4 + $0x1e0] sm:$0xff]
    %v1879 = vld [vmem:[#allocation4 + $0x1e8] sm:$0xff]
    %v1880 = vld [vmem:[#allocation4 + $0x1f0] sm:$0xff]
    %v1881 = vld [vmem:[#allocation4 + $0x1f8] sm:$0xff]
    %1882 = vmatprep.subr.mxu0 %v1819
    %1883 = vmatpush1.msra.mxu0 %v1818
    %1884 = vmatprep.subr.mxu0 %v1823
    %1885 = vmatpush1.msra.mxu0 %v1822
    %1886 = vmatprep.subr.mxu0 %v1827
    %1887 = vmatpush1.msra.mxu0 %v1826
    %1888 = vmatprep.subr.mxu0 %v1831
    %1889 = vmatpush1.msra.mxu0 %v1830
    %1890 = vmatprep.subr.mxu0 %v1835
    %1891 = vmatpush1.msra.mxu0 %v1834
    %1892 = vmatprep.subr.mxu0 %v1839
    %1893 = vmatpush1.msra.mxu0 %v1838
    %1894 = vmatprep.subr.mxu0 %v1843
    %1895 = vmatpush1.msra.mxu0 %v1842
    %1896 = vmatprep.subr.mxu0 %v1847
    %1897 = vmatpush1.msra.mxu0 %v1846
    %1898 = vmatprep.subr.mxu0 %v1851
    %1899 = vmatpush1.msra.mxu0 %v1850
    %1900 = vmatprep.subr.mxu0 %v1855
    %1901 = vmatpush1.msra.mxu0 %v1854
    %1902 = vmatprep.subr.mxu0 %v1859
    %1903 = vmatpush1.msra.mxu0 %v1858
    %1904 = vmatprep.subr.mxu0 %v1863
    %1905 = vmatpush1.msra.mxu0 %v1862
    %1906 = vmatprep.subr.mxu0 %v1867
    %1907 = vmatpush1.msra.mxu0 %v1866
    %1908 = vmatprep.subr.mxu0 %v1871
    %1909 = vmatpush1.msra.mxu0 %v1870
    %1910 = vmatprep.subr.mxu0 %v1875
    %1911 = vmatpush1.msra.mxu0 %v1874
    %1912 = vmatprep.subr.mxu0 %v1879
    %1913 = vmatpush1.msra.mxu0 %v1878
    %1914 = vmatprep.subr.mxu0 0.0
    %1915 = vmatpush1.msra.mxu0 0.0
    %1916 = vmatprep.subr.mxu0 0.0
    %1917 = vmatpush1.msra.mxu0 0.0
    %1918 = vmatprep.subr.mxu0 0.0
    %1919 = vmatpush1.msra.mxu0 0.0
    %1920 = vmatprep.subr.mxu0 0.0
    %1921 = vmatpush1.msra.mxu0 0.0
    %1922 = vmatprep.subr.mxu0 0.0
    %1923 = vmatpush1.msra.mxu0 0.0
    %1924 = vmatprep.subr.mxu0 0.0
    %1925 = vmatpush1.msra.mxu0 0.0
    %1926 = vmatprep.subr.mxu0 0.0
    %1927 = vmatpush1.msra.mxu0 0.0
    %1928 = vmatprep.subr.mxu0 0.0
    %1929 = vmatpush1.msra.mxu0 0.0
    %1930 = vmatprep.subr.mxu0 0.0
    %1931 = vmatpush1.msra.mxu0 0.0
    %1932 = vmatprep.subr.mxu0 0.0
    %1933 = vmatpush1.msra.mxu0 0.0
    %1934 = vmatprep.subr.mxu0 0.0
    %1935 = vmatpush1.msra.mxu0 0.0
    %1936 = vmatprep.subr.mxu0 0.0
    %1937 = vmatpush1.msra.mxu0 0.0
    %1938 = vmatprep.subr.mxu0 0.0
    %1939 = vmatpush1.msra.mxu0 0.0
    %1940 = vmatprep.subr.mxu0 0.0
    %1941 = vmatpush1.msra.mxu0 0.0
    %1942 = vmatprep.subr.mxu0 0.0
    %1943 = vmatpush1.msra.mxu0 0.0
    %1944 = vmatprep.subr.mxu0 0.0
    %1945 = vmatpush1.msra.mxu0 0.0
    %1946 = vmatprep.mubr.f32.mxu0 0.0
    %1947 = vmatmul.mubr.f32.gmra.mrb[0].mxu0 %v1812
    %v1948 = vpop.f32.mrb[0].mxu0
    %v1949 = vadd.f32 0.0, %v1948
    %v1950 = vpop.f32.mrb[0].mxu0
    %v1951 = vadd.f32 0.0, %v1950
    %1952 = vdwg.mxu0
    %1953 = vmatprep.subr.mxu0 %v1821
    %1954 = vmatpush1.msra.mxu0 %v1820
    %1955 = vmatprep.subr.mxu0 %v1825
    %1956 = vmatpush1.msra.mxu0 %v1824
    %1957 = vmatprep.subr.mxu0 %v1829
    %1958 = vmatpush1.msra.mxu0 %v1828
    %1959 = vmatprep.subr.mxu0 %v1833
    %1960 = vmatpush1.msra.mxu0 %v1832
    %1961 = vmatprep.subr.mxu0 %v1837
    %1962 = vmatpush1.msra.mxu0 %v1836
    %1963 = vmatprep.subr.mxu0 %v1841
    %1964 = vmatpush1.msra.mxu0 %v1840
    %1965 = vmatprep.subr.mxu0 %v1845
    %1966 = vmatpush1.msra.mxu0 %v1844
    %1967 = vmatprep.subr.mxu0 %v1849
    %1968 = vmatpush1.msra.mxu0 %v1848
    %1969 = vmatprep.subr.mxu0 %v1853
    %1970 = vmatpush1.msra.mxu0 %v1852
    %1971 = vmatprep.subr.mxu0 %v1857
    %1972 = vmatpush1.msra.mxu0 %v1856
    %1973 = vmatprep.subr.mxu0 %v1861
    %1974 = vmatpush1.msra.mxu0 %v1860
    %1975 = vmatprep.subr.mxu0 %v1865
    %1976 = vmatpush1.msra.mxu0 %v1864
    %1977 = vmatprep.subr.mxu0 %v1869
    %1978 = vmatpush1.msra.mxu0 %v1868
    %1979 = vmatprep.subr.mxu0 %v1873
    %1980 = vmatpush1.msra.mxu0 %v1872
    %1981 = vmatprep.subr.mxu0 %v1877
    %1982 = vmatpush1.msra.mxu0 %v1876
    %1983 = vmatprep.subr.mxu0 %v1881
    %1984 = vmatpush1.msra.mxu0 %v1880
    %1985 = vmatprep.subr.mxu0 0.0
    %1986 = vmatpush1.msra.mxu0 0.0
    %1987 = vmatprep.subr.mxu0 0.0
    %1988 = vmatpush1.msra.mxu0 0.0
    %1989 = vmatprep.subr.mxu0 0.0
    %1990 = vmatpush1.msra.mxu0 0.0
    %1991 = vmatprep.subr.mxu0 0.0
    %1992 = vmatpush1.msra.mxu0 0.0
    %1993 = vmatprep.subr.mxu0 0.0
    %1994 = vmatpush1.msra.mxu0 0.0
    %1995 = vmatprep.subr.mxu0 0.0
    %1996 = vmatpush1.msra.mxu0 0.0
    %1997 = vmatprep.subr.mxu0 0.0
    %1998 = vmatpush1.msra.mxu0 0.0
    %1999 = vmatprep.subr.mxu0 0.0
    %2000 = vmatpush1.msra.mxu0 0.0
    %2001 = vmatprep.subr.mxu0 0.0
    %2002 = vmatpush1.msra.mxu0 0.0
    %2003 = vmatprep.subr.mxu0 0.0
    %2004 = vmatpush1.msra.mxu0 0.0
    %2005 = vmatprep.subr.mxu0 0.0
    %2006 = vmatpush1.msra.mxu0 0.0
    %2007 = vmatprep.subr.mxu0 0.0
    %2008 = vmatpush1.msra.mxu0 0.0
    %2009 = vmatprep.subr.mxu0 0.0
    %2010 = vmatpush1.msra.mxu0 0.0
    %2011 = vmatprep.subr.mxu0 0.0
    %2012 = vmatpush1.msra.mxu0 0.0
    %2013 = vmatprep.subr.mxu0 0.0
    %2014 = vmatpush1.msra.mxu0 0.0
    %2015 = vmatprep.subr.mxu0 0.0
    %2016 = vmatpush1.msra.mxu0 0.0
    %2017 = vmatprep.mubr.f32.mxu0 0.0
    %2018 = vmatmul.mubr.f32.gmra.mrb[0].mxu0 %v1812
    %v2019 = vpop.f32.mrb[0].mxu0
    %v2020 = vadd.f32 0.0, %v2019
    %v2021 = vpop.f32.mrb[0].mxu0
    %v2022 = vadd.f32 0.0, %v2021
    %2023 = vdwg.mxu0
    %v2024 = vadd.f32 %v1814, %v1949
    %v2025 = vadd.f32 %v1815, %v1951
    %v2026 = vadd.f32 %v1816, %v2020
    %v2027 = vadd.f32 %v1817, %v2022
    %v2028 = vxor.u32 %v2024, 2147483648
    %v2029 = vmul.f32 %v2028, 1.442695
    %v2030 = vpow.pop %v2029
    %v2031 = vadd.f32 %v2030, 1.0
    %v2032 = vrcp.pop %v2031
    %v2033 = vmul.f32 1.0, %v2032
    %v2034 = vxor.u32 %v2025, 2147483648
    %v2035 = vmul.f32 %v2034, 1.442695
    %v2036 = vpow.pop %v2035
    %v2037 = vadd.f32 %v2036, 1.0
    %v2038 = vrcp.pop %v2037
    %v2039 = vmul.f32 1.0, %v2038
    %v2040 = vtanh.pop %v2026
    %v2041 = vxor.u32 %v2027, 2147483648
    %v2042 = vmul.f32 %v2041, 1.442695
    %v2043 = vpow.pop %v2042
    %v2044 = vadd.f32 %v2043, 1.0
    %v2045 = vrcp.pop %v2044
    %v2046 = vmul.f32 1.0, %v2045
    %v2047 = vmul.f32 %v2039, %v1810
    %v2048 = vmul.f32 %v2033, %v2040
    %v2049 = vadd.f32 %v2047, %v2048
    %v2050 = vtanh.pop %v2049
    %v2051 = vmul.f32 %v2046, %v2050
    %2052 = vst [vmem:[#allocation3 + $0x30] sm:$0xff] %v2051
    %v2053 = vld [vmem:[#allocation2 + $0xe0] sm:$0xff]
    %v2054 = vld [vmem:[#allocation2 + $0xe8] sm:$0xff]
    %v2055 = vld [vmem:[#allocation2 + $0xf0] sm:$0xff]
    %v2056 = vld [vmem:[#allocation2 + $0xf8] sm:$0xff]
    %v2057 = vld [vmem:[#allocation4] sm:$0xff]
    %v2058 = vld [vmem:[#allocation4 + $0x8] sm:$0xff]
    %v2059 = vld [vmem:[#allocation4 + $0x10] sm:$0xff]
    %v2060 = vld [vmem:[#allocation4 + $0x18] sm:$0xff]
    %v2061 = vld [vmem:[#allocation4 + $0x20] sm:$0xff]
    %v2062 = vld [vmem:[#allocation4 + $0x28] sm:$0xff]
    %v2063 = vld [vmem:[#allocation4 + $0x30] sm:$0xff]
    %v2064 = vld [vmem:[#allocation4 + $0x38] sm:$0xff]
    %v2065 = vld [vmem:[#allocation4 + $0x40] sm:$0xff]
    %v2066 = vld [vmem:[#allocation4 + $0x48] sm:$0xff]
    %v2067 = vld [vmem:[#allocation4 + $0x50] sm:$0xff]
    %v2068 = vld [vmem:[#allocation4 + $0x58] sm:$0xff]
    %v2069 = vld [vmem:[#allocation4 + $0x60] sm:$0xff]
    %v2070 = vld [vmem:[#allocation4 + $0x68] sm:$0xff]
    %v2071 = vld [vmem:[#allocation4 + $0x70] sm:$0xff]
    %v2072 = vld [vmem:[#allocation4 + $0x78] sm:$0xff]
    %v2073 = vld [vmem:[#allocation4 + $0x80] sm:$0xff]
    %v2074 = vld [vmem:[#allocation4 + $0x88] sm:$0xff]
    %v2075 = vld [vmem:[#allocation4 + $0x90] sm:$0xff]
    %v2076 = vld [vmem:[#allocation4 + $0x98] sm:$0xff]
    %v2077 = vld [vmem:[#allocation4 + $0xa0] sm:$0xff]
    %v2078 = vld [vmem:[#allocation4 + $0xa8] sm:$0xff]
    %v2079 = vld [vmem:[#allocation4 + $0xb0] sm:$0xff]
    %v2080 = vld [vmem:[#allocation4 + $0xb8] sm:$0xff]
    %v2081 = vld [vmem:[#allocation4 + $0xc0] sm:$0xff]
    %v2082 = vld [vmem:[#allocation4 + $0xc8] sm:$0xff]
    %v2083 = vld [vmem:[#allocation4 + $0xd0] sm:$0xff]
    %v2084 = vld [vmem:[#allocation4 + $0xd8] sm:$0xff]
    %v2085 = vld [vmem:[#allocation4 + $0xe0] sm:$0xff]
    %v2086 = vld [vmem:[#allocation4 + $0xe8] sm:$0xff]
    %v2087 = vld [vmem:[#allocation4 + $0xf0] sm:$0xff]
    %v2088 = vld [vmem:[#allocation4 + $0xf8] sm:$0xff]
    %v2089 = vld [vmem:[#allocation4 + $0x100] sm:$0xff]
    %v2090 = vld [vmem:[#allocation4 + $0x108] sm:$0xff]
    %v2091 = vld [vmem:[#allocation4 + $0x110] sm:$0xff]
    %v2092 = vld [vmem:[#allocation4 + $0x118] sm:$0xff]
    %v2093 = vld [vmem:[#allocation4 + $0x120] sm:$0xff]
    %v2094 = vld [vmem:[#allocation4 + $0x128] sm:$0xff]
    %v2095 = vld [vmem:[#allocation4 + $0x130] sm:$0xff]
    %v2096 = vld [vmem:[#allocation4 + $0x138] sm:$0xff]
    %v2097 = vld [vmem:[#allocation4 + $0x140] sm:$0xff]
    %v2098 = vld [vmem:[#allocation4 + $0x148] sm:$0xff]
    %v2099 = vld [vmem:[#allocation4 + $0x150] sm:$0xff]
    %v2100 = vld [vmem:[#allocation4 + $0x158] sm:$0xff]
    %v2101 = vld [vmem:[#allocation4 + $0x160] sm:$0xff]
    %v2102 = vld [vmem:[#allocation4 + $0x168] sm:$0xff]
    %v2103 = vld [vmem:[#allocation4 + $0x170] sm:$0xff]
    %v2104 = vld [vmem:[#allocation4 + $0x178] sm:$0xff]
    %v2105 = vld [vmem:[#allocation4 + $0x180] sm:$0xff]
    %v2106 = vld [vmem:[#allocation4 + $0x188] sm:$0xff]
    %v2107 = vld [vmem:[#allocation4 + $0x190] sm:$0xff]
    %v2108 = vld [vmem:[#allocation4 + $0x198] sm:$0xff]
    %v2109 = vld [vmem:[#allocation4 + $0x1a0] sm:$0xff]
    %v2110 = vld [vmem:[#allocation4 + $0x1a8] sm:$0xff]
    %v2111 = vld [vmem:[#allocation4 + $0x1b0] sm:$0xff]
    %v2112 = vld [vmem:[#allocation4 + $0x1b8] sm:$0xff]
    %v2113 = vld [vmem:[#allocation4 + $0x1c0] sm:$0xff]
    %v2114 = vld [vmem:[#allocation4 + $0x1c8] sm:$0xff]
    %v2115 = vld [vmem:[#allocation4 + $0x1d0] sm:$0xff]
    %v2116 = vld [vmem:[#allocation4 + $0x1d8] sm:$0xff]
    %v2117 = vld [vmem:[#allocation4 + $0x1e0] sm:$0xff]
    %v2118 = vld [vmem:[#allocation4 + $0x1e8] sm:$0xff]
    %v2119 = vld [vmem:[#allocation4 + $0x1f0] sm:$0xff]
    %v2120 = vld [vmem:[#allocation4 + $0x1f8] sm:$0xff]
    %2121 = vmatprep.subr.mxu0 %v2058
    %2122 = vmatpush1.msra.mxu0 %v2057
    %2123 = vmatprep.subr.mxu0 %v2062
    %2124 = vmatpush1.msra.mxu0 %v2061
    %2125 = vmatprep.subr.mxu0 %v2066
    %2126 = vmatpush1.msra.mxu0 %v2065
    %2127 = vmatprep.subr.mxu0 %v2070
    %2128 = vmatpush1.msra.mxu0 %v2069
    %2129 = vmatprep.subr.mxu0 %v2074
    %2130 = vmatpush1.msra.mxu0 %v2073
    %2131 = vmatprep.subr.mxu0 %v2078
    %2132 = vmatpush1.msra.mxu0 %v2077
    %2133 = vmatprep.subr.mxu0 %v2082
    %2134 = vmatpush1.msra.mxu0 %v2081
    %2135 = vmatprep.subr.mxu0 %v2086
    %2136 = vmatpush1.msra.mxu0 %v2085
    %2137 = vmatprep.subr.mxu0 %v2090
    %2138 = vmatpush1.msra.mxu0 %v2089
    %2139 = vmatprep.subr.mxu0 %v2094
    %2140 = vmatpush1.msra.mxu0 %v2093
    %2141 = vmatprep.subr.mxu0 %v2098
    %2142 = vmatpush1.msra.mxu0 %v2097
    %2143 = vmatprep.subr.mxu0 %v2102
    %2144 = vmatpush1.msra.mxu0 %v2101
    %2145 = vmatprep.subr.mxu0 %v2106
    %2146 = vmatpush1.msra.mxu0 %v2105
    %2147 = vmatprep.subr.mxu0 %v2110
    %2148 = vmatpush1.msra.mxu0 %v2109
    %2149 = vmatprep.subr.mxu0 %v2114
    %2150 = vmatpush1.msra.mxu0 %v2113
    %2151 = vmatprep.subr.mxu0 %v2118
    %2152 = vmatpush1.msra.mxu0 %v2117
    %2153 = vmatprep.subr.mxu0 0.0
    %2154 = vmatpush1.msra.mxu0 0.0
    %2155 = vmatprep.subr.mxu0 0.0
    %2156 = vmatpush1.msra.mxu0 0.0
    %2157 = vmatprep.subr.mxu0 0.0
    %2158 = vmatpush1.msra.mxu0 0.0
    %2159 = vmatprep.subr.mxu0 0.0
    %2160 = vmatpush1.msra.mxu0 0.0
    %2161 = vmatprep.subr.mxu0 0.0
    %2162 = vmatpush1.msra.mxu0 0.0
    %2163 = vmatprep.subr.mxu0 0.0
    %2164 = vmatpush1.msra.mxu0 0.0
    %2165 = vmatprep.subr.mxu0 0.0
    %2166 = vmatpush1.msra.mxu0 0.0
    %2167 = vmatprep.subr.mxu0 0.0
    %2168 = vmatpush1.msra.mxu0 0.0
    %2169 = vmatprep.subr.mxu0 0.0
    %2170 = vmatpush1.msra.mxu0 0.0
    %2171 = vmatprep.subr.mxu0 0.0
    %2172 = vmatpush1.msra.mxu0 0.0
    %2173 = vmatprep.subr.mxu0 0.0
    %2174 = vmatpush1.msra.mxu0 0.0
    %2175 = vmatprep.subr.mxu0 0.0
    %2176 = vmatpush1.msra.mxu0 0.0
    %2177 = vmatprep.subr.mxu0 0.0
    %2178 = vmatpush1.msra.mxu0 0.0
    %2179 = vmatprep.subr.mxu0 0.0
    %2180 = vmatpush1.msra.mxu0 0.0
    %2181 = vmatprep.subr.mxu0 0.0
    %2182 = vmatpush1.msra.mxu0 0.0
    %2183 = vmatprep.subr.mxu0 0.0
    %2184 = vmatpush1.msra.mxu0 0.0
    %2185 = vmatprep.mubr.f32.mxu0 0.0
    %2186 = vmatmul.mubr.f32.gmra.mrb[0].mxu0 %v2051
    %v2187 = vpop.f32.mrb[0].mxu0
    %v2188 = vadd.f32 0.0, %v2187
    %v2189 = vpop.f32.mrb[0].mxu0
    %v2190 = vadd.f32 0.0, %v2189
    %2191 = vdwg.mxu0
    %2192 = vmatprep.subr.mxu0 %v2060
    %2193 = vmatpush1.msra.mxu0 %v2059
    %2194 = vmatprep.subr.mxu0 %v2064
    %2195 = vmatpush1.msra.mxu0 %v2063
    %2196 = vmatprep.subr.mxu0 %v2068
    %2197 = vmatpush1.msra.mxu0 %v2067
    %2198 = vmatprep.subr.mxu0 %v2072
    %2199 = vmatpush1.msra.mxu0 %v2071
    %2200 = vmatprep.subr.mxu0 %v2076
    %2201 = vmatpush1.msra.mxu0 %v2075
    %2202 = vmatprep.subr.mxu0 %v2080
    %2203 = vmatpush1.msra.mxu0 %v2079
    %2204 = vmatprep.subr.mxu0 %v2084
    %2205 = vmatpush1.msra.mxu0 %v2083
    %2206 = vmatprep.subr.mxu0 %v2088
    %2207 = vmatpush1.msra.mxu0 %v2087
    %2208 = vmatprep.subr.mxu0 %v2092
    %2209 = vmatpush1.msra.mxu0 %v2091
    %2210 = vmatprep.subr.mxu0 %v2096
    %2211 = vmatpush1.msra.mxu0 %v2095
    %2212 = vmatprep.subr.mxu0 %v2100
    %2213 = vmatpush1.msra.mxu0 %v2099
    %2214 = vmatprep.subr.mxu0 %v2104
    %2215 = vmatpush1.msra.mxu0 %v2103
    %2216 = vmatprep.subr.mxu0 %v2108
    %2217 = vmatpush1.msra.mxu0 %v2107
    %2218 = vmatprep.subr.mxu0 %v2112
    %2219 = vmatpush1.msra.mxu0 %v2111
    %2220 = vmatprep.subr.mxu0 %v2116
    %2221 = vmatpush1.msra.mxu0 %v2115
    %2222 = vmatprep.subr.mxu0 %v2120
    %2223 = vmatpush1.msra.mxu0 %v2119
    %2224 = vmatprep.subr.mxu0 0.0
    %2225 = vmatpush1.msra.mxu0 0.0
    %2226 = vmatprep.subr.mxu0 0.0
    %2227 = vmatpush1.msra.mxu0 0.0
    %2228 = vmatprep.subr.mxu0 0.0
    %2229 = vmatpush1.msra.mxu0 0.0
    %2230 = vmatprep.subr.mxu0 0.0
    %2231 = vmatpush1.msra.mxu0 0.0
    %2232 = vmatprep.subr.mxu0 0.0
    %2233 = vmatpush1.msra.mxu0 0.0
    %2234 = vmatprep.subr.mxu0 0.0
    %2235 = vmatpush1.msra.mxu0 0.0
    %2236 = vmatprep.subr.mxu0 0.0
    %2237 = vmatpush1.msra.mxu0 0.0
    %2238 = vmatprep.subr.mxu0 0.0
    %2239 = vmatpush1.msra.mxu0 0.0
    %2240 = vmatprep.subr.mxu0 0.0
    %2241 = vmatpush1.msra.mxu0 0.0
    %2242 = vmatprep.subr.mxu0 0.0
    %2243 = vmatpush1.msra.mxu0 0.0
    %2244 = vmatprep.subr.mxu0 0.0
    %2245 = vmatpush1.msra.mxu0 0.0
    %2246 = vmatprep.subr.mxu0 0.0
    %2247 = vmatpush1.msra.mxu0 0.0
    %2248 = vmatprep.subr.mxu0 0.0
    %2249 = vmatpush1.msra.mxu0 0.0
    %2250 = vmatprep.subr.mxu0 0.0
    %2251 = vmatpush1.msra.mxu0 0.0
    %2252 = vmatprep.subr.mxu0 0.0
    %2253 = vmatpush1.msra.mxu0 0.0
    %2254 = vmatprep.subr.mxu0 0.0
    %2255 = vmatpush1.msra.mxu0 0.0
    %2256 = vmatprep.mubr.f32.mxu0 0.0
    %2257 = vmatmul.mubr.f32.gmra.mrb[0].mxu0 %v2051
    %v2258 = vpop.f32.mrb[0].mxu0
    %v2259 = vadd.f32 0.0, %v2258
    %v2260 = vpop.f32.mrb[0].mxu0
    %v2261 = vadd.f32 0.0, %v2260
    %2262 = vdwg.mxu0
    %v2263 = vadd.f32 %v2053, %v2188
    %v2264 = vadd.f32 %v2054, %v2190
    %v2265 = vadd.f32 %v2055, %v2259
    %v2266 = vadd.f32 %v2056, %v2261
    %v2267 = vxor.u32 %v2263, 2147483648
    %v2268 = vmul.f32 %v2267, 1.442695
    %v2269 = vpow.pop %v2268
    %v2270 = vadd.f32 %v2269, 1.0
    %v2271 = vrcp.pop %v2270
    %v2272 = vmul.f32 1.0, %v2271
    %v2273 = vxor.u32 %v2264, 2147483648
    %v2274 = vmul.f32 %v2273, 1.442695
    %v2275 = vpow.pop %v2274
    %v2276 = vadd.f32 %v2275, 1.0
    %v2277 = vrcp.pop %v2276
    %v2278 = vmul.f32 1.0, %v2277
    %v2279 = vtanh.pop %v2265
    %v2280 = vxor.u32 %v2266, 2147483648
    %v2281 = vmul.f32 %v2280, 1.442695
    %v2282 = vpow.pop %v2281
    %v2283 = vadd.f32 %v2282, 1.0
    %v2284 = vrcp.pop %v2283
    %v2285 = vmul.f32 1.0, %v2284
    %v2286 = vmul.f32 %v2278, %v2049
    %v2287 = vmul.f32 %v2272, %v2279
    %v2288 = vadd.f32 %v2286, %v2287
    %v2289 = vtanh.pop %v2288
    %v2290 = vmul.f32 %v2285, %v2289
    %2291 = vst [vmem:[#allocation3 + $0x38] sm:$0xff] %v2290
    %v2292 = vld [vmem:[#allocation3] sm:$0xff]
    %v2293 = vld [vmem:[#allocation3 + $0x8] sm:$0xff]
    %v2294 = vld [vmem:[#allocation3 + $0x10] sm:$0xff]
    %v2295 = vld [vmem:[#allocation3 + $0x18] sm:$0xff]
    %v2296 = vld [vmem:[#allocation3 + $0x20] sm:$0xff]
    %v2297 = vld [vmem:[#allocation3 + $0x28] sm:$0xff]
    %v2298 = vld [vmem:[#allocation3 + $0x30] sm:$0xff]
    %v2299 = vld [vmem:[#allocation3 + $0x38] sm:$0xff]
    %v2300 = vld [vmem:[#allocation7] sm:$0xff]
    %v2301 = vld [vmem:[#allocation7 + $0x8] sm:$0xff]
    %v2302 = vld [vmem:[#allocation7 + $0x10] sm:$0xff]
    %v2303 = vld [vmem:[#allocation7 + $0x18] sm:$0xff]
    %v2304 = vld [vmem:[#allocation7 + $0x20] sm:$0xff]
    %v2305 = vld [vmem:[#allocation7 + $0x28] sm:$0xff]
    %v2306 = vld [vmem:[#allocation7 + $0x30] sm:$0xff]
    %v2307 = vld [vmem:[#allocation7 + $0x38] sm:$0xff]
    %v2308 = vld [vmem:[#allocation7 + $0x40] sm:$0xff]
    %v2309 = vld [vmem:[#allocation7 + $0x48] sm:$0xff]
    %v2310 = vld [vmem:[#allocation7 + $0x50] sm:$0xff]
    %v2311 = vld [vmem:[#allocation7 + $0x58] sm:$0xff]
    %v2312 = vld [vmem:[#allocation7 + $0x60] sm:$0xff]
    %v2313 = vld [vmem:[#allocation7 + $0x68] sm:$0xff]
    %v2314 = vld [vmem:[#allocation7 + $0x70] sm:$0xff]
    %v2315 = vld [vmem:[#allocation7 + $0x78] sm:$0xff]
    %v2316 = vld [vmem:[%s5] sm:$0x1]
    %v2318 = vlaneseq
    %v2319 = vshrl.u32 %v2318, 7
    %v2320 = vsub.s32 0, %v2319
    %v2321 = vrot.slane %v2316, %v2320
    %2323 = vmatprep.subr.mxu0 0.0
    %2324 = vmatpush1.msra.mxu0 %v2300
    %2325 = vmatprep.subr.mxu0 0.0
    %2326 = vmatpush1.msra.mxu0 %v2301
    %2327 = vmatprep.subr.mxu0 0.0
    %2328 = vmatpush1.msra.mxu0 %v2302
    %2329 = vmatprep.subr.mxu0 0.0
    %2330 = vmatpush1.msra.mxu0 %v2303
    %2331 = vmatprep.subr.mxu0 0.0
    %2332 = vmatpush1.msra.mxu0 %v2304
    %2333 = vmatprep.subr.mxu0 0.0
    %2334 = vmatpush1.msra.mxu0 %v2305
    %2335 = vmatprep.subr.mxu0 0.0
    %2336 = vmatpush1.msra.mxu0 %v2306
    %2337 = vmatprep.subr.mxu0 0.0
    %2338 = vmatpush1.msra.mxu0 %v2307
    %2339 = vmatprep.subr.mxu0 0.0
    %2340 = vmatpush1.msra.mxu0 %v2308
    %2341 = vmatprep.subr.mxu0 0.0
    %2342 = vmatpush1.msra.mxu0 %v2309
    %2343 = vmatprep.subr.mxu0 0.0
    %2344 = vmatpush1.msra.mxu0 %v2310
    %2345 = vmatprep.subr.mxu0 0.0
    %2346 = vmatpush1.msra.mxu0 %v2311
    %2347 = vmatprep.subr.mxu0 0.0
    %2348 = vmatpush1.msra.mxu0 %v2312
    %2349 = vmatprep.subr.mxu0 0.0
    %2350 = vmatpush1.msra.mxu0 %v2313
    %2351 = vmatprep.subr.mxu0 0.0
    %2352 = vmatpush1.msra.mxu0 %v2314
    %2353 = vmatprep.subr.mxu0 0.0
    %2354 = vmatpush1.msra.mxu0 %v2315
    %2355 = vmatprep.subr.mxu0 0.0
    %2356 = vmatpush1.msra.mxu0 0.0
    %2357 = vmatprep.subr.mxu0 0.0
    %2358 = vmatpush1.msra.mxu0 0.0
    %2359 = vmatprep.subr.mxu0 0.0
    %2360 = vmatpush1.msra.mxu0 0.0
    %2361 = vmatprep.subr.mxu0 0.0
    %2362 = vmatpush1.msra.mxu0 0.0
    %2363 = vmatprep.subr.mxu0 0.0
    %2364 = vmatpush1.msra.mxu0 0.0
    %2365 = vmatprep.subr.mxu0 0.0
    %2366 = vmatpush1.msra.mxu0 0.0
    %2367 = vmatprep.subr.mxu0 0.0
    %2368 = vmatpush1.msra.mxu0 0.0
    %2369 = vmatprep.subr.mxu0 0.0
    %2370 = vmatpush1.msra.mxu0 0.0
    %2371 = vmatprep.subr.mxu0 0.0
    %2372 = vmatpush1.msra.mxu0 0.0
    %2373 = vmatprep.subr.mxu0 0.0
    %2374 = vmatpush1.msra.mxu0 0.0
    %2375 = vmatprep.subr.mxu0 0.0
    %2376 = vmatpush1.msra.mxu0 0.0
    %2377 = vmatprep.subr.mxu0 0.0
    %2378 = vmatpush1.msra.mxu0 0.0
    %2379 = vmatprep.subr.mxu0 0.0
    %2380 = vmatpush1.msra.mxu0 0.0
    %2381 = vmatprep.subr.mxu0 0.0
    %2382 = vmatpush1.msra.mxu0 0.0
    %2383 = vmatprep.subr.mxu0 0.0
    %2384 = vmatpush1.msra.mxu0 0.0
    %2385 = vmatprep.subr.mxu0 0.0
    %2386 = vmatpush1.msra.mxu0 0.0
    %2387 = vmatprep.mubr.f32.mxu0 0.0
    %2388 = vmatmul.mubr.f32.gmra.mrb[0].mxu0 %v2292
    %v2389 = vpop.f32.mrb[0].mxu0
    %v2390 = vadd.f32 %v2321, %v2389
    %v2391 = vpop.f32.mrb[0].mxu0
    %2392 = vmatprep.mubr.f32.mxu0 0.0
    %2393 = vmatmul.mubr.f32.gmra.mrb[0].mxu0 %v2293
    %v2394 = vpop.f32.mrb[0].mxu0
    %v2395 = vadd.f32 %v2321, %v2394
    %v2396 = vpop.f32.mrb[0].mxu0
    %2397 = vmatprep.mubr.f32.mxu0 0.0
    %2398 = vmatmul.mubr.f32.gmra.mrb[0].mxu0 %v2294
    %v2399 = vpop.f32.mrb[0].mxu0
    %v2400 = vadd.f32 %v2321, %v2399
    %v2401 = vpop.f32.mrb[0].mxu0
    %2402 = vmatprep.mubr.f32.mxu0 0.0
    %2403 = vmatmul.mubr.f32.gmra.mrb[0].mxu0 %v2295
    %v2404 = vpop.f32.mrb[0].mxu0
    %v2405 = vadd.f32 %v2321, %v2404
    %v2406 = vpop.f32.mrb[0].mxu0
    %2407 = vmatprep.mubr.f32.mxu0 0.0
    %2408 = vmatmul.mubr.f32.gmra.mrb[0].mxu0 %v2296
    %v2409 = vpop.f32.mrb[0].mxu0
    %v2410 = vadd.f32 %v2321, %v2409
    %v2411 = vpop.f32.mrb[0].mxu0
    %2412 = vmatprep.mubr.f32.mxu0 0.0
    %2413 = vmatmul.mubr.f32.gmra.mrb[0].mxu0 %v2297
    %v2414 = vpop.f32.mrb[0].mxu0
    %v2415 = vadd.f32 %v2321, %v2414
    %v2416 = vpop.f32.mrb[0].mxu0
    %2417 = vmatprep.mubr.f32.mxu0 0.0
    %2418 = vmatmul.mubr.f32.gmra.mrb[0].mxu0 %v2298
    %v2419 = vpop.f32.mrb[0].mxu0
    %v2420 = vadd.f32 %v2321, %v2419
    %v2421 = vpop.f32.mrb[0].mxu0
    %2422 = vmatprep.mubr.f32.mxu0 0.0
    %2423 = vmatmul.mubr.f32.gmra.mrb[0].mxu0 %v2299
    %v2424 = vpop.f32.mrb[0].mxu0
    %v2425 = vadd.f32 %v2321, %v2424
    %v2426 = vpop.f32.mrb[0].mxu0
    %2427 = vdwg.mxu0
    %2428 = vst [vmem:[#allocation9] sm:$0xff] %v2390
    %2429 = vst [vmem:[#allocation9 + $0x8] sm:$0xff] %v2395
    %2430 = vst [vmem:[#allocation9 + $0x10] sm:$0xff] %v2400
    %2431 = vst [vmem:[#allocation9 + $0x18] sm:$0xff] %v2405
    %2432 = vst [vmem:[#allocation9 + $0x20] sm:$0xff] %v2410
    %2433 = vst [vmem:[#allocation9 + $0x28] sm:$0xff] %v2415
    %2434 = vst [vmem:[#allocation9 + $0x30] sm:$0xff] %v2420
    %2435 = vst [vmem:[#allocation9 + $0x38] sm:$0xff] %v2425
    // Predicated region
    $region34: #{tpu_custom_call.1} parent=1 // pred_check
      _
    $region35: #{tpu_custom_call.1} parent=1 // pred_check_branch
      %2437 = sbr.rel (0) target = $region37
    $region36: #{tpu_custom_call.1} parent=1 // pred_region
      %s2439 = ssub.s32 1024, 1024
      %2440 = vsyncadd [#allocation6], %s2439
      %s2441 = sshll.u32 [#allocation9], 4
      %s2442 = int_to_ptr.vmem [resolvable:$true] %s2441
      %2447 = dma.vmem_to_hbm [thread:$0]  %s2442, 1024, %s6, [#allocation6], 128, 128, 8
    $region37: #{tpu_custom_call.1} parent=1 // pred_fallthru
      _
    // Predicated region
    $region38: #{tpu_custom_call.1} parent=1 // pred_check
      _
    $region39: #{tpu_custom_call.1} parent=1 // pred_check_branch
      %2449 = sbr.rel (0) target = $region41
    $region40: #{tpu_custom_call.1} parent=1 // pred_region
      %2450 = dma.done [#allocation6], 1024
    $region41: #{tpu_custom_call.1} parent=1 // pred_fallthru
      _
    %2451 = vsyncpa [#allocation5], 1
    %2452 = vsyncpa [#allocation8], 1
    %2453 = vsyncpa [#allocation6], 1

</llo_original>
